<compile_context>
chip_gen: v7x
topology: tpu7x:2x2x1
jax: 0.10.0
libtpu: 0.0.40
codegen_flags: <defaults>
</compile_context>

<pallas_src>
import functools

import jax
import jax.numpy as jnp
from jax.experimental import pallas as pl
from jax.experimental.pallas import tpu as pltpu


# ----------------------------------------------------------------------------
# Pallas kernel: one full decoder layer for a block of B sequences.
# ----------------------------------------------------------------------------
def _decoder_layer_kernel(
    x_ref, pmask_ref,
    wqkv_ref, bqkv_ref, wff_ref, bff_ref, wm_ref, bm_ref,
    g1_ref, beta1_ref, g2_ref, beta2_ref,
    out_ref,
    *, num_heads: int, head_dim: int, ffn_chunk: int, compute_dtype,
):
    B, T, D = x_ref.shape
    H, hd = num_heads, head_dim
    cd = compute_dtype

    x_in = x_ref[...]                              # [B, T, D] bf16 (carried)
    x2d = x_in.reshape(B * T, D)                   # flatten: tall M dim for MXU
    x2d_f32 = x2d.astype(jnp.float32)              # residual / LayerNorm path

    # --- fused QKV projection (one wide matmul over all B*T rows), bf16 early ---
    qkv = (jnp.dot(x2d.astype(cd), wqkv_ref[...],
                   preferred_element_type=jnp.float32)
           + bqkv_ref[...]).astype(cd)             # [B*T, 3D] bf16

    def split_heads(z2d):                          # [B*T, H*hd] -> [B*H, T, hd]
        z = z2d.reshape(B, T, H, hd)
        return jnp.transpose(z, (0, 2, 1, 3)).reshape(B * H, T, hd)

    q = split_heads(qkv[:, 0 * D:1 * D])           # slices at D (128-mult) offsets
    k = split_heads(qkv[:, 1 * D:2 * D])
    v = split_heads(qkv[:, 2 * D:3 * D])

    # --- additive bias: [T,T] causal + [B,1,T] padding; never [B,T,T] ---
    row = jax.lax.broadcasted_iota(jnp.int32, (T, T), 0)
    col = jax.lax.broadcasted_iota(jnp.int32, (T, T), 1)
    causal_neg = jnp.where(row >= col, 0.0, -10000.0)          # [T, T] f32
    pad_neg = (1.0 - pmask_ref[...]) * -10000.0                # [B, 1, T] f32

    scale = 1.0 / (hd ** 0.5)
    s = jnp.einsum('bqd,bkd->bqk', q, k,
                   preferred_element_type=jnp.float32)          # [B*H, T, T] f32
    s = s.reshape(B, H, T, T) * scale + causal_neg + pad_neg[:, None, :, :]

    m = jnp.max(s, axis=-1, keepdims=True)
    p = jnp.exp(s - m)
    # TODO(synk): on v6e/v7x the exp could run in bf16 for ~2x EUP throughput.
    w = (p * pl.reciprocal(jnp.sum(p, axis=-1, keepdims=True),
                           approx=True)).astype(cd)

    attn = jnp.einsum('bqk,bkd->bqd', w.reshape(B * H, T, T), v,
                      preferred_element_type=jnp.float32)       # [B*H, T, hd]
    y = jnp.transpose(attn.reshape(B, H, T, hd),
                      (0, 2, 1, 3)).reshape(B * T, D)           # [B*T, D] f32

    def layernorm(z, g, b):
        mu = jnp.mean(z, axis=-1, keepdims=True)
        var = jnp.mean(z * z, axis=-1, keepdims=True) - mu * mu  # fused single pass
        return (z - mu) * jax.lax.rsqrt(var + 1e-5) * g + b

    # dropout1 is identity (eval mode)
    x1 = layernorm(x2d_f32 + y, g1_ref[...], beta1_ref[...])     # [B*T, D] f32
    x1_cd = x1.astype(cd)

    # --- feed-forward, dff chunked to bound the [B*T, dff_chunk] intermediate ---
    dff = wff_ref.shape[1]
    n_chunks = dff // ffn_chunk
    acc = None
    for c in range(n_chunks):                       # static unroll
        lo = c * ffn_chunk
        hi = lo + ffn_chunk
        ff = jnp.dot(x1_cd, wff_ref[:, lo:hi],
                     preferred_element_type=jnp.float32) + bff_ref[:, lo:hi]
        ff = jnp.maximum(ff, 0.0).astype(cd)        # ReLU in f32, cast for MXU
        part = jnp.dot(ff, wm_ref[lo:hi, :], preferred_element_type=jnp.float32)
        acc = part if acc is None else acc + part
    y2 = acc + bm_ref[...]

    # dropout2 is identity (eval mode)
    out = layernorm(x1 + y2, g2_ref[...], beta2_ref[...])
    out_ref[...] = out.reshape(B, T, D).astype(out_ref.dtype)


# ----------------------------------------------------------------------------
# pallas_call wrapper for one layer.
# ----------------------------------------------------------------------------
_WEIGHT_KEYS = ("wqkv", "bqkv", "wff", "bff", "wm", "bm",
                "g1", "beta1", "g2", "beta2")
_SINGLE_BUFFER_WEIGHTS_OK = [True]


def _decoder_layer_call(x, pmask, wts, *, num_heads, head_dim, block_b,
                        ffn_chunk, vmem_limit, compute_dtype,
                        single_buffer_weights):
    Npad, T, D = x.shape
    assert Npad % block_b == 0
    grid = (Npad // block_b,)
    weight_arrays = [wts[k] for k in _WEIGHT_KEYS]

    def w_spec(shape):
        # Constant blocks: single-buffer to halve their VMEM footprint.
        if single_buffer_weights:
            return pl.BlockSpec(shape, lambda n: (0, 0),
                                pipeline_mode=pl.Buffered(1))
        return pl.BlockSpec(shape, lambda n: (0, 0))

    in_specs = [
        pl.BlockSpec((block_b, T, D), lambda n: (n, 0, 0)),   # x block (bf16)
        pl.BlockSpec((block_b, 1, T), lambda n: (n, 0, 0)),   # padding mask
    ] + [w_spec(w.shape) for w in weight_arrays]

    kernel = functools.partial(
        _decoder_layer_kernel, num_heads=num_heads, head_dim=head_dim,
        ffn_chunk=ffn_chunk, compute_dtype=compute_dtype)

    return pl.pallas_call(
        kernel,
        out_shape=jax.ShapeDtypeStruct((Npad, T, D), compute_dtype),
        grid_spec=pltpu.PrefetchScalarGridSpec(
            num_scalar_prefetch=0,
            grid=grid,
            in_specs=in_specs,
            out_specs=pl.BlockSpec((block_b, T, D), lambda n: (n, 0, 0)),
        ),
        compiler_params=pltpu.CompilerParams(
            dimension_semantics=("parallel",),
            vmem_limit_bytes=int(vmem_limit),
        ),
    )(x, pmask, *weight_arrays)


def decoder_layer_pallas(x, pmask, wts, *, num_heads, head_dim, block_b,
                         ffn_chunk, vmem_limit, compute_dtype=jnp.bfloat16):
    D = x.shape[-1]
    assert D == num_heads * head_dim
    assert D % 128 == 0, "d_model must be a multiple of 128 for lane alignment"
    kw = dict(num_heads=num_heads, head_dim=head_dim, block_b=block_b,
              ffn_chunk=ffn_chunk, vmem_limit=vmem_limit,
              compute_dtype=compute_dtype)
    if _SINGLE_BUFFER_WEIGHTS_OK[0]:
        try:
            return _decoder_layer_call(x, pmask, wts,
                                       single_buffer_weights=True, **kw)
        except Exception:
            _SINGLE_BUFFER_WEIGHTS_OK[0] = False   # fall back once, remember
    return _decoder_layer_call(x, pmask, wts, single_buffer_weights=False, **kw)


# ----------------------------------------------------------------------------
# Generation-aware sizing.
# ----------------------------------------------------------------------------
def _tpu_vmem_bytes():
    try:
        info = pltpu.get_tpu_info()
        cap = getattr(info, "vmem_capacity_bytes", None)
        if cap:
            return int(cap)
    except Exception:
        pass
    return 64 * 1024 * 1024        # conservative (v7x per-TC)


def _num_tensorcores_per_chip():
    try:
        kind = jax.devices()[0].device_kind.lower()
    except Exception:
        return 1
    if any(t in kind for t in ("lite", "v5e", "v6e")):
        return 1                   # single TensorCore parts
    if "v7" in kind:
        return 2
    return 1


def _estimate_layer_vmem(block_b, T, D, H, dff, ffn_chunk):
    """Rough resident-VMEM estimate for one grid step (bytes)."""
    bt = block_b * T
    bf16, f32 = 2, 4
    io = 2 * 2 * bt * D * bf16                         # x + out, double-buffered
    io += 2 * block_b * T * f32                        # padding mask
    weights = (3 * D * D + 2 * D * dff) * bf16 + (8 * D + dff) * f32
    qkv = bt * 3 * D * bf16
    scores = 2 * block_b * H * T * T * f32             # logits + exp(p)
    attn = bt * D * (f32 + bf16)
    ln = 3 * bt * D * f32                              # x_f32, x1, y2
    ff = bt * min(ffn_chunk, dff) * (f32 + bf16)
    return io + weights + qkv + scores + attn + ln + ff


def _choose_batch_block(n, *, seq_len, d_model, num_heads, dff, ffn_chunk,
                        max_block, vmem_budget, num_cores):
    """Pick (block_b, num_blocks): biggest block that fits the VMEM budget."""
    blk = max(1, min(max_block, n))
    while blk > 1 and _estimate_layer_vmem(
            blk, seq_len, d_model, num_heads, dff, ffn_chunk) > vmem_budget:
        blk -= 1
    nb = pl.cdiv(n, blk)
    if num_cores > 1 and nb > 1 and nb % num_cores:
        nb += num_cores - (nb % num_cores)   # even grid only on 2-TC parts
    blk = pl.cdiv(n, nb)
    return blk, nb


def _prepare_layer_weights(p, cd):
    """Pre-cast matmul weights to bf16 once; biases/LN params stay f32 [1, X]."""
    r2 = lambda a: a.reshape(1, -1).astype(jnp.float32)
    return {
        "wqkv": p["wqkv"].astype(cd), "bqkv": r2(p["bqkv"]),
        "wff": p["wff"].astype(cd),   "bff": r2(p["bff"]),
        "wm": p["wm"].astype(cd),     "bm": r2(p["bm"]),
        "g1": r2(p["g1"]), "beta1": r2(p["beta1"]),
        "g2": r2(p["g2"]), "beta2": r2(p["beta2"]),
    }


# ----------------------------------------------------------------------------
# Full Decoder forward (embedding glue in plain JAX, layers in Pallas).
# ----------------------------------------------------------------------------
def decoder_forward(track_ids, artist_ids, params, *, padding_idx, num_heads,
                    head_dim, max_batch_block=8, ffn_chunk=512,
                    compute_dtype=jnp.bfloat16):
    N, T = track_ids.shape
    D = num_heads * head_dim
    dff = params["layers"][0]["wff"].shape[1]

    # item embeddings (average weighting of track + artist embeddings)
    x = params["track_emb"][track_ids]                  # [N, T, D] f32
    x = (x + params["artist_emb"][artist_ids]) * 0.5
    # positional embeddings
    x = x + params["pos_emb"][None, :T, :]
    # emb_dropout is identity (eval mode)

    # only the thin padding mask goes to the kernel; causal part is built there
    pmask = (track_ids != padding_idx).astype(jnp.float32).reshape(N, 1, T)

    # FFN hidden-dim chunking: only if it divides evenly and is smaller.
    if ffn_chunk >= dff or dff % ffn_chunk != 0:
        ffn_chunk = dff

    vmem_cap = _tpu_vmem_bytes()
    vmem_limit = int(min(max(vmem_cap - 12 * 2**20, 32 * 2**20),
                         int(vmem_cap * 0.875), 112 * 2**20))
    num_cores = _num_tensorcores_per_chip()

    block_b, nblocks = _choose_batch_block(
        N, seq_len=T, d_model=D, num_heads=num_heads, dff=dff,
        ffn_chunk=ffn_chunk, max_block=max_batch_block,
        vmem_budget=int(vmem_limit * 0.8), num_cores=num_cores)
    Npad = block_b * nblocks
    if Npad != N:                                       # padded rows are fully
        x = jnp.pad(x, ((0, Npad - N), (0, 0), (0, 0)))  # masked and discarded
        pmask = jnp.pad(pmask, ((0, Npad - N), (0, 0), (0, 0)))

    # carry inter-layer activations in bf16 (halves activation HBM traffic)
    x = x.astype(compute_dtype)
    layer_wts = [_prepare_layer_weights(p, compute_dtype)
                 for p in params["layers"]]
    for wts in layer_wts:
        x = decoder_layer_pallas(
            x, pmask, wts, num_heads=num_heads, head_dim=head_dim,
            block_b=block_b, ffn_chunk=ffn_chunk, vmem_limit=vmem_limit,
            compute_dtype=compute_dtype)
    return x[:N].astype(jnp.float32)


# ----------------------------------------------------------------------------
# Deterministic parameter initialization (synthetic, matches module shapes).
# ----------------------------------------------------------------------------
def init_params(key, *, num_layers, num_heads, head_dim, dff,
                num_tracks, num_artists, num_special_tokens, max_length):
    d_model = num_heads * head_dim
    keys = iter(jax.random.split(key, 4 + num_layers * 8))
    nxt = lambda: next(keys)

    emb_bound = 1.0 / d_model ** 0.5
    params = {
        "track_emb": jax.random.uniform(
            nxt(), (num_tracks + num_special_tokens, d_model),
            minval=-emb_bound, maxval=emb_bound, dtype=jnp.float32),
        "artist_emb": jax.random.uniform(
            nxt(), (num_artists + num_special_tokens, d_model),
            minval=-emb_bound, maxval=emb_bound, dtype=jnp.float32),
        "pos_emb": jax.random.normal(nxt(), (max_length, d_model), jnp.float32),
        "layers": [],
    }

    def linear(kw, kb, fan_in, fan_out):
        bound = 1.0 / fan_in ** 0.5
        w = jax.random.uniform(kw, (fan_in, fan_out), minval=-bound,
                               maxval=bound, dtype=jnp.float32)
        b = jax.random.uniform(kb, (fan_out,), minval=-bound, maxval=bound,
                               dtype=jnp.float32)
        return w, b

    for _ in range(num_layers):
        wqkv, bqkv = linear(nxt(), nxt(), d_model, 3 * d_model)  # fused q|k|v
        wff, bff = linear(nxt(), nxt(), d_model, dff)
        wm, bm = linear(nxt(), nxt(), dff, d_model)
        params["layers"].append({
            "wqkv": wqkv, "bqkv": bqkv,
            "wff": wff, "bff": bff, "wm": wm, "bm": bm,
            "g1": jnp.ones((d_model,), jnp.float32),
            "beta1": jnp.zeros((d_model,), jnp.float32),
            "g2": jnp.ones((d_model,), jnp.float32),
            "beta2": jnp.zeros((d_model,), jnp.float32),
        })
    return params


if __name__ == "__main__":
    # Small config consistent with the module defaults (scaled down).
    N, T = 2, 8
    num_layers, num_heads, head_dim, dff = 2, 4, 32, 256   # d_model = 128
    num_tracks, num_artists, num_special_tokens = 50, 20, 3
    max_length, padding_idx = 16, 0

    key = jax.random.PRNGKey(0)
    k_params, k_tr, k_ar = jax.random.split(key, 3)

    params = init_params(
        k_params, num_layers=num_layers, num_heads=num_heads,
        head_dim=head_dim, dff=dff, num_tracks=num_tracks,
        num_artists=num_artists, num_special_tokens=num_special_tokens,
        max_length=max_length)

    track_ids = jax.random.randint(
        k_tr, (N, T), 1, num_tracks + num_special_tokens, dtype=jnp.int32)
    artist_ids = jax.random.randint(
        k_ar, (N, T), 1, num_artists + num_special_tokens, dtype=jnp.int32)
    # introduce trailing padding in one sequence
    track_ids = track_ids.at[1, -2:].set(padding_idx)
    artist_ids = artist_ids.at[1, -2:].set(padding_idx)

    out = decoder_forward(
        track_ids, artist_ids, params,
        padding_idx=padding_idx, num_heads=num_heads, head_dim=head_dim)
    out = jax.block_until_ready(out)

    assert out.shape == (N, T, num_heads * head_dim)
    assert jnp.all(jnp.isfinite(out))
    print("KERNEL_OK")
</pallas_src>

<mosaic_0001>
module attributes {stable_mosaic.version = 11 : i64} {
  func.func @_decoder_layer_kernel(%arg0: i32, %arg1: memref<2x8x128xbf16, #tpu.memory_space<vmem>>, %arg2: memref<2x1x8xf32, #tpu.memory_space<vmem>>, %arg3: memref<128x384xbf16, #tpu.memory_space<vmem>>, %arg4: memref<1x384xf32, #tpu.memory_space<vmem>>, %arg5: memref<128x256xbf16, #tpu.memory_space<vmem>>, %arg6: memref<1x256xf32, #tpu.memory_space<vmem>>, %arg7: memref<256x128xbf16, #tpu.memory_space<vmem>>, %arg8: memref<1x128xf32, #tpu.memory_space<vmem>>, %arg9: memref<1x128xf32, #tpu.memory_space<vmem>>, %arg10: memref<1x128xf32, #tpu.memory_space<vmem>>, %arg11: memref<1x128xf32, #tpu.memory_space<vmem>>, %arg12: memref<1x128xf32, #tpu.memory_space<vmem>>, %arg13: memref<2x8x128xbf16, #tpu.memory_space<vmem>>) attributes {dimension_semantics = [#tpu.dimension_semantics<parallel>], iteration_bounds = array<i64: 1>, scalar_prefetch = 0 : i64, scratch_operands = 0 : i64, tpu.core_type = #tpu.core_type<tc>, window_params = [{transform_indices = @transform_0, window_bounds = array<i64: 2, 8, 128>}, {transform_indices = @transform_1, window_bounds = array<i64: 2, 1, 8>}, {pipeline_mode = #tpu.pipeline_mode<synchronous>, transform_indices = @transform_2, window_bounds = array<i64: 128, 384>}, {pipeline_mode = #tpu.pipeline_mode<synchronous>, transform_indices = @transform_3, window_bounds = array<i64: 1, 384>}, {pipeline_mode = #tpu.pipeline_mode<synchronous>, transform_indices = @transform_4, window_bounds = array<i64: 128, 256>}, {pipeline_mode = #tpu.pipeline_mode<synchronous>, transform_indices = @transform_5, window_bounds = array<i64: 1, 256>}, {pipeline_mode = #tpu.pipeline_mode<synchronous>, transform_indices = @transform_6, window_bounds = array<i64: 256, 128>}, {pipeline_mode = #tpu.pipeline_mode<synchronous>, transform_indices = @transform_7, window_bounds = array<i64: 1, 128>}, {pipeline_mode = #tpu.pipeline_mode<synchronous>, transform_indices = @transform_8, window_bounds = array<i64: 1, 128>}, {pipeline_mode = #tpu.pipeline_mode<synchronous>, transform_indices = @transform_9, window_bounds = array<i64: 1, 128>}, {pipeline_mode = #tpu.pipeline_mode<synchronous>, transform_indices = @transform_10, window_bounds = array<i64: 1, 128>}, {pipeline_mode = #tpu.pipeline_mode<synchronous>, transform_indices = @transform_11, window_bounds = array<i64: 1, 128>}, {transform_indices = @transform_12, window_bounds = array<i64: 2, 8, 128>}]} {
    %c0 = arith.constant 0 : index
    %c0_0 = arith.constant 0 : index
    %c0_1 = arith.constant 0 : index
    %0 = vector.load %arg1[%c0, %c0_0, %c0_1] : memref<2x8x128xbf16, #tpu.memory_space<vmem>>, vector<2x8x128xbf16>
    %1 = vector.shape_cast %0 : vector<2x8x128xbf16> to vector<16x128xbf16>
    %2 = arith.extf %1 : vector<16x128xbf16> to vector<16x128xf32>
    %c0_2 = arith.constant 0 : index
    %c0_3 = arith.constant 0 : index
    %3 = vector.load %arg3[%c0_2, %c0_3] : memref<128x384xbf16, #tpu.memory_space<vmem>>, vector<128x384xbf16>
    %cst = arith.constant dense<0.000000e+00> : vector<16x384xf32>
    %4 = tpu.matmul %1, %3, %cst {dimension_numbers = #tpu.dot_dimension_numbers<[1], [0], [0], [1], [0, 0, 1, 1], [], []>} : vector<16x128xbf16>, vector<128x384xbf16>, vector<16x384xf32> -> vector<16x384xf32>
    %c0_4 = arith.constant 0 : index
    %c0_5 = arith.constant 0 : index
    %5 = vector.load %arg4[%c0_4, %c0_5] : memref<1x384xf32, #tpu.memory_space<vmem>>, vector<1x384xf32>
    %6 = vector.broadcast %5 : vector<1x384xf32> to vector<16x384xf32>
    %7 = arith.addf %4, %6 : vector<16x384xf32>
    %8 = arith.truncf %7 : vector<16x384xf32> to vector<16x384xbf16>
    %9 = vector.extract_strided_slice %8 {offsets = [0, 0], sizes = [16, 128], strides = [1, 1]} : vector<16x384xbf16> to vector<16x128xbf16>
    %10 = vector.shape_cast %9 : vector<16x128xbf16> to vector<2x8x4x32xbf16>
    %11 = tpu.transpose %10, [0, 2, 1, 3] : vector<2x8x4x32xbf16> -> vector<2x4x8x32xbf16>
    %12 = vector.shape_cast %11 : vector<2x4x8x32xbf16> to vector<8x8x32xbf16>
    %13 = vector.extract_strided_slice %8 {offsets = [0, 128], sizes = [16, 128], strides = [1, 1]} : vector<16x384xbf16> to vector<16x128xbf16>
    %14 = vector.shape_cast %13 : vector<16x128xbf16> to vector<2x8x4x32xbf16>
    %15 = tpu.transpose %14, [0, 2, 1, 3] : vector<2x8x4x32xbf16> -> vector<2x4x8x32xbf16>
    %16 = vector.shape_cast %15 : vector<2x4x8x32xbf16> to vector<8x8x32xbf16>
    %17 = vector.extract_strided_slice %8 {offsets = [0, 256], sizes = [16, 128], strides = [1, 1]} : vector<16x384xbf16> to vector<16x128xbf16>
    %18 = vector.shape_cast %17 : vector<16x128xbf16> to vector<2x8x4x32xbf16>
    %19 = tpu.transpose %18, [0, 2, 1, 3] : vector<2x8x4x32xbf16> -> vector<2x4x8x32xbf16>
    %20 = vector.shape_cast %19 : vector<2x4x8x32xbf16> to vector<8x8x32xbf16>
    %21 = tpu.iota {dimensions = array<i32: 0>} : vector<8x8xi32>
    %22 = tpu.iota {dimensions = array<i32: 1>} : vector<8x8xi32>
    %23 = arith.cmpi sge, %21, %22 : vector<8x8xi32>
    %cst_6 = arith.constant 0.000000e+00 : f32
    %cst_7 = arith.constant -1.000000e+04 : f32
    %24 = vector.broadcast %cst_6 : f32 to vector<8x8xf32>
    %25 = vector.broadcast %cst_7 : f32 to vector<8x8xf32>
    %26 = arith.select %23, %24, %25 : vector<8x8xi1>, vector<8x8xf32>
    %c0_8 = arith.constant 0 : index
    %c0_9 = arith.constant 0 : index
    %c0_10 = arith.constant 0 : index
    %27 = vector.load %arg2[%c0_8, %c0_9, %c0_10] : memref<2x1x8xf32, #tpu.memory_space<vmem>>, vector<2x1x8xf32>
    %cst_11 = arith.constant 1.000000e+00 : f32
    %28 = vector.broadcast %cst_11 : f32 to vector<2x1x8xf32>
    %29 = arith.subf %28, %27 : vector<2x1x8xf32>
    %cst_12 = arith.constant -1.000000e+04 : f32
    %30 = vector.broadcast %cst_12 : f32 to vector<2x1x8xf32>
    %31 = arith.mulf %29, %30 : vector<2x1x8xf32>
    "tpu.trace_start"() <{level = 10 : i32, message = "bqd,bkd->bqk"}> : () -> ()
    %cst_13 = arith.constant dense<0.000000e+00> : vector<8x8x8xf32>
    %32 = tpu.matmul %12, %16, %cst_13 {dimension_numbers = #tpu.dot_dimension_numbers<[2], [2], [1], [1], [0, 0, 0, 1, 1, 1], [0], [0]>} : vector<8x8x32xbf16>, vector<8x8x32xbf16>, vector<8x8x8xf32> -> vector<8x8x8xf32>
    "tpu.trace_stop"() : () -> ()
    %33 = vector.shape_cast %32 : vector<8x8x8xf32> to vector<2x4x8x8xf32>
    %cst_14 = arith.constant 0.176776692 : f32
    %34 = vector.broadcast %cst_14 : f32 to vector<2x4x8x8xf32>
    %35 = arith.mulf %33, %34 : vector<2x4x8x8xf32>
    %36 = vector.shape_cast %26 : vector<8x8xf32> to vector<1x1x8x8xf32>
    %37 = vector.broadcast %36 : vector<1x1x8x8xf32> to vector<2x4x8x8xf32>
    %38 = arith.addf %35, %37 : vector<2x4x8x8xf32>
    %39 = vector.shape_cast %31 : vector<2x1x8xf32> to vector<2x1x1x8xf32>
    %40 = vector.broadcast %39 : vector<2x1x1x8xf32> to vector<2x4x8x8xf32>
    %41 = arith.addf %38, %40 : vector<2x4x8x8xf32>
    %cst_15 = arith.constant dense<0xFF800000> : vector<2x4x8xf32>
    %42 = vector.multi_reduction <maximumf>, %41, %cst_15 [3] : vector<2x4x8x8xf32> to vector<2x4x8xf32>
    %43 = vector.shape_cast %42 : vector<2x4x8xf32> to vector<2x4x8x1xf32>
    %44 = vector.broadcast %43 : vector<2x4x8x1xf32> to vector<2x4x8x8xf32>
    %45 = arith.subf %41, %44 : vector<2x4x8x8xf32>
    %46 = math.exp %45 : vector<2x4x8x8xf32>
    %cst_16 = arith.constant dense<0.000000e+00> : vector<2x4x8xf32>
    %47 = vector.multi_reduction <add>, %46, %cst_16 [3] : vector<2x4x8x8xf32> to vector<2x4x8xf32>
    %48 = vector.shape_cast %47 : vector<2x4x8xf32> to vector<2x4x8x1xf32>
    %49 = tpu.reciprocal %48 {approx = true} : vector<2x4x8x1xf32> -> vector<2x4x8x1xf32>
    %50 = vector.broadcast %49 : vector<2x4x8x1xf32> to vector<2x4x8x8xf32>
    %51 = arith.mulf %46, %50 : vector<2x4x8x8xf32>
    %52 = arith.truncf %51 : vector<2x4x8x8xf32> to vector<2x4x8x8xbf16>
    %53 = vector.shape_cast %52 : vector<2x4x8x8xbf16> to vector<8x8x8xbf16>
    "tpu.trace_start"() <{level = 10 : i32, message = "bqk,bkd->bqd"}> : () -> ()
    %cst_17 = arith.constant dense<0.000000e+00> : vector<8x8x32xf32>
    %54 = tpu.matmul %53, %20, %cst_17 {dimension_numbers = #tpu.dot_dimension_numbers<[2], [1], [1], [2], [0, 0, 0, 1, 1, 2], [0], [0]>} : vector<8x8x8xbf16>, vector<8x8x32xbf16>, vector<8x8x32xf32> -> vector<8x8x32xf32>
    "tpu.trace_stop"() : () -> ()
    %55 = vector.shape_cast %54 : vector<8x8x32xf32> to vector<2x4x8x32xf32>
    %56 = tpu.transpose %55, [0, 2, 1, 3] : vector<2x4x8x32xf32> -> vector<2x8x4x32xf32>
    %57 = vector.shape_cast %56 : vector<2x8x4x32xf32> to vector<16x128xf32>
    %58 = arith.addf %2, %57 : vector<16x128xf32>
    %c0_18 = arith.constant 0 : index
    %c0_19 = arith.constant 0 : index
    %59 = vector.load %arg9[%c0_18, %c0_19] : memref<1x128xf32, #tpu.memory_space<vmem>>, vector<1x128xf32>
    %c0_20 = arith.constant 0 : index
    %c0_21 = arith.constant 0 : index
    %60 = vector.load %arg10[%c0_20, %c0_21] : memref<1x128xf32, #tpu.memory_space<vmem>>, vector<1x128xf32>
    %cst_22 = arith.constant dense<0.000000e+00> : vector<16xf32>
    %61 = vector.multi_reduction <add>, %58, %cst_22 [1] : vector<16x128xf32> to vector<16xf32>
    %62 = vector.shape_cast %61 : vector<16xf32> to vector<16x1xf32>
    %cst_23 = arith.constant 1.280000e+02 : f32
    %63 = vector.broadcast %cst_23 : f32 to vector<16x1xf32>
    %64 = arith.divf %62, %63 : vector<16x1xf32>
    %65 = arith.mulf %58, %58 : vector<16x128xf32>
    %cst_24 = arith.constant dense<0.000000e+00> : vector<16xf32>
    %66 = vector.multi_reduction <add>, %65, %cst_24 [1] : vector<16x128xf32> to vector<16xf32>
    %67 = vector.shape_cast %66 : vector<16xf32> to vector<16x1xf32>
    %cst_25 = arith.constant 1.280000e+02 : f32
    %68 = vector.broadcast %cst_25 : f32 to vector<16x1xf32>
    %69 = arith.divf %67, %68 : vector<16x1xf32>
    %70 = arith.mulf %64, %64 : vector<16x1xf32>
    %71 = arith.subf %69, %70 : vector<16x1xf32>
    %72 = vector.broadcast %64 : vector<16x1xf32> to vector<16x128xf32>
    %73 = arith.subf %58, %72 : vector<16x128xf32>
    %cst_26 = arith.constant 9.99999974E-6 : f32
    %74 = vector.broadcast %cst_26 : f32 to vector<16x1xf32>
    %75 = arith.addf %71, %74 : vector<16x1xf32>
    %76 = math.rsqrt %75 : vector<16x1xf32>
    %77 = vector.broadcast %76 : vector<16x1xf32> to vector<16x128xf32>
    %78 = arith.mulf %73, %77 : vector<16x128xf32>
    %79 = vector.broadcast %59 : vector<1x128xf32> to vector<16x128xf32>
    %80 = arith.mulf %78, %79 : vector<16x128xf32>
    %81 = vector.broadcast %60 : vector<1x128xf32> to vector<16x128xf32>
    %82 = arith.addf %80, %81 : vector<16x128xf32>
    %83 = arith.truncf %82 : vector<16x128xf32> to vector<16x128xbf16>
    %c0_27 = arith.constant 0 : index
    %c0_28 = arith.constant 0 : index
    %84 = vector.load %arg5[%c0_27, %c0_28] : memref<128x256xbf16, #tpu.memory_space<vmem>>, vector<128x256xbf16>
    %cst_29 = arith.constant dense<0.000000e+00> : vector<16x256xf32>
    %85 = tpu.matmul %83, %84, %cst_29 {dimension_numbers = #tpu.dot_dimension_numbers<[1], [0], [0], [1], [0, 0, 1, 1], [], []>} : vector<16x128xbf16>, vector<128x256xbf16>, vector<16x256xf32> -> vector<16x256xf32>
    %c0_30 = arith.constant 0 : index
    %c0_31 = arith.constant 0 : index
    %86 = vector.load %arg6[%c0_30, %c0_31] : memref<1x256xf32, #tpu.memory_space<vmem>>, vector<1x256xf32>
    %87 = vector.broadcast %86 : vector<1x256xf32> to vector<16x256xf32>
    %88 = arith.addf %85, %87 : vector<16x256xf32>
    %cst_32 = arith.constant 0.000000e+00 : f32
    %89 = vector.broadcast %cst_32 : f32 to vector<16x256xf32>
    %90 = arith.maximumf %88, %89 : vector<16x256xf32>
    %91 = arith.truncf %90 : vector<16x256xf32> to vector<16x256xbf16>
    %c0_33 = arith.constant 0 : index
    %c0_34 = arith.constant 0 : index
    %92 = vector.load %arg7[%c0_33, %c0_34] : memref<256x128xbf16, #tpu.memory_space<vmem>>, vector<256x128xbf16>
    %cst_35 = arith.constant dense<0.000000e+00> : vector<16x128xf32>
    %93 = tpu.matmul %91, %92, %cst_35 {dimension_numbers = #tpu.dot_dimension_numbers<[1], [0], [0], [1], [0, 0, 1, 1], [], []>} : vector<16x256xbf16>, vector<256x128xbf16>, vector<16x128xf32> -> vector<16x128xf32>
    %c0_36 = arith.constant 0 : index
    %c0_37 = arith.constant 0 : index
    %94 = vector.load %arg8[%c0_36, %c0_37] : memref<1x128xf32, #tpu.memory_space<vmem>>, vector<1x128xf32>
    %95 = vector.broadcast %94 : vector<1x128xf32> to vector<16x128xf32>
    %96 = arith.addf %93, %95 : vector<16x128xf32>
    %97 = arith.addf %82, %96 : vector<16x128xf32>
    %c0_38 = arith.constant 0 : index
    %c0_39 = arith.constant 0 : index
    %98 = vector.load %arg11[%c0_38, %c0_39] : memref<1x128xf32, #tpu.memory_space<vmem>>, vector<1x128xf32>
    %c0_40 = arith.constant 0 : index
    %c0_41 = arith.constant 0 : index
    %99 = vector.load %arg12[%c0_40, %c0_41] : memref<1x128xf32, #tpu.memory_space<vmem>>, vector<1x128xf32>
    %cst_42 = arith.constant dense<0.000000e+00> : vector<16xf32>
    %100 = vector.multi_reduction <add>, %97, %cst_42 [1] : vector<16x128xf32> to vector<16xf32>
    %101 = vector.shape_cast %100 : vector<16xf32> to vector<16x1xf32>
    %cst_43 = arith.constant 1.280000e+02 : f32
    %102 = vector.broadcast %cst_43 : f32 to vector<16x1xf32>
    %103 = arith.divf %101, %102 : vector<16x1xf32>
    %104 = arith.mulf %97, %97 : vector<16x128xf32>
    %cst_44 = arith.constant dense<0.000000e+00> : vector<16xf32>
    %105 = vector.multi_reduction <add>, %104, %cst_44 [1] : vector<16x128xf32> to vector<16xf32>
    %106 = vector.shape_cast %105 : vector<16xf32> to vector<16x1xf32>
    %cst_45 = arith.constant 1.280000e+02 : f32
    %107 = vector.broadcast %cst_45 : f32 to vector<16x1xf32>
    %108 = arith.divf %106, %107 : vector<16x1xf32>
    %109 = arith.mulf %103, %103 : vector<16x1xf32>
    %110 = arith.subf %108, %109 : vector<16x1xf32>
    %111 = vector.broadcast %103 : vector<16x1xf32> to vector<16x128xf32>
    %112 = arith.subf %97, %111 : vector<16x128xf32>
    %cst_46 = arith.constant 9.99999974E-6 : f32
    %113 = vector.broadcast %cst_46 : f32 to vector<16x1xf32>
    %114 = arith.addf %110, %113 : vector<16x1xf32>
    %115 = math.rsqrt %114 : vector<16x1xf32>
    %116 = vector.broadcast %115 : vector<16x1xf32> to vector<16x128xf32>
    %117 = arith.mulf %112, %116 : vector<16x128xf32>
    %118 = vector.broadcast %98 : vector<1x128xf32> to vector<16x128xf32>
    %119 = arith.mulf %117, %118 : vector<16x128xf32>
    %120 = vector.broadcast %99 : vector<1x128xf32> to vector<16x128xf32>
    %121 = arith.addf %119, %120 : vector<16x128xf32>
    %122 = vector.shape_cast %121 : vector<16x128xf32> to vector<2x8x128xf32>
    %123 = arith.truncf %122 : vector<2x8x128xf32> to vector<2x8x128xbf16>
    %c0_47 = arith.constant 0 : index
    %c0_48 = arith.constant 0 : index
    %c0_49 = arith.constant 0 : index
    %124 = vector.load %arg13[%c0_47, %c0_48, %c0_49] : memref<2x8x128xbf16, #tpu.memory_space<vmem>>, vector<2x8x128xbf16>
    tpu.vector_store %arg13[%c0_47, %c0_48, %c0_49], %123 {strides = array<i32>} : memref<2x8x128xbf16, #tpu.memory_space<vmem>>, vector<2x8x128xbf16>,
    return
  }
  func.func @transform_0(%arg0: i32) -> (i32, i32, i32) {
    %c0_i32 = arith.constant 0 : i32
    %c0_i32_0 = arith.constant 0 : i32
    %c0_i32_1 = arith.constant 0 : i32
    return %arg0, %c0_i32, %c0_i32_0 : i32, i32, i32
  }
  func.func @transform_1(%arg0: i32) -> (i32, i32, i32) {
    %c0_i32 = arith.constant 0 : i32
    %c0_i32_0 = arith.constant 0 : i32
    %c0_i32_1 = arith.constant 0 : i32
    return %arg0, %c0_i32, %c0_i32_0 : i32, i32, i32
  }
  func.func @transform_2(%arg0: i32) -> (i32, i32) {
    %c0_i32 = arith.constant 0 : i32
    %c0_i32_0 = arith.constant 0 : i32
    %c0_i32_1 = arith.constant 0 : i32
    return %c0_i32, %c0_i32_0 : i32, i32
  }
  func.func @transform_3(%arg0: i32) -> (i32, i32) {
    %c0_i32 = arith.constant 0 : i32
    %c0_i32_0 = arith.constant 0 : i32
    %c0_i32_1 = arith.constant 0 : i32
    return %c0_i32, %c0_i32_0 : i32, i32
  }
  func.func @transform_4(%arg0: i32) -> (i32, i32) {
    %c0_i32 = arith.constant 0 : i32
    %c0_i32_0 = arith.constant 0 : i32
    %c0_i32_1 = arith.constant 0 : i32
    return %c0_i32, %c0_i32_0 : i32, i32
  }
  func.func @transform_5(%arg0: i32) -> (i32, i32) {
    %c0_i32 = arith.constant 0 : i32
    %c0_i32_0 = arith.constant 0 : i32
    %c0_i32_1 = arith.constant 0 : i32
    return %c0_i32, %c0_i32_0 : i32, i32
  }
  func.func @transform_6(%arg0: i32) -> (i32, i32) {
    %c0_i32 = arith.constant 0 : i32
    %c0_i32_0 = arith.constant 0 : i32
    %c0_i32_1 = arith.constant 0 : i32
    return %c0_i32, %c0_i32_0 : i32, i32
  }
  func.func @transform_7(%arg0: i32) -> (i32, i32) {
    %c0_i32 = arith.constant 0 : i32
    %c0_i32_0 = arith.constant 0 : i32
    %c0_i32_1 = arith.constant 0 : i32
    return %c0_i32, %c0_i32_0 : i32, i32
  }
  func.func @transform_8(%arg0: i32) -> (i32, i32) {
    %c0_i32 = arith.constant 0 : i32
    %c0_i32_0 = arith.constant 0 : i32
    %c0_i32_1 = arith.constant 0 : i32
    return %c0_i32, %c0_i32_0 : i32, i32
  }
  func.func @transform_9(%arg0: i32) -> (i32, i32) {
    %c0_i32 = arith.constant 0 : i32
    %c0_i32_0 = arith.constant 0 : i32
    %c0_i32_1 = arith.constant 0 : i32
    return %c0_i32, %c0_i32_0 : i32, i32
  }
  func.func @transform_10(%arg0: i32) -> (i32, i32) {
    %c0_i32 = arith.constant 0 : i32
    %c0_i32_0 = arith.constant 0 : i32
    %c0_i32_1 = arith.constant 0 : i32
    return %c0_i32, %c0_i32_0 : i32, i32
  }
  func.func @transform_11(%arg0: i32) -> (i32, i32) {
    %c0_i32 = arith.constant 0 : i32
    %c0_i32_0 = arith.constant 0 : i32
    %c0_i32_1 = arith.constant 0 : i32
    return %c0_i32, %c0_i32_0 : i32, i32
  }
  func.func @transform_12(%arg0: i32) -> (i32, i32, i32) {
    %c0_i32 = arith.constant 0 : i32
    %c0_i32_0 = arith.constant 0 : i32
    %c0_i32_1 = arith.constant 0 : i32
    return %arg0, %c0_i32, %c0_i32_0 : i32, i32, i32
  }
}

module attributes {stable_mosaic.version = 11 : i64} {
  func.func @_decoder_layer_kernel(%arg0: i32, %arg1: memref<2x8x128xbf16, #tpu.memory_space<vmem>>, %arg2: memref<2x1x8xf32, #tpu.memory_space<vmem>>, %arg3: memref<128x384xbf16, #tpu.memory_space<vmem>>, %arg4: memref<1x384xf32, #tpu.memory_space<vmem>>, %arg5: memref<128x256xbf16, #tpu.memory_space<vmem>>, %arg6: memref<1x256xf32, #tpu.memory_space<vmem>>, %arg7: memref<256x128xbf16, #tpu.memory_space<vmem>>, %arg8: memref<1x128xf32, #tpu.memory_space<vmem>>, %arg9: memref<1x128xf32, #tpu.memory_space<vmem>>, %arg10: memref<1x128xf32, #tpu.memory_space<vmem>>, %arg11: memref<1x128xf32, #tpu.memory_space<vmem>>, %arg12: memref<1x128xf32, #tpu.memory_space<vmem>>, %arg13: memref<2x8x128xbf16, #tpu.memory_space<vmem>>) attributes {dimension_semantics = [#tpu.dimension_semantics<parallel>], iteration_bounds = array<i64: 1>, scalar_prefetch = 0 : i64, scratch_operands = 0 : i64, tpu.core_type = #tpu.core_type<tc>, window_params = [{transform_indices = @transform_0, window_bounds = array<i64: 2, 8, 128>}, {transform_indices = @transform_1, window_bounds = array<i64: 2, 1, 8>}, {pipeline_mode = #tpu.pipeline_mode<synchronous>, transform_indices = @transform_2, window_bounds = array<i64: 128, 384>}, {pipeline_mode = #tpu.pipeline_mode<synchronous>, transform_indices = @transform_3, window_bounds = array<i64: 1, 384>}, {pipeline_mode = #tpu.pipeline_mode<synchronous>, transform_indices = @transform_4, window_bounds = array<i64: 128, 256>}, {pipeline_mode = #tpu.pipeline_mode<synchronous>, transform_indices = @transform_5, window_bounds = array<i64: 1, 256>}, {pipeline_mode = #tpu.pipeline_mode<synchronous>, transform_indices = @transform_6, window_bounds = array<i64: 256, 128>}, {pipeline_mode = #tpu.pipeline_mode<synchronous>, transform_indices = @transform_7, window_bounds = array<i64: 1, 128>}, {pipeline_mode = #tpu.pipeline_mode<synchronous>, transform_indices = @transform_8, window_bounds = array<i64: 1, 128>}, {pipeline_mode = #tpu.pipeline_mode<synchronous>, transform_indices = @transform_9, window_bounds = array<i64: 1, 128>}, {pipeline_mode = #tpu.pipeline_mode<synchronous>, transform_indices = @transform_10, window_bounds = array<i64: 1, 128>}, {pipeline_mode = #tpu.pipeline_mode<synchronous>, transform_indices = @transform_11, window_bounds = array<i64: 1, 128>}, {transform_indices = @transform_12, window_bounds = array<i64: 2, 8, 128>}]} {
    %c0 = arith.constant 0 : index
    %c0_0 = arith.constant 0 : index
    %c0_1 = arith.constant 0 : index
    %0 = vector.load %arg1[%c0, %c0_0, %c0_1] : memref<2x8x128xbf16, #tpu.memory_space<vmem>>, vector<2x8x128xbf16>
    %1 = vector.shape_cast %0 : vector<2x8x128xbf16> to vector<16x128xbf16>
    %2 = arith.extf %1 : vector<16x128xbf16> to vector<16x128xf32>
    %c0_2 = arith.constant 0 : index
    %c0_3 = arith.constant 0 : index
    %3 = vector.load %arg3[%c0_2, %c0_3] : memref<128x384xbf16, #tpu.memory_space<vmem>>, vector<128x384xbf16>
    %cst = arith.constant dense<0.000000e+00> : vector<16x384xf32>
    %4 = tpu.matmul %1, %3, %cst {dimension_numbers = #tpu.dot_dimension_numbers<[1], [0], [0], [1], [0, 0, 1, 1], [], []>} : vector<16x128xbf16>, vector<128x384xbf16>, vector<16x384xf32> -> vector<16x384xf32>
    %c0_4 = arith.constant 0 : index
    %c0_5 = arith.constant 0 : index
    %5 = vector.load %arg4[%c0_4, %c0_5] : memref<1x384xf32, #tpu.memory_space<vmem>>, vector<1x384xf32>
    %6 = vector.broadcast %5 : vector<1x384xf32> to vector<16x384xf32>
    %7 = arith.addf %4, %6 : vector<16x384xf32>
    %8 = arith.truncf %7 : vector<16x384xf32> to vector<16x384xbf16>
    %9 = vector.extract_strided_slice %8 {offsets = [0, 0], sizes = [16, 128], strides = [1, 1]} : vector<16x384xbf16> to vector<16x128xbf16>
    %10 = vector.shape_cast %9 : vector<16x128xbf16> to vector<2x8x4x32xbf16>
    %11 = tpu.transpose %10, [0, 2, 1, 3] : vector<2x8x4x32xbf16> -> vector<2x4x8x32xbf16>
    %12 = vector.shape_cast %11 : vector<2x4x8x32xbf16> to vector<8x8x32xbf16>
    %13 = vector.extract_strided_slice %8 {offsets = [0, 128], sizes = [16, 128], strides = [1, 1]} : vector<16x384xbf16> to vector<16x128xbf16>
    %14 = vector.shape_cast %13 : vector<16x128xbf16> to vector<2x8x4x32xbf16>
    %15 = tpu.transpose %14, [0, 2, 1, 3] : vector<2x8x4x32xbf16> -> vector<2x4x8x32xbf16>
    %16 = vector.shape_cast %15 : vector<2x4x8x32xbf16> to vector<8x8x32xbf16>
    %17 = vector.extract_strided_slice %8 {offsets = [0, 256], sizes = [16, 128], strides = [1, 1]} : vector<16x384xbf16> to vector<16x128xbf16>
    %18 = vector.shape_cast %17 : vector<16x128xbf16> to vector<2x8x4x32xbf16>
    %19 = tpu.transpose %18, [0, 2, 1, 3] : vector<2x8x4x32xbf16> -> vector<2x4x8x32xbf16>
    %20 = vector.shape_cast %19 : vector<2x4x8x32xbf16> to vector<8x8x32xbf16>
    %21 = tpu.iota {dimensions = array<i32: 0>} : vector<8x8xi32>
    %22 = tpu.iota {dimensions = array<i32: 1>} : vector<8x8xi32>
    %23 = arith.cmpi sge, %21, %22 : vector<8x8xi32>
    %cst_6 = arith.constant 0.000000e+00 : f32
    %cst_7 = arith.constant -1.000000e+04 : f32
    %24 = vector.broadcast %cst_6 : f32 to vector<8x8xf32>
    %25 = vector.broadcast %cst_7 : f32 to vector<8x8xf32>
    %26 = arith.select %23, %24, %25 : vector<8x8xi1>, vector<8x8xf32>
    %c0_8 = arith.constant 0 : index
    %c0_9 = arith.constant 0 : index
    %c0_10 = arith.constant 0 : index
    %27 = vector.load %arg2[%c0_8, %c0_9, %c0_10] : memref<2x1x8xf32, #tpu.memory_space<vmem>>, vector<2x1x8xf32>
    %cst_11 = arith.constant 1.000000e+00 : f32
    %28 = vector.broadcast %cst_11 : f32 to vector<2x1x8xf32>
    %29 = arith.subf %28, %27 : vector<2x1x8xf32>
    %cst_12 = arith.constant -1.000000e+04 : f32
    %30 = vector.broadcast %cst_12 : f32 to vector<2x1x8xf32>
    %31 = arith.mulf %29, %30 : vector<2x1x8xf32>
    "tpu.trace_start"() <{level = 10 : i32, message = "bqd,bkd->bqk"}> : () -> ()
    %cst_13 = arith.constant dense<0.000000e+00> : vector<8x8x8xf32>
    %32 = tpu.matmul %12, %16, %cst_13 {dimension_numbers = #tpu.dot_dimension_numbers<[2], [2], [1], [1], [0, 0, 0, 1, 1, 1], [0], [0]>} : vector<8x8x32xbf16>, vector<8x8x32xbf16>, vector<8x8x8xf32> -> vector<8x8x8xf32>
    "tpu.trace_stop"() : () -> ()
    %33 = vector.shape_cast %32 : vector<8x8x8xf32> to vector<2x4x8x8xf32>
    %cst_14 = arith.constant 0.176776692 : f32
    %34 = vector.broadcast %cst_14 : f32 to vector<2x4x8x8xf32>
    %35 = arith.mulf %33, %34 : vector<2x4x8x8xf32>
    %36 = vector.shape_cast %26 : vector<8x8xf32> to vector<1x1x8x8xf32>
    %37 = vector.broadcast %36 : vector<1x1x8x8xf32> to vector<2x4x8x8xf32>
    %38 = arith.addf %35, %37 : vector<2x4x8x8xf32>
    %39 = vector.shape_cast %31 : vector<2x1x8xf32> to vector<2x1x1x8xf32>
    %40 = vector.broadcast %39 : vector<2x1x1x8xf32> to vector<2x4x8x8xf32>
    %41 = arith.addf %38, %40 : vector<2x4x8x8xf32>
    %cst_15 = arith.constant dense<0xFF800000> : vector<2x4x8xf32>
    %42 = vector.multi_reduction <maximumf>, %41, %cst_15 [3] : vector<2x4x8x8xf32> to vector<2x4x8xf32>
    %43 = vector.shape_cast %42 : vector<2x4x8xf32> to vector<2x4x8x1xf32>
    %44 = vector.broadcast %43 : vector<2x4x8x1xf32> to vector<2x4x8x8xf32>
    %45 = arith.subf %41, %44 : vector<2x4x8x8xf32>
    %46 = math.exp %45 : vector<2x4x8x8xf32>
    %cst_16 = arith.constant dense<0.000000e+00> : vector<2x4x8xf32>
    %47 = vector.multi_reduction <add>, %46, %cst_16 [3] : vector<2x4x8x8xf32> to vector<2x4x8xf32>
    %48 = vector.shape_cast %47 : vector<2x4x8xf32> to vector<2x4x8x1xf32>
    %49 = tpu.reciprocal %48 {approx = true} : vector<2x4x8x1xf32> -> vector<2x4x8x1xf32>
    %50 = vector.broadcast %49 : vector<2x4x8x1xf32> to vector<2x4x8x8xf32>
    %51 = arith.mulf %46, %50 : vector<2x4x8x8xf32>
    %52 = arith.truncf %51 : vector<2x4x8x8xf32> to vector<2x4x8x8xbf16>
    %53 = vector.shape_cast %52 : vector<2x4x8x8xbf16> to vector<8x8x8xbf16>
    "tpu.trace_start"() <{level = 10 : i32, message = "bqk,bkd->bqd"}> : () -> ()
    %cst_17 = arith.constant dense<0.000000e+00> : vector<8x8x32xf32>
    %54 = tpu.matmul %53, %20, %cst_17 {dimension_numbers = #tpu.dot_dimension_numbers<[2], [1], [1], [2], [0, 0, 0, 1, 1, 2], [0], [0]>} : vector<8x8x8xbf16>, vector<8x8x32xbf16>, vector<8x8x32xf32> -> vector<8x8x32xf32>
    "tpu.trace_stop"() : () -> ()
    %55 = vector.shape_cast %54 : vector<8x8x32xf32> to vector<2x4x8x32xf32>
    %56 = tpu.transpose %55, [0, 2, 1, 3] : vector<2x4x8x32xf32> -> vector<2x8x4x32xf32>
    %57 = vector.shape_cast %56 : vector<2x8x4x32xf32> to vector<16x128xf32>
    %58 = arith.addf %2, %57 : vector<16x128xf32>
    %c0_18 = arith.constant 0 : index
    %c0_19 = arith.constant 0 : index
    %59 = vector.load %arg9[%c0_18, %c0_19] : memref<1x128xf32, #tpu.memory_space<vmem>>, vector<1x128xf32>
    %c0_20 = arith.constant 0 : index
    %c0_21 = arith.constant 0 : index
    %60 = vector.load %arg10[%c0_20, %c0_21] : memref<1x128xf32, #tpu.memory_space<vmem>>, vector<1x128xf32>
    %cst_22 = arith.constant dense<0.000000e+00> : vector<16xf32>
    %61 = vector.multi_reduction <add>, %58, %cst_22 [1] : vector<16x128xf32> to vector<16xf32>
    %62 = vector.shape_cast %61 : vector<16xf32> to vector<16x1xf32>
    %cst_23 = arith.constant 1.280000e+02 : f32
    %63 = vector.broadcast %cst_23 : f32 to vector<16x1xf32>
    %64 = arith.divf %62, %63 : vector<16x1xf32>
    %65 = arith.mulf %58, %58 : vector<16x128xf32>
    %cst_24 = arith.constant dense<0.000000e+00> : vector<16xf32>
    %66 = vector.multi_reduction <add>, %65, %cst_24 [1] : vector<16x128xf32> to vector<16xf32>
    %67 = vector.shape_cast %66 : vector<16xf32> to vector<16x1xf32>
    %cst_25 = arith.constant 1.280000e+02 : f32
    %68 = vector.broadcast %cst_25 : f32 to vector<16x1xf32>
    %69 = arith.divf %67, %68 : vector<16x1xf32>
    %70 = arith.mulf %64, %64 : vector<16x1xf32>
    %71 = arith.subf %69, %70 : vector<16x1xf32>
    %72 = vector.broadcast %64 : vector<16x1xf32> to vector<16x128xf32>
    %73 = arith.subf %58, %72 : vector<16x128xf32>
    %cst_26 = arith.constant 9.99999974E-6 : f32
    %74 = vector.broadcast %cst_26 : f32 to vector<16x1xf32>
    %75 = arith.addf %71, %74 : vector<16x1xf32>
    %76 = math.rsqrt %75 : vector<16x1xf32>
    %77 = vector.broadcast %76 : vector<16x1xf32> to vector<16x128xf32>
    %78 = arith.mulf %73, %77 : vector<16x128xf32>
    %79 = vector.broadcast %59 : vector<1x128xf32> to vector<16x128xf32>
    %80 = arith.mulf %78, %79 : vector<16x128xf32>
    %81 = vector.broadcast %60 : vector<1x128xf32> to vector<16x128xf32>
    %82 = arith.addf %80, %81 : vector<16x128xf32>
    %83 = arith.truncf %82 : vector<16x128xf32> to vector<16x128xbf16>
    %c0_27 = arith.constant 0 : index
    %c0_28 = arith.constant 0 : index
    %84 = vector.load %arg5[%c0_27, %c0_28] : memref<128x256xbf16, #tpu.memory_space<vmem>>, vector<128x256xbf16>
    %cst_29 = arith.constant dense<0.000000e+00> : vector<16x256xf32>
    %85 = tpu.matmul %83, %84, %cst_29 {dimension_numbers = #tpu.dot_dimension_numbers<[1], [0], [0], [1], [0, 0, 1, 1], [], []>} : vector<16x128xbf16>, vector<128x256xbf16>, vector<16x256xf32> -> vector<16x256xf32>
    %c0_30 = arith.constant 0 : index
    %c0_31 = arith.constant 0 : index
    %86 = vector.load %arg6[%c0_30, %c0_31] : memref<1x256xf32, #tpu.memory_space<vmem>>, vector<1x256xf32>
    %87 = vector.broadcast %86 : vector<1x256xf32> to vector<16x256xf32>
    %88 = arith.addf %85, %87 : vector<16x256xf32>
    %cst_32 = arith.constant 0.000000e+00 : f32
    %89 = vector.broadcast %cst_32 : f32 to vector<16x256xf32>
    %90 = arith.maximumf %88, %89 : vector<16x256xf32>
    %91 = arith.truncf %90 : vector<16x256xf32> to vector<16x256xbf16>
    %c0_33 = arith.constant 0 : index
    %c0_34 = arith.constant 0 : index
    %92 = vector.load %arg7[%c0_33, %c0_34] : memref<256x128xbf16, #tpu.memory_space<vmem>>, vector<256x128xbf16>
    %cst_35 = arith.constant dense<0.000000e+00> : vector<16x128xf32>
    %93 = tpu.matmul %91, %92, %cst_35 {dimension_numbers = #tpu.dot_dimension_numbers<[1], [0], [0], [1], [0, 0, 1, 1], [], []>} : vector<16x256xbf16>, vector<256x128xbf16>, vector<16x128xf32> -> vector<16x128xf32>
    %c0_36 = arith.constant 0 : index
    %c0_37 = arith.constant 0 : index
    %94 = vector.load %arg8[%c0_36, %c0_37] : memref<1x128xf32, #tpu.memory_space<vmem>>, vector<1x128xf32>
    %95 = vector.broadcast %94 : vector<1x128xf32> to vector<16x128xf32>
    %96 = arith.addf %93, %95 : vector<16x128xf32>
    %97 = arith.addf %82, %96 : vector<16x128xf32>
    %c0_38 = arith.constant 0 : index
    %c0_39 = arith.constant 0 : index
    %98 = vector.load %arg11[%c0_38, %c0_39] : memref<1x128xf32, #tpu.memory_space<vmem>>, vector<1x128xf32>
    %c0_40 = arith.constant 0 : index
    %c0_41 = arith.constant 0 : index
    %99 = vector.load %arg12[%c0_40, %c0_41] : memref<1x128xf32, #tpu.memory_space<vmem>>, vector<1x128xf32>
    %cst_42 = arith.constant dense<0.000000e+00> : vector<16xf32>
    %100 = vector.multi_reduction <add>, %97, %cst_42 [1] : vector<16x128xf32> to vector<16xf32>
    %101 = vector.shape_cast %100 : vector<16xf32> to vector<16x1xf32>
    %cst_43 = arith.constant 1.280000e+02 : f32
    %102 = vector.broadcast %cst_43 : f32 to vector<16x1xf32>
    %103 = arith.divf %101, %102 : vector<16x1xf32>
    %104 = arith.mulf %97, %97 : vector<16x128xf32>
    %cst_44 = arith.constant dense<0.000000e+00> : vector<16xf32>
    %105 = vector.multi_reduction <add>, %104, %cst_44 [1] : vector<16x128xf32> to vector<16xf32>
    %106 = vector.shape_cast %105 : vector<16xf32> to vector<16x1xf32>
    %cst_45 = arith.constant 1.280000e+02 : f32
    %107 = vector.broadcast %cst_45 : f32 to vector<16x1xf32>
    %108 = arith.divf %106, %107 : vector<16x1xf32>
    %109 = arith.mulf %103, %103 : vector<16x1xf32>
    %110 = arith.subf %108, %109 : vector<16x1xf32>
    %111 = vector.broadcast %103 : vector<16x1xf32> to vector<16x128xf32>
    %112 = arith.subf %97, %111 : vector<16x128xf32>
    %cst_46 = arith.constant 9.99999974E-6 : f32
    %113 = vector.broadcast %cst_46 : f32 to vector<16x1xf32>
    %114 = arith.addf %110, %113 : vector<16x1xf32>
    %115 = math.rsqrt %114 : vector<16x1xf32>
    %116 = vector.broadcast %115 : vector<16x1xf32> to vector<16x128xf32>
    %117 = arith.mulf %112, %116 : vector<16x128xf32>
    %118 = vector.broadcast %98 : vector<1x128xf32> to vector<16x128xf32>
    %119 = arith.mulf %117, %118 : vector<16x128xf32>
    %120 = vector.broadcast %99 : vector<1x128xf32> to vector<16x128xf32>
    %121 = arith.addf %119, %120 : vector<16x128xf32>
    %122 = vector.shape_cast %121 : vector<16x128xf32> to vector<2x8x128xf32>
    %123 = arith.truncf %122 : vector<2x8x128xf32> to vector<2x8x128xbf16>
    %c0_47 = arith.constant 0 : index
    %c0_48 = arith.constant 0 : index
    %c0_49 = arith.constant 0 : index
    %124 = vector.load %arg13[%c0_47, %c0_48, %c0_49] : memref<2x8x128xbf16, #tpu.memory_space<vmem>>, vector<2x8x128xbf16>
    tpu.vector_store %arg13[%c0_47, %c0_48, %c0_49], %123 {strides = array<i32>} : memref<2x8x128xbf16, #tpu.memory_space<vmem>>, vector<2x8x128xbf16>,
    return
  }
  func.func @transform_0(%arg0: i32) -> (i32, i32, i32) {
    %c0_i32 = arith.constant 0 : i32
    %c0_i32_0 = arith.constant 0 : i32
    %c0_i32_1 = arith.constant 0 : i32
    return %arg0, %c0_i32, %c0_i32_0 : i32, i32, i32
  }
  func.func @transform_1(%arg0: i32) -> (i32, i32, i32) {
    %c0_i32 = arith.constant 0 : i32
    %c0_i32_0 = arith.constant 0 : i32
    %c0_i32_1 = arith.constant 0 : i32
    return %arg0, %c0_i32, %c0_i32_0 : i32, i32, i32
  }
  func.func @transform_2(%arg0: i32) -> (i32, i32) {
    %c0_i32 = arith.constant 0 : i32
    %c0_i32_0 = arith.constant 0 : i32
    %c0_i32_1 = arith.constant 0 : i32
    return %c0_i32, %c0_i32_0 : i32, i32
  }
  func.func @transform_3(%arg0: i32) -> (i32, i32) {
    %c0_i32 = arith.constant 0 : i32
    %c0_i32_0 = arith.constant 0 : i32
    %c0_i32_1 = arith.constant 0 : i32
    return %c0_i32, %c0_i32_0 : i32, i32
  }
  func.func @transform_4(%arg0: i32) -> (i32, i32) {
    %c0_i32 = arith.constant 0 : i32
    %c0_i32_0 = arith.constant 0 : i32
    %c0_i32_1 = arith.constant 0 : i32
    return %c0_i32, %c0_i32_0 : i32, i32
  }
  func.func @transform_5(%arg0: i32) -> (i32, i32) {
    %c0_i32 = arith.constant 0 : i32
    %c0_i32_0 = arith.constant 0 : i32
    %c0_i32_1 = arith.constant 0 : i32
    return %c0_i32, %c0_i32_0 : i32, i32
  }
  func.func @transform_6(%arg0: i32) -> (i32, i32) {
    %c0_i32 = arith.constant 0 : i32
    %c0_i32_0 = arith.constant 0 : i32
    %c0_i32_1 = arith.constant 0 : i32
    return %c0_i32, %c0_i32_0 : i32, i32
  }
  func.func @transform_7(%arg0: i32) -> (i32, i32) {
    %c0_i32 = arith.constant 0 : i32
    %c0_i32_0 = arith.constant 0 : i32
    %c0_i32_1 = arith.constant 0 : i32
    return %c0_i32, %c0_i32_0 : i32, i32
  }
  func.func @transform_8(%arg0: i32) -> (i32, i32) {
    %c0_i32 = arith.constant 0 : i32
    %c0_i32_0 = arith.constant 0 : i32
    %c0_i32_1 = arith.constant 0 : i32
    return %c0_i32, %c0_i32_0 : i32, i32
  }
  func.func @transform_9(%arg0: i32) -> (i32, i32) {
    %c0_i32 = arith.constant 0 : i32
    %c0_i32_0 = arith.constant 0 : i32
    %c0_i32_1 = arith.constant 0 : i32
    return %c0_i32, %c0_i32_0 : i32, i32
  }
  func.func @transform_10(%arg0: i32) -> (i32, i32) {
    %c0_i32 = arith.constant 0 : i32
    %c0_i32_0 = arith.constant 0 : i32
    %c0_i32_1 = arith.constant 0 : i32
    return %c0_i32, %c0_i32_0 : i32, i32
  }
  func.func @transform_11(%arg0: i32) -> (i32, i32) {
    %c0_i32 = arith.constant 0 : i32
    %c0_i32_0 = arith.constant 0 : i32
    %c0_i32_1 = arith.constant 0 : i32
    return %c0_i32, %c0_i32_0 : i32, i32
  }
  func.func @transform_12(%arg0: i32) -> (i32, i32, i32) {
    %c0_i32 = arith.constant 0 : i32
    %c0_i32_0 = arith.constant 0 : i32
    %c0_i32_1 = arith.constant 0 : i32
    return %arg0, %c0_i32, %c0_i32_0 : i32, i32, i32
  }
}

</mosaic_0001>

<llo_original>
// kernel: tpu_custom_call.1
$region0: #{tpu_custom_call.1}
  #allocation0 [shape = 'u32[]', space=smem, size = 0x4, offset = 0x4, fixed_abs, tag = 'smem constant byte address 0x4 - core index']
  #allocation1 [shape = 'u32[144,128]{1,0:T(1,128)}', space=vmem, size = 0x12000, scoped, tag = 'internal scratch']
  %s0 = inlined_call_operand.hbm [shape: bf16[2,8,128], index: 0, kind: input, shape index: {}]
  %s1 = inlined_call_operand.vmem [shape: f32[2,1,8], index: 1, kind: input, shape index: {}]
  %s2 = inlined_call_operand.hbm [shape: bf16[128,384], index: 2, kind: input, shape index: {}]
  %s3 = inlined_call_operand.vmem [shape: f32[1,384], index: 3, kind: input, shape index: {}]
  %s4 = inlined_call_operand.hbm [shape: bf16[128,256], index: 4, kind: input, shape index: {}]
  %s5 = inlined_call_operand.vmem [shape: f32[1,256], index: 5, kind: input, shape index: {}]
  %s6 = inlined_call_operand.hbm [shape: bf16[256,128], index: 6, kind: input, shape index: {}]
  %s7 = inlined_call_operand.vmem [shape: f32[1,128], index: 7, kind: input, shape index: {}]
  %s8 = inlined_call_operand.vmem [shape: f32[1,128], index: 8, kind: input, shape index: {}]
  %s9 = inlined_call_operand.vmem [shape: f32[1,128], index: 9, kind: input, shape index: {}]
  %s10 = inlined_call_operand.vmem [shape: f32[1,128], index: 10, kind: input, shape index: {}]
  %s11 = inlined_call_operand.vmem [shape: f32[1,128], index: 11, kind: input, shape index: {}]
  %s12 = inlined_call_operand.hbm [shape: bf16[2,8,128], index: 12, kind: output, shape index: {}]
  %s13 = sld [smem:[#allocation0]]
  $region74: #{tpu_custom_call.1} parent=0
    _
  %s15 = ssub.s32 1, %s13
  %s16 = scalar_select 0, %s15, %s13
  $region1: #{tpu_custom_call.1} parent=0
    #allocation2 [shape = 'u8[4096]{0}', space=vmem, size = 0x1000, scoped, tag = 'input window, operand 0, single buffered']
    #allocation3 [shape = 's32[1]{0}', space=sflag, size = 0x4, scoped, tag = 'scoped memory for tpu_custom_call.1']
    #allocation4 [shape = 's32[1]{0}', space=sflag, size = 0x4, scoped, tag = 'scoped memory for tpu_custom_call.1']
    #allocation5 [shape = 'u8[98304]{0}', space=vmem, size = 0x18000, scoped, tag = 'input window, operand 2, single buffered']
    #allocation6 [shape = 's32[1]{0}', space=sflag, size = 0x4, scoped, tag = 'scoped memory for tpu_custom_call.1']
    #allocation7 [shape = 'u8[65536]{0}', space=vmem, size = 0x10000, scoped, tag = 'input window, operand 4, single buffered']
    #allocation8 [shape = 'u8[65536]{0}', space=vmem, size = 0x10000, scoped, tag = 'input window, operand 6, single buffered']
    #allocation9 [shape = 's32[1]{0}', space=sflag, size = 0x4, scoped, tag = 'scoped memory for tpu_custom_call.1']
    #allocation10 [shape = 'u8[4096]{0}', space=vmem, size = 0x1000, scoped, tag = 'output window, operand 0, single buffered']
    %17 = vsyncpa [#allocation3], 0
    %18 = vsyncpa [#allocation6], 0
    %19 = vsyncpa [#allocation9], 0
    %20 = vsyncpa [#allocation4], 0
    // Predicated region
    $region2: #{tpu_custom_call.1} parent=1 // pred_check
      _
    $region3: #{tpu_custom_call.1} parent=1 // pred_check_branch
      %22 = sbr.rel (0) target = $region5
    $region4: #{tpu_custom_call.1} parent=1 // pred_region
      %s24 = ssub.s32 128, 128
      %25 = vsyncadd [#allocation3], %s24
      %s26 = sshll.u32 [#allocation2], 4
      %s27 = int_to_ptr.vmem [resolvable:$true] %s26
      %32 = dma.hbm_to_vmem [thread:$0]  %s0, 128, %s27, [#allocation3], 64, 64, 4
    $region5: #{tpu_custom_call.1} parent=1 // pred_fallthru
      _
    // Predicated region
    $region6: #{tpu_custom_call.1} parent=1 // pred_check
      _
    $region7: #{tpu_custom_call.1} parent=1 // pred_check_branch
      %34 = sbr.rel (0) target = $region9
    $region8: #{tpu_custom_call.1} parent=1 // pred_region
      _
    $region9: #{tpu_custom_call.1} parent=1 // pred_fallthru
      _
    // Predicated region
    $region10: #{tpu_custom_call.1} parent=1 // pred_check
      _
    $region11: #{tpu_custom_call.1} parent=1 // pred_check_branch
      %36 = sbr.rel (0) target = $region13
    $region12: #{tpu_custom_call.1} parent=1 // pred_region
      %s38 = ssub.s32 3072, 3072
      %39 = vsyncadd [#allocation6], %s38
      %s40 = sshll.u32 [#allocation5], 4
      %s41 = int_to_ptr.vmem [resolvable:$true] %s40
      %46 = dma.hbm_to_vmem [thread:$0]  %s2, 3072, %s41, [#allocation6], 192, 192, 12
    $region13: #{tpu_custom_call.1} parent=1 // pred_fallthru
      _
    // Predicated region
    $region14: #{tpu_custom_call.1} parent=1 // pred_check
      _
    $region15: #{tpu_custom_call.1} parent=1 // pred_check_branch
      %48 = sbr.rel (0) target = $region17
    $region16: #{tpu_custom_call.1} parent=1 // pred_region
      _
    $region17: #{tpu_custom_call.1} parent=1 // pred_fallthru
      _
    // Predicated region
    $region18: #{tpu_custom_call.1} parent=1 // pred_check
      _
    $region19: #{tpu_custom_call.1} parent=1 // pred_check_branch
      %50 = sbr.rel (0) target = $region21
    $region20: #{tpu_custom_call.1} parent=1 // pred_region
      %s52 = ssub.s32 2048, 2048
      %53 = vsyncadd [#allocation6], %s52
      %s54 = sshll.u32 [#allocation7], 4
      %s55 = int_to_ptr.vmem [resolvable:$true] %s54
      %60 = dma.hbm_to_vmem [thread:$0]  %s4, 2048, %s55, [#allocation6], 128, 128, 8
    $region21: #{tpu_custom_call.1} parent=1 // pred_fallthru
      _
    // Predicated region
    $region22: #{tpu_custom_call.1} parent=1 // pred_check
      _
    $region23: #{tpu_custom_call.1} parent=1 // pred_check_branch
      %62 = sbr.rel (0) target = $region25
    $region24: #{tpu_custom_call.1} parent=1 // pred_region
      _
    $region25: #{tpu_custom_call.1} parent=1 // pred_fallthru
      _
    // Predicated region
    $region26: #{tpu_custom_call.1} parent=1 // pred_check
      _
    $region27: #{tpu_custom_call.1} parent=1 // pred_check_branch
      %64 = sbr.rel (0) target = $region29
    $region28: #{tpu_custom_call.1} parent=1 // pred_region
      %s66 = ssub.s32 2048, 2048
      %67 = vsyncadd [#allocation9], %s66
      %s68 = sshll.u32 [#allocation8], 4
      %s69 = int_to_ptr.vmem [resolvable:$true] %s68
      %74 = dma.hbm_to_vmem [thread:$0]  %s6, 2048, %s69, [#allocation9], 64, 64, 4
    $region29: #{tpu_custom_call.1} parent=1 // pred_fallthru
      _
    // Predicated region
    $region30: #{tpu_custom_call.1} parent=1 // pred_check
      _
    $region31: #{tpu_custom_call.1} parent=1 // pred_check_branch
      %76 = sbr.rel (0) target = $region33
    $region32: #{tpu_custom_call.1} parent=1 // pred_region
      _
    $region33: #{tpu_custom_call.1} parent=1 // pred_fallthru
      _
    // Predicated region
    $region34: #{tpu_custom_call.1} parent=1 // pred_check
      _
    $region35: #{tpu_custom_call.1} parent=1 // pred_check_branch
      %78 = sbr.rel (0) target = $region37
    $region36: #{tpu_custom_call.1} parent=1 // pred_region
      _
    $region37: #{tpu_custom_call.1} parent=1 // pred_fallthru
      _
    // Predicated region
    $region38: #{tpu_custom_call.1} parent=1 // pred_check
      _
    $region39: #{tpu_custom_call.1} parent=1 // pred_check_branch
      %80 = sbr.rel (0) target = $region41
    $region40: #{tpu_custom_call.1} parent=1 // pred_region
      _
    $region41: #{tpu_custom_call.1} parent=1 // pred_fallthru
      _
    // Predicated region
    $region42: #{tpu_custom_call.1} parent=1 // pred_check
      _
    $region43: #{tpu_custom_call.1} parent=1 // pred_check_branch
      %82 = sbr.rel (0) target = $region45
    $region44: #{tpu_custom_call.1} parent=1 // pred_region
      _
    $region45: #{tpu_custom_call.1} parent=1 // pred_fallthru
      _
    // Predicated region
    $region46: #{tpu_custom_call.1} parent=1 // pred_check
      _
    $region47: #{tpu_custom_call.1} parent=1 // pred_check_branch
      %84 = sbr.rel (0) target = $region49
    $region48: #{tpu_custom_call.1} parent=1 // pred_region
      _
    $region49: #{tpu_custom_call.1} parent=1 // pred_fallthru
      _
    // Predicated region
    $region50: #{tpu_custom_call.1} parent=1 // pred_check
      _
    $region51: #{tpu_custom_call.1} parent=1 // pred_check_branch
      %86 = sbr.rel (0) target = $region53
    $region52: #{tpu_custom_call.1} parent=1 // pred_region
      %87 = dma.done [#allocation3], 128
    $region53: #{tpu_custom_call.1} parent=1 // pred_fallthru
      _
    // Predicated region
    $region54: #{tpu_custom_call.1} parent=1 // pred_check
      _
    $region55: #{tpu_custom_call.1} parent=1 // pred_check_branch
      %89 = sbr.rel (0) target = $region57
    $region56: #{tpu_custom_call.1} parent=1 // pred_region
      %90 = dma.done [#allocation6], 3072
    $region57: #{tpu_custom_call.1} parent=1 // pred_fallthru
      _
    // Predicated region
    $region58: #{tpu_custom_call.1} parent=1 // pred_check
      _
    $region59: #{tpu_custom_call.1} parent=1 // pred_check_branch
      %92 = sbr.rel (0) target = $region61
    $region60: #{tpu_custom_call.1} parent=1 // pred_region
      %93 = dma.done [#allocation6], 2048
    $region61: #{tpu_custom_call.1} parent=1 // pred_fallthru
      _
    // Predicated region
    $region62: #{tpu_custom_call.1} parent=1 // pred_check
      _
    $region63: #{tpu_custom_call.1} parent=1 // pred_check_branch
      %95 = sbr.rel (0) target = $region65
    $region64: #{tpu_custom_call.1} parent=1 // pred_region
      %96 = dma.done [#allocation9], 2048
    $region65: #{tpu_custom_call.1} parent=1 // pred_fallthru
      _
    %v98 = vld [vmem:[#allocation2] sm:$0xf]
    %v99 = vld [vmem:[#allocation2 + $0x4] sm:$0xf]
    %v100 = vunpack.c.l.bf16 %v98
    %v101 = vunpack.c.l.bf16 %v99
    %v102 = vld [vmem:[#allocation5] sm:$0xff]
    %v103 = vld [vmem:[#allocation5 + $0x8] sm:$0xf]
    %v104 = vld [vmem:[#allocation5 + $0xc] sm:$0xff]
    %v105 = vld [vmem:[#allocation5 + $0x14] sm:$0xf]
    %v106 = vld [vmem:[#allocation5 + $0x18] sm:$0xff]
    %v107 = vld [vmem:[#allocation5 + $0x20] sm:$0xf]
    %v108 = vld [vmem:[#allocation5 + $0x24] sm:$0xff]
    %v109 = vld [vmem:[#allocation5 + $0x2c] sm:$0xf]
    %v110 = vld [vmem:[#allocation5 + $0x30] sm:$0xff]
    %v111 = vld [vmem:[#allocation5 + $0x38] sm:$0xf]
    %v112 = vld [vmem:[#allocation5 + $0x3c] sm:$0xff]
    %v113 = vld [vmem:[#allocation5 + $0x44] sm:$0xf]
    %v114 = vld [vmem:[#allocation5 + $0x48] sm:$0xff]
    %v115 = vld [vmem:[#allocation5 + $0x50] sm:$0xf]
    %v116 = vld [vmem:[#allocation5 + $0x54] sm:$0xff]
    %v117 = vld [vmem:[#allocation5 + $0x5c] sm:$0xf]
    %v118 = vld [vmem:[#allocation5 + $0x60] sm:$0xff]
    %v119 = vld [vmem:[#allocation5 + $0x68] sm:$0xf]
    %v120 = vld [vmem:[#allocation5 + $0x6c] sm:$0xff]
    %v121 = vld [vmem:[#allocation5 + $0x74] sm:$0xf]
    %v122 = vld [vmem:[#allocation5 + $0x78] sm:$0xff]
    %v123 = vld [vmem:[#allocation5 + $0x80] sm:$0xf]
    %v124 = vld [vmem:[#allocation5 + $0x84] sm:$0xff]
    %v125 = vld [vmem:[#allocation5 + $0x8c] sm:$0xf]
    %v126 = vld [vmem:[#allocation5 + $0x90] sm:$0xff]
    %v127 = vld [vmem:[#allocation5 + $0x98] sm:$0xf]
    %v128 = vld [vmem:[#allocation5 + $0x9c] sm:$0xff]
    %v129 = vld [vmem:[#allocation5 + $0xa4] sm:$0xf]
    %v130 = vld [vmem:[#allocation5 + $0xa8] sm:$0xff]
    %v131 = vld [vmem:[#allocation5 + $0xb0] sm:$0xf]
    %v132 = vld [vmem:[#allocation5 + $0xb4] sm:$0xff]
    %v133 = vld [vmem:[#allocation5 + $0xbc] sm:$0xf]
    %v134 = vld [vmem:[%s3] sm:$0x7]
    %v136 = vlaneseq
    %v137 = vshrl.u32 %v136, 7
    %v138 = vsub.s32 0, %v137
    %v139 = vrot.slane %v134, %v138
    %v140 = vlaneseq
    %v141 = vshrl.u32 %v140, 7
    %v142 = vsub.s32 1, %v141
    %v143 = vrot.slane %v134, %v142
    %v144 = vlaneseq
    %v145 = vshrl.u32 %v144, 7
    %v146 = vsub.s32 2, %v145
    %v147 = vrot.slane %v134, %v146
    %v153 = vunpack.c.l.b16 %v98
    %v154 = vunpack.c.l.b16 %v99
    %v155 = vpack.c.b16 %v154, %v153
    %v189 = vunpack.c.l.b16 %v102
    %v190 = vunpack.c.h.b16 %v102
    %v191 = vunpack.c.l.b16 %v103
    %v192 = vunpack.c.l.b16 %v104
    %v193 = vunpack.c.h.b16 %v104
    %v194 = vunpack.c.l.b16 %v105
    %v195 = vunpack.c.l.b16 %v106
    %v196 = vunpack.c.h.b16 %v106
    %v197 = vunpack.c.l.b16 %v107
    %v198 = vunpack.c.l.b16 %v108
    %v199 = vunpack.c.h.b16 %v108
    %v200 = vunpack.c.l.b16 %v109
    %v201 = vunpack.c.l.b16 %v110
    %v202 = vunpack.c.h.b16 %v110
    %v203 = vunpack.c.l.b16 %v111
    %v204 = vunpack.c.l.b16 %v112
    %v205 = vunpack.c.h.b16 %v112
    %v206 = vunpack.c.l.b16 %v113
    %v207 = vunpack.c.l.b16 %v114
    %v208 = vunpack.c.h.b16 %v114
    %v209 = vunpack.c.l.b16 %v115
    %v210 = vunpack.c.l.b16 %v116
    %v211 = vunpack.c.h.b16 %v116
    %v212 = vunpack.c.l.b16 %v117
    %v213 = vunpack.c.l.b16 %v118
    %v214 = vunpack.c.h.b16 %v118
    %v215 = vunpack.c.l.b16 %v119
    %v216 = vunpack.c.l.b16 %v120
    %v217 = vunpack.c.h.b16 %v120
    %v218 = vunpack.c.l.b16 %v121
    %v219 = vunpack.c.l.b16 %v122
    %v220 = vunpack.c.h.b16 %v122
    %v221 = vunpack.c.l.b16 %v123
    %v222 = vunpack.c.l.b16 %v124
    %v223 = vunpack.c.h.b16 %v124
    %v224 = vunpack.c.l.b16 %v125
    %v225 = vunpack.c.l.b16 %v126
    %v226 = vunpack.c.h.b16 %v126
    %v227 = vunpack.c.l.b16 %v127
    %v228 = vunpack.c.l.b16 %v128
    %v229 = vunpack.c.h.b16 %v128
    %v230 = vunpack.c.l.b16 %v129
    %v231 = vunpack.c.l.b16 %v130
    %v232 = vunpack.c.h.b16 %v130
    %v233 = vunpack.c.l.b16 %v131
    %v234 = vunpack.c.l.b16 %v132
    %v235 = vunpack.c.h.b16 %v132
    %v236 = vunpack.c.l.b16 %v133
    %v237 = vpack.c.b16 %v192, %v189
    %v238 = vpack.c.b16 %v193, %v190
    %v239 = vpack.c.b16 %v194, %v191
    %v240 = vpack.c.b16 %v198, %v195
    %v241 = vpack.c.b16 %v199, %v196
    %v242 = vpack.c.b16 %v200, %v197
    %v243 = vpack.c.b16 %v204, %v201
    %v244 = vpack.c.b16 %v205, %v202
    %v245 = vpack.c.b16 %v206, %v203
    %v246 = vpack.c.b16 %v210, %v207
    %v247 = vpack.c.b16 %v211, %v208
    %v248 = vpack.c.b16 %v212, %v209
    %v249 = vpack.c.b16 %v216, %v213
    %v250 = vpack.c.b16 %v217, %v214
    %v251 = vpack.c.b16 %v218, %v215
    %v252 = vpack.c.b16 %v222, %v219
    %v253 = vpack.c.b16 %v223, %v220
    %v254 = vpack.c.b16 %v224, %v221
    %v255 = vpack.c.b16 %v228, %v225
    %v256 = vpack.c.b16 %v229, %v226
    %v257 = vpack.c.b16 %v230, %v227
    %v258 = vpack.c.b16 %v234, %v231
    %v259 = vpack.c.b16 %v235, %v232
    %v260 = vpack.c.b16 %v236, %v233
    %285 = vmatprep.subr.bf16.mxu0 %v238
    %286 = vmatpush1.bf16.msra.mxu0 %v237
    %287 = vmatprep.subr.bf16.mxu0 %v241
    %288 = vmatpush1.bf16.msra.mxu0 %v240
    %289 = vmatprep.subr.bf16.mxu0 %v244
    %290 = vmatpush1.bf16.msra.mxu0 %v243
    %291 = vmatprep.subr.bf16.mxu0 %v247
    %292 = vmatpush1.bf16.msra.mxu0 %v246
    %293 = vmatprep.subr.bf16.mxu0 %v250
    %294 = vmatpush1.bf16.msra.mxu0 %v249
    %295 = vmatprep.subr.bf16.mxu0 %v253
    %296 = vmatpush1.bf16.msra.mxu0 %v252
    %297 = vmatprep.subr.bf16.mxu0 %v256
    %298 = vmatpush1.bf16.msra.mxu0 %v255
    %299 = vmatprep.subr.bf16.mxu0 %v259
    %300 = vmatpush1.bf16.msra.mxu0 %v258
    %301 = vmatprep.subr.bf16.mxu0 0
    %302 = vmatpush1.bf16.msra.mxu0 0
    %303 = vmatprep.subr.bf16.mxu0 0
    %304 = vmatpush1.bf16.msra.mxu0 0
    %305 = vmatprep.subr.bf16.mxu0 0
    %306 = vmatpush1.bf16.msra.mxu0 0
    %307 = vmatprep.subr.bf16.mxu0 0
    %308 = vmatpush1.bf16.msra.mxu0 0
    %309 = vmatprep.subr.bf16.mxu0 0
    %310 = vmatpush1.bf16.msra.mxu0 0
    %311 = vmatprep.subr.bf16.mxu0 0
    %312 = vmatpush1.bf16.msra.mxu0 0
    %313 = vmatprep.subr.bf16.mxu0 0
    %314 = vmatpush1.bf16.msra.mxu0 0
    %315 = vmatprep.subr.bf16.mxu0 0
    %316 = vmatpush1.bf16.msra.mxu0 0
    %317 = vmatprep.mubr.bf16.mxu0 0
    %318 = vmatmul.mubr.bf16.gmra.mrb[0].mxu0 %v155
    %v319 = vpop.f32.mrb[0].mxu0
    %v320 = vadd.f32 %v139, %v319
    %v321 = vpop.f32.mrb[0].mxu0
    %v322 = vadd.f32 %v143, %v321
    %v323 = vpop.f32.mrb[0].mxu0
    %v324 = vadd.f32 %v139, %v323
    %v325 = vpop.f32.mrb[0].mxu0
    %v326 = vadd.f32 %v143, %v325
    %327 = vdwg.mxu0
    %328 = vmatprep.subr.bf16.mxu0 0
    %329 = vmatpush1.bf16.msra.mxu0 %v239
    %330 = vmatprep.subr.bf16.mxu0 0
    %331 = vmatpush1.bf16.msra.mxu0 %v242
    %332 = vmatprep.subr.bf16.mxu0 0
    %333 = vmatpush1.bf16.msra.mxu0 %v245
    %334 = vmatprep.subr.bf16.mxu0 0
    %335 = vmatpush1.bf16.msra.mxu0 %v248
    %336 = vmatprep.subr.bf16.mxu0 0
    %337 = vmatpush1.bf16.msra.mxu0 %v251
    %338 = vmatprep.subr.bf16.mxu0 0
    %339 = vmatpush1.bf16.msra.mxu0 %v254
    %340 = vmatprep.subr.bf16.mxu0 0
    %341 = vmatpush1.bf16.msra.mxu0 %v257
    %342 = vmatprep.subr.bf16.mxu0 0
    %343 = vmatpush1.bf16.msra.mxu0 %v260
    %344 = vmatprep.subr.bf16.mxu0 0
    %345 = vmatpush1.bf16.msra.mxu0 0
    %346 = vmatprep.subr.bf16.mxu0 0
    %347 = vmatpush1.bf16.msra.mxu0 0
    %348 = vmatprep.subr.bf16.mxu0 0
    %349 = vmatpush1.bf16.msra.mxu0 0
    %350 = vmatprep.subr.bf16.mxu0 0
    %351 = vmatpush1.bf16.msra.mxu0 0
    %352 = vmatprep.subr.bf16.mxu0 0
    %353 = vmatpush1.bf16.msra.mxu0 0
    %354 = vmatprep.subr.bf16.mxu0 0
    %355 = vmatpush1.bf16.msra.mxu0 0
    %356 = vmatprep.subr.bf16.mxu0 0
    %357 = vmatpush1.bf16.msra.mxu0 0
    %358 = vmatprep.subr.bf16.mxu0 0
    %359 = vmatpush1.bf16.msra.mxu0 0
    %360 = vmatprep.mubr.bf16.mxu0 0
    %361 = vmatmul.mubr.bf16.gmra.mrb[0].mxu0 %v155
    %v362 = vpop.f32.mrb[0].mxu0
    %v363 = vadd.f32 %v147, %v362
    %v364 = vpop.f32.mrb[0].mxu0
    %v365 = vpop.f32.mrb[0].mxu0
    %v366 = vadd.f32 %v147, %v365
    %v367 = vpop.f32.mrb[0].mxu0
    %368 = vdwg.mxu0
    %v369 = vpack.c.bf16 %v324, %v320
    %v370 = vpack.c.bf16 %v326, %v322
    %v371 = vpack.c.bf16 %v366, %v363
    %373 = vrot.lane.b32.xlu0 %v369, 96
    %v374 = vpop.permute.xlu0 %373
    %375 = vrot.lane.b32.xlu0 %v369, 64
    %v376 = vpop.permute.xlu0 %375
    %377 = vrot.lane.b32.xlu0 %v369, 32
    %v378 = vpop.permute.xlu0 %377
    %v381 = vpack.i.b16 %v374, %v369
    %v383 = vshrl.u32 %v369, 16
    %v384 = vshrl.u32 %v374, 16
    %v385 = vpack.i.b16 %v384, %v383
    %v389 = vpack.i.b16 %v378, %v376
    %v391 = vshrl.u32 %v376, 16
    %v392 = vshrl.u32 %v378, 16
    %v393 = vpack.i.b16 %v392, %v391
    %v396 = vpack.i.b16 0, 0
    %v398 = vshrl.u32 0, 16
    %v399 = vpack.i.b16 %v398, %v398
    %v401 = vcombine.high %v381, %v396
    %v403 = vunpack.c.l.s4 1983009808
    %v404 = vunpack.c.0.s8 %v403
    %v405 = vlaneseq
    %v406 = vshrl.u32 %v405, 7
    %v407 = vsub.s32 %v404, %v406
    %v408 = vrot.slane %v381, %v407
    %v410 = vunpack.c.l.s4 1983009808
    %v411 = vunpack.c.0.s8 %v410
    %v412 = vlaneseq
    %v413 = vshrl.u32 %v412, 7
    %v414 = vsub.s32 %v411, %v413
    %v415 = vrot.slane %v401, %v414
    %v416 = vcombine.high %v389, %v396
    %v418 = vunpack.c.l.s4 1983009808
    %v419 = vunpack.c.0.s8 %v418
    %v420 = vlaneseq
    %v421 = vshrl.u32 %v420, 7
    %v422 = vsub.s32 %v419, %v421
    %v423 = vrot.slane %v389, %v422
    %v425 = vunpack.c.l.s4 1983009808
    %v426 = vunpack.c.0.s8 %v425
    %v427 = vlaneseq
    %v428 = vshrl.u32 %v427, 7
    %v429 = vsub.s32 %v426, %v428
    %v430 = vrot.slane %v416, %v429
    %v431 = vcombine.low %v408, %v423
    %v432 = vcombine.high %v408, %v423
    %v434 = vunpack.c.l.s4 1934713408
    %v435 = vunpack.c.0.s8 %v434
    %v436 = vlaneseq
    %v437 = vshrl.u32 %v436, 7
    %v438 = vsub.s32 %v435, %v437
    %v439 = vrot.slane %v431, %v438
    %v441 = vunpack.c.l.s4 1934713408
    %v442 = vunpack.c.0.s8 %v441
    %v443 = vlaneseq
    %v444 = vshrl.u32 %v443, 7
    %v445 = vsub.s32 %v442, %v444
    %v446 = vrot.slane %v432, %v445
    %v447 = vcombine.low %v415, %v430
    %v448 = vcombine.high %v415, %v430
    %v450 = vunpack.c.l.s4 1934713408
    %v451 = vunpack.c.0.s8 %v450
    %v452 = vlaneseq
    %v453 = vshrl.u32 %v452, 7
    %v454 = vsub.s32 %v451, %v453
    %v455 = vrot.slane %v447, %v454
    %v457 = vunpack.c.l.s4 1934713408
    %v458 = vunpack.c.0.s8 %v457
    %v459 = vlaneseq
    %v460 = vshrl.u32 %v459, 7
    %v461 = vsub.s32 %v458, %v460
    %v462 = vrot.slane %v448, %v461
    %v463 = vcombine.high %v439, 0
    %v464 = vcombine.high %v446, 0
    %v465 = vcombine.high %v455, 0
    %v466 = vcombine.high %v462, 0
    %v467 = vcombine.high %v385, %v399
    %v469 = vunpack.c.l.s4 1983009808
    %v470 = vunpack.c.0.s8 %v469
    %v471 = vlaneseq
    %v472 = vshrl.u32 %v471, 7
    %v473 = vsub.s32 %v470, %v472
    %v474 = vrot.slane %v385, %v473
    %v476 = vunpack.c.l.s4 1983009808
    %v477 = vunpack.c.0.s8 %v476
    %v478 = vlaneseq
    %v479 = vshrl.u32 %v478, 7
    %v480 = vsub.s32 %v477, %v479
    %v481 = vrot.slane %v467, %v480
    %v482 = vcombine.high %v393, %v399
    %v484 = vunpack.c.l.s4 1983009808
    %v485 = vunpack.c.0.s8 %v484
    %v486 = vlaneseq
    %v487 = vshrl.u32 %v486, 7
    %v488 = vsub.s32 %v485, %v487
    %v489 = vrot.slane %v393, %v488
    %v491 = vunpack.c.l.s4 1983009808
    %v492 = vunpack.c.0.s8 %v491
    %v493 = vlaneseq
    %v494 = vshrl.u32 %v493, 7
    %v495 = vsub.s32 %v492, %v494
    %v496 = vrot.slane %v482, %v495
    %v497 = vcombine.low %v474, %v489
    %v498 = vcombine.high %v474, %v489
    %v500 = vunpack.c.l.s4 1934713408
    %v501 = vunpack.c.0.s8 %v500
    %v502 = vlaneseq
    %v503 = vshrl.u32 %v502, 7
    %v504 = vsub.s32 %v501, %v503
    %v505 = vrot.slane %v497, %v504
    %v507 = vunpack.c.l.s4 1934713408
    %v508 = vunpack.c.0.s8 %v507
    %v509 = vlaneseq
    %v510 = vshrl.u32 %v509, 7
    %v511 = vsub.s32 %v508, %v510
    %v512 = vrot.slane %v498, %v511
    %v513 = vcombine.low %v481, %v496
    %v514 = vcombine.high %v481, %v496
    %v516 = vunpack.c.l.s4 1934713408
    %v517 = vunpack.c.0.s8 %v516
    %v518 = vlaneseq
    %v519 = vshrl.u32 %v518, 7
    %v520 = vsub.s32 %v517, %v519
    %v521 = vrot.slane %v513, %v520
    %v523 = vunpack.c.l.s4 1934713408
    %v524 = vunpack.c.0.s8 %v523
    %v525 = vlaneseq
    %v526 = vshrl.u32 %v525, 7
    %v527 = vsub.s32 %v524, %v526
    %v528 = vrot.slane %v514, %v527
    %v529 = vcombine.high %v505, 0
    %v530 = vcombine.high %v512, 0
    %v531 = vcombine.high %v521, 0
    %v532 = vcombine.high %v528, 0
    %v533 = vcombine.low %v439, %v446
    %v535 = vunpack.c.l.s4 1983009808
    %v536 = vunpack.c.0.s8 %v535
    %v537 = vlaneseq
    %v538 = vshrl.u32 %v537, 7
    %v539 = vsub.s32 %v536, %v538
    %v540 = vrot.slane %v533, %v539
    %v541 = vcombine.low %v463, %v464
    %v543 = vunpack.c.l.s4 1983009808
    %v544 = vunpack.c.0.s8 %v543
    %v545 = vlaneseq
    %v546 = vshrl.u32 %v545, 7
    %v547 = vsub.s32 %v544, %v546
    %v548 = vrot.slane %v541, %v547
    %v549 = vcombine.low %v540, %v548
    %v551 = vunpack.c.l.s4 1934713408
    %v552 = vunpack.c.0.s8 %v551
    %v553 = vlaneseq
    %v554 = vshrl.u32 %v553, 7
    %v555 = vsub.s32 %v552, %v554
    %v556 = vrot.slane %v549, %v555
    %v557 = vcombine.high %v556, 0
    %v558 = vcombine.low %v505, %v512
    %v560 = vunpack.c.l.s4 1983009808
    %v561 = vunpack.c.0.s8 %v560
    %v562 = vlaneseq
    %v563 = vshrl.u32 %v562, 7
    %v564 = vsub.s32 %v561, %v563
    %v565 = vrot.slane %v558, %v564
    %v566 = vcombine.low %v529, %v530
    %v568 = vunpack.c.l.s4 1983009808
    %v569 = vunpack.c.0.s8 %v568
    %v570 = vlaneseq
    %v571 = vshrl.u32 %v570, 7
    %v572 = vsub.s32 %v569, %v571
    %v573 = vrot.slane %v566, %v572
    %v574 = vcombine.low %v565, %v573
    %v576 = vunpack.c.l.s4 1934713408
    %v577 = vunpack.c.0.s8 %v576
    %v578 = vlaneseq
    %v579 = vshrl.u32 %v578, 7
    %v580 = vsub.s32 %v577, %v579
    %v581 = vrot.slane %v574, %v580
    %v582 = vcombine.high %v581, 0
    %v583 = vcombine.low %v455, %v462
    %v585 = vunpack.c.l.s4 1983009808
    %v586 = vunpack.c.0.s8 %v585
    %v587 = vlaneseq
    %v588 = vshrl.u32 %v587, 7
    %v589 = vsub.s32 %v586, %v588
    %v590 = vrot.slane %v583, %v589
    %v591 = vcombine.low %v465, %v466
    %v593 = vunpack.c.l.s4 1983009808
    %v594 = vunpack.c.0.s8 %v593
    %v595 = vlaneseq
    %v596 = vshrl.u32 %v595, 7
    %v597 = vsub.s32 %v594, %v596
    %v598 = vrot.slane %v591, %v597
    %v599 = vcombine.low %v590, %v598
    %v601 = vunpack.c.l.s4 1934713408
    %v602 = vunpack.c.0.s8 %v601
    %v603 = vlaneseq
    %v604 = vshrl.u32 %v603, 7
    %v605 = vsub.s32 %v602, %v604
    %v606 = vrot.slane %v599, %v605
    %v607 = vcombine.high %v606, 0
    %v608 = vcombine.low %v521, %v528
    %v610 = vunpack.c.l.s4 1983009808
    %v611 = vunpack.c.0.s8 %v610
    %v612 = vlaneseq
    %v613 = vshrl.u32 %v612, 7
    %v614 = vsub.s32 %v611, %v613
    %v615 = vrot.slane %v608, %v614
    %v616 = vcombine.low %v531, %v532
    %v618 = vunpack.c.l.s4 1983009808
    %v619 = vunpack.c.0.s8 %v618
    %v620 = vlaneseq
    %v621 = vshrl.u32 %v620, 7
    %v622 = vsub.s32 %v619, %v621
    %v623 = vrot.slane %v616, %v622
    %v624 = vcombine.low %v615, %v623
    %v626 = vunpack.c.l.s4 1934713408
    %v627 = vunpack.c.0.s8 %v626
    %v628 = vlaneseq
    %v629 = vshrl.u32 %v628, 7
    %v630 = vsub.s32 %v627, %v629
    %v631 = vrot.slane %v624, %v630
    %v632 = vcombine.high %v631, 0
    %v635 = vpack.i.b16 %v581, %v556
    %v636 = vshrl.u32 %v556, 16
    %v637 = vshrl.u32 %v581, 16
    %v638 = vpack.i.b16 %v637, %v636
    %v641 = vpack.i.b16 %v582, %v557
    %v642 = vshrl.u32 %v557, 16
    %v643 = vshrl.u32 %v582, 16
    %v644 = vpack.i.b16 %v643, %v642
    %v647 = vpack.i.b16 %v631, %v606
    %v648 = vshrl.u32 %v606, 16
    %v649 = vshrl.u32 %v631, 16
    %v650 = vpack.i.b16 %v649, %v648
    %v653 = vpack.i.b16 %v632, %v607
    %v654 = vshrl.u32 %v607, 16
    %v655 = vshrl.u32 %v632, 16
    %v656 = vpack.i.b16 %v655, %v654
    %658 = vrot.lane.b32.xlu0 %v370, 96
    %v659 = vpop.permute.xlu0 %658
    %660 = vrot.lane.b32.xlu0 %v370, 64
    %v661 = vpop.permute.xlu0 %660
    %662 = vrot.lane.b32.xlu0 %v370, 32
    %v663 = vpop.permute.xlu0 %662
    %v666 = vpack.i.b16 %v659, %v370
    %v668 = vshrl.u32 %v370, 16
    %v669 = vshrl.u32 %v659, 16
    %v670 = vpack.i.b16 %v669, %v668
    %v674 = vpack.i.b16 %v663, %v661
    %v676 = vshrl.u32 %v661, 16
    %v677 = vshrl.u32 %v663, 16
    %v678 = vpack.i.b16 %v677, %v676
    %v680 = vcombine.high %v666, %v396
    %v682 = vunpack.c.l.s4 1983009808
    %v683 = vunpack.c.0.s8 %v682
    %v684 = vlaneseq
    %v685 = vshrl.u32 %v684, 7
    %v686 = vsub.s32 %v683, %v685
    %v687 = vrot.slane %v666, %v686
    %v689 = vunpack.c.l.s4 1983009808
    %v690 = vunpack.c.0.s8 %v689
    %v691 = vlaneseq
    %v692 = vshrl.u32 %v691, 7
    %v693 = vsub.s32 %v690, %v692
    %v694 = vrot.slane %v680, %v693
    %v695 = vcombine.high %v674, %v396
    %v697 = vunpack.c.l.s4 1983009808
    %v698 = vunpack.c.0.s8 %v697
    %v699 = vlaneseq
    %v700 = vshrl.u32 %v699, 7
    %v701 = vsub.s32 %v698, %v700
    %v702 = vrot.slane %v674, %v701
    %v704 = vunpack.c.l.s4 1983009808
    %v705 = vunpack.c.0.s8 %v704
    %v706 = vlaneseq
    %v707 = vshrl.u32 %v706, 7
    %v708 = vsub.s32 %v705, %v707
    %v709 = vrot.slane %v695, %v708
    %v710 = vcombine.low %v687, %v702
    %v711 = vcombine.high %v687, %v702
    %v713 = vunpack.c.l.s4 1934713408
    %v714 = vunpack.c.0.s8 %v713
    %v715 = vlaneseq
    %v716 = vshrl.u32 %v715, 7
    %v717 = vsub.s32 %v714, %v716
    %v718 = vrot.slane %v710, %v717
    %v720 = vunpack.c.l.s4 1934713408
    %v721 = vunpack.c.0.s8 %v720
    %v722 = vlaneseq
    %v723 = vshrl.u32 %v722, 7
    %v724 = vsub.s32 %v721, %v723
    %v725 = vrot.slane %v711, %v724
    %v726 = vcombine.low %v694, %v709
    %v727 = vcombine.high %v694, %v709
    %v729 = vunpack.c.l.s4 1934713408
    %v730 = vunpack.c.0.s8 %v729
    %v731 = vlaneseq
    %v732 = vshrl.u32 %v731, 7
    %v733 = vsub.s32 %v730, %v732
    %v734 = vrot.slane %v726, %v733
    %v736 = vunpack.c.l.s4 1934713408
    %v737 = vunpack.c.0.s8 %v736
    %v738 = vlaneseq
    %v739 = vshrl.u32 %v738, 7
    %v740 = vsub.s32 %v737, %v739
    %v741 = vrot.slane %v727, %v740
    %v742 = vcombine.high %v718, 0
    %v743 = vcombine.high %v725, 0
    %v744 = vcombine.high %v734, 0
    %v745 = vcombine.high %v741, 0
    %v746 = vcombine.high %v670, %v399
    %v748 = vunpack.c.l.s4 1983009808
    %v749 = vunpack.c.0.s8 %v748
    %v750 = vlaneseq
    %v751 = vshrl.u32 %v750, 7
    %v752 = vsub.s32 %v749, %v751
    %v753 = vrot.slane %v670, %v752
    %v755 = vunpack.c.l.s4 1983009808
    %v756 = vunpack.c.0.s8 %v755
    %v757 = vlaneseq
    %v758 = vshrl.u32 %v757, 7
    %v759 = vsub.s32 %v756, %v758
    %v760 = vrot.slane %v746, %v759
    %v761 = vcombine.high %v678, %v399
    %v763 = vunpack.c.l.s4 1983009808
    %v764 = vunpack.c.0.s8 %v763
    %v765 = vlaneseq
    %v766 = vshrl.u32 %v765, 7
    %v767 = vsub.s32 %v764, %v766
    %v768 = vrot.slane %v678, %v767
    %v770 = vunpack.c.l.s4 1983009808
    %v771 = vunpack.c.0.s8 %v770
    %v772 = vlaneseq
    %v773 = vshrl.u32 %v772, 7
    %v774 = vsub.s32 %v771, %v773
    %v775 = vrot.slane %v761, %v774
    %v776 = vcombine.low %v753, %v768
    %v777 = vcombine.high %v753, %v768
    %v779 = vunpack.c.l.s4 1934713408
    %v780 = vunpack.c.0.s8 %v779
    %v781 = vlaneseq
    %v782 = vshrl.u32 %v781, 7
    %v783 = vsub.s32 %v780, %v782
    %v784 = vrot.slane %v776, %v783
    %v786 = vunpack.c.l.s4 1934713408
    %v787 = vunpack.c.0.s8 %v786
    %v788 = vlaneseq
    %v789 = vshrl.u32 %v788, 7
    %v790 = vsub.s32 %v787, %v789
    %v791 = vrot.slane %v777, %v790
    %v792 = vcombine.low %v760, %v775
    %v793 = vcombine.high %v760, %v775
    %v795 = vunpack.c.l.s4 1934713408
    %v796 = vunpack.c.0.s8 %v795
    %v797 = vlaneseq
    %v798 = vshrl.u32 %v797, 7
    %v799 = vsub.s32 %v796, %v798
    %v800 = vrot.slane %v792, %v799
    %v802 = vunpack.c.l.s4 1934713408
    %v803 = vunpack.c.0.s8 %v802
    %v804 = vlaneseq
    %v805 = vshrl.u32 %v804, 7
    %v806 = vsub.s32 %v803, %v805
    %v807 = vrot.slane %v793, %v806
    %v808 = vcombine.high %v784, 0
    %v809 = vcombine.high %v791, 0
    %v810 = vcombine.high %v800, 0
    %v811 = vcombine.high %v807, 0
    %v812 = vcombine.low %v718, %v725
    %v814 = vunpack.c.l.s4 1983009808
    %v815 = vunpack.c.0.s8 %v814
    %v816 = vlaneseq
    %v817 = vshrl.u32 %v816, 7
    %v818 = vsub.s32 %v815, %v817
    %v819 = vrot.slane %v812, %v818
    %v820 = vcombine.low %v742, %v743
    %v822 = vunpack.c.l.s4 1983009808
    %v823 = vunpack.c.0.s8 %v822
    %v824 = vlaneseq
    %v825 = vshrl.u32 %v824, 7
    %v826 = vsub.s32 %v823, %v825
    %v827 = vrot.slane %v820, %v826
    %v828 = vcombine.low %v819, %v827
    %v830 = vunpack.c.l.s4 1934713408
    %v831 = vunpack.c.0.s8 %v830
    %v832 = vlaneseq
    %v833 = vshrl.u32 %v832, 7
    %v834 = vsub.s32 %v831, %v833
    %v835 = vrot.slane %v828, %v834
    %v836 = vcombine.high %v835, 0
    %v837 = vcombine.low %v784, %v791
    %v839 = vunpack.c.l.s4 1983009808
    %v840 = vunpack.c.0.s8 %v839
    %v841 = vlaneseq
    %v842 = vshrl.u32 %v841, 7
    %v843 = vsub.s32 %v840, %v842
    %v844 = vrot.slane %v837, %v843
    %v845 = vcombine.low %v808, %v809
    %v847 = vunpack.c.l.s4 1983009808
    %v848 = vunpack.c.0.s8 %v847
    %v849 = vlaneseq
    %v850 = vshrl.u32 %v849, 7
    %v851 = vsub.s32 %v848, %v850
    %v852 = vrot.slane %v845, %v851
    %v853 = vcombine.low %v844, %v852
    %v855 = vunpack.c.l.s4 1934713408
    %v856 = vunpack.c.0.s8 %v855
    %v857 = vlaneseq
    %v858 = vshrl.u32 %v857, 7
    %v859 = vsub.s32 %v856, %v858
    %v860 = vrot.slane %v853, %v859
    %v861 = vcombine.high %v860, 0
    %v862 = vcombine.low %v734, %v741
    %v864 = vunpack.c.l.s4 1983009808
    %v865 = vunpack.c.0.s8 %v864
    %v866 = vlaneseq
    %v867 = vshrl.u32 %v866, 7
    %v868 = vsub.s32 %v865, %v867
    %v869 = vrot.slane %v862, %v868
    %v870 = vcombine.low %v744, %v745
    %v872 = vunpack.c.l.s4 1983009808
    %v873 = vunpack.c.0.s8 %v872
    %v874 = vlaneseq
    %v875 = vshrl.u32 %v874, 7
    %v876 = vsub.s32 %v873, %v875
    %v877 = vrot.slane %v870, %v876
    %v878 = vcombine.low %v869, %v877
    %v880 = vunpack.c.l.s4 1934713408
    %v881 = vunpack.c.0.s8 %v880
    %v882 = vlaneseq
    %v883 = vshrl.u32 %v882, 7
    %v884 = vsub.s32 %v881, %v883
    %v885 = vrot.slane %v878, %v884
    %v886 = vcombine.high %v885, 0
    %v887 = vcombine.low %v800, %v807
    %v889 = vunpack.c.l.s4 1983009808
    %v890 = vunpack.c.0.s8 %v889
    %v891 = vlaneseq
    %v892 = vshrl.u32 %v891, 7
    %v893 = vsub.s32 %v890, %v892
    %v894 = vrot.slane %v887, %v893
    %v895 = vcombine.low %v810, %v811
    %v897 = vunpack.c.l.s4 1983009808
    %v898 = vunpack.c.0.s8 %v897
    %v899 = vlaneseq
    %v900 = vshrl.u32 %v899, 7
    %v901 = vsub.s32 %v898, %v900
    %v902 = vrot.slane %v895, %v901
    %v903 = vcombine.low %v894, %v902
    %v905 = vunpack.c.l.s4 1934713408
    %v906 = vunpack.c.0.s8 %v905
    %v907 = vlaneseq
    %v908 = vshrl.u32 %v907, 7
    %v909 = vsub.s32 %v906, %v908
    %v910 = vrot.slane %v903, %v909
    %v911 = vcombine.high %v910, 0
    %v914 = vpack.i.b16 %v860, %v835
    %v915 = vshrl.u32 %v835, 16
    %v916 = vshrl.u32 %v860, 16
    %v917 = vpack.i.b16 %v916, %v915
    %v920 = vpack.i.b16 %v861, %v836
    %v921 = vshrl.u32 %v836, 16
    %v922 = vshrl.u32 %v861, 16
    %v923 = vpack.i.b16 %v922, %v921
    %v926 = vpack.i.b16 %v910, %v885
    %v927 = vshrl.u32 %v885, 16
    %v928 = vshrl.u32 %v910, 16
    %v929 = vpack.i.b16 %v928, %v927
    %v932 = vpack.i.b16 %v911, %v886
    %v933 = vshrl.u32 %v886, 16
    %v934 = vshrl.u32 %v911, 16
    %v935 = vpack.i.b16 %v934, %v933
    %937 = vrot.lane.b32.xlu0 %v371, 96
    %v938 = vpop.permute.xlu0 %937
    %939 = vrot.lane.b32.xlu0 %v371, 64
    %v940 = vpop.permute.xlu0 %939
    %941 = vrot.lane.b32.xlu0 %v371, 32
    %v942 = vpop.permute.xlu0 %941
    %v945 = vpack.i.b16 %v938, %v371
    %v947 = vshrl.u32 %v371, 16
    %v948 = vshrl.u32 %v938, 16
    %v949 = vpack.i.b16 %v948, %v947
    %v953 = vpack.i.b16 %v942, %v940
    %v955 = vshrl.u32 %v940, 16
    %v956 = vshrl.u32 %v942, 16
    %v957 = vpack.i.b16 %v956, %v955
    %v959 = vcombine.high %v945, %v396
    %v961 = vunpack.c.l.s4 1983009808
    %v962 = vunpack.c.0.s8 %v961
    %v963 = vlaneseq
    %v964 = vshrl.u32 %v963, 7
    %v965 = vsub.s32 %v962, %v964
    %v966 = vrot.slane %v945, %v965
    %v968 = vunpack.c.l.s4 1983009808
    %v969 = vunpack.c.0.s8 %v968
    %v970 = vlaneseq
    %v971 = vshrl.u32 %v970, 7
    %v972 = vsub.s32 %v969, %v971
    %v973 = vrot.slane %v959, %v972
    %v974 = vcombine.high %v953, %v396
    %v976 = vunpack.c.l.s4 1983009808
    %v977 = vunpack.c.0.s8 %v976
    %v978 = vlaneseq
    %v979 = vshrl.u32 %v978, 7
    %v980 = vsub.s32 %v977, %v979
    %v981 = vrot.slane %v953, %v980
    %v983 = vunpack.c.l.s4 1983009808
    %v984 = vunpack.c.0.s8 %v983
    %v985 = vlaneseq
    %v986 = vshrl.u32 %v985, 7
    %v987 = vsub.s32 %v984, %v986
    %v988 = vrot.slane %v974, %v987
    %v989 = vcombine.low %v966, %v981
    %v990 = vcombine.high %v966, %v981
    %v992 = vunpack.c.l.s4 1934713408
    %v993 = vunpack.c.0.s8 %v992
    %v994 = vlaneseq
    %v995 = vshrl.u32 %v994, 7
    %v996 = vsub.s32 %v993, %v995
    %v997 = vrot.slane %v989, %v996
    %v999 = vunpack.c.l.s4 1934713408
    %v1000 = vunpack.c.0.s8 %v999
    %v1001 = vlaneseq
    %v1002 = vshrl.u32 %v1001, 7
    %v1003 = vsub.s32 %v1000, %v1002
    %v1004 = vrot.slane %v990, %v1003
    %v1005 = vcombine.low %v973, %v988
    %v1006 = vcombine.high %v973, %v988
    %v1008 = vunpack.c.l.s4 1934713408
    %v1009 = vunpack.c.0.s8 %v1008
    %v1010 = vlaneseq
    %v1011 = vshrl.u32 %v1010, 7
    %v1012 = vsub.s32 %v1009, %v1011
    %v1013 = vrot.slane %v1005, %v1012
    %v1015 = vunpack.c.l.s4 1934713408
    %v1016 = vunpack.c.0.s8 %v1015
    %v1017 = vlaneseq
    %v1018 = vshrl.u32 %v1017, 7
    %v1019 = vsub.s32 %v1016, %v1018
    %v1020 = vrot.slane %v1006, %v1019
    %v1021 = vcombine.high %v997, 0
    %v1022 = vcombine.high %v1004, 0
    %v1023 = vcombine.high %v1013, 0
    %v1024 = vcombine.high %v1020, 0
    %v1025 = vcombine.high %v949, %v399
    %v1027 = vunpack.c.l.s4 1983009808
    %v1028 = vunpack.c.0.s8 %v1027
    %v1029 = vlaneseq
    %v1030 = vshrl.u32 %v1029, 7
    %v1031 = vsub.s32 %v1028, %v1030
    %v1032 = vrot.slane %v949, %v1031
    %v1034 = vunpack.c.l.s4 1983009808
    %v1035 = vunpack.c.0.s8 %v1034
    %v1036 = vlaneseq
    %v1037 = vshrl.u32 %v1036, 7
    %v1038 = vsub.s32 %v1035, %v1037
    %v1039 = vrot.slane %v1025, %v1038
    %v1040 = vcombine.high %v957, %v399
    %v1042 = vunpack.c.l.s4 1983009808
    %v1043 = vunpack.c.0.s8 %v1042
    %v1044 = vlaneseq
    %v1045 = vshrl.u32 %v1044, 7
    %v1046 = vsub.s32 %v1043, %v1045
    %v1047 = vrot.slane %v957, %v1046
    %v1049 = vunpack.c.l.s4 1983009808
    %v1050 = vunpack.c.0.s8 %v1049
    %v1051 = vlaneseq
    %v1052 = vshrl.u32 %v1051, 7
    %v1053 = vsub.s32 %v1050, %v1052
    %v1054 = vrot.slane %v1040, %v1053
    %v1055 = vcombine.low %v1032, %v1047
    %v1056 = vcombine.high %v1032, %v1047
    %v1058 = vunpack.c.l.s4 1934713408
    %v1059 = vunpack.c.0.s8 %v1058
    %v1060 = vlaneseq
    %v1061 = vshrl.u32 %v1060, 7
    %v1062 = vsub.s32 %v1059, %v1061
    %v1063 = vrot.slane %v1055, %v1062
    %v1065 = vunpack.c.l.s4 1934713408
    %v1066 = vunpack.c.0.s8 %v1065
    %v1067 = vlaneseq
    %v1068 = vshrl.u32 %v1067, 7
    %v1069 = vsub.s32 %v1066, %v1068
    %v1070 = vrot.slane %v1056, %v1069
    %v1071 = vcombine.low %v1039, %v1054
    %v1072 = vcombine.high %v1039, %v1054
    %v1074 = vunpack.c.l.s4 1934713408
    %v1075 = vunpack.c.0.s8 %v1074
    %v1076 = vlaneseq
    %v1077 = vshrl.u32 %v1076, 7
    %v1078 = vsub.s32 %v1075, %v1077
    %v1079 = vrot.slane %v1071, %v1078
    %v1081 = vunpack.c.l.s4 1934713408
    %v1082 = vunpack.c.0.s8 %v1081
    %v1083 = vlaneseq
    %v1084 = vshrl.u32 %v1083, 7
    %v1085 = vsub.s32 %v1082, %v1084
    %v1086 = vrot.slane %v1072, %v1085
    %v1087 = vcombine.high %v1063, 0
    %v1088 = vcombine.high %v1070, 0
    %v1089 = vcombine.high %v1079, 0
    %v1090 = vcombine.high %v1086, 0
    %v1091 = vcombine.low %v997, %v1004
    %v1093 = vunpack.c.l.s4 1983009808
    %v1094 = vunpack.c.0.s8 %v1093
    %v1095 = vlaneseq
    %v1096 = vshrl.u32 %v1095, 7
    %v1097 = vsub.s32 %v1094, %v1096
    %v1098 = vrot.slane %v1091, %v1097
    %v1099 = vcombine.low %v1021, %v1022
    %v1101 = vunpack.c.l.s4 1983009808
    %v1102 = vunpack.c.0.s8 %v1101
    %v1103 = vlaneseq
    %v1104 = vshrl.u32 %v1103, 7
    %v1105 = vsub.s32 %v1102, %v1104
    %v1106 = vrot.slane %v1099, %v1105
    %v1107 = vcombine.low %v1098, %v1106
    %v1109 = vunpack.c.l.s4 1934713408
    %v1110 = vunpack.c.0.s8 %v1109
    %v1111 = vlaneseq
    %v1112 = vshrl.u32 %v1111, 7
    %v1113 = vsub.s32 %v1110, %v1112
    %v1114 = vrot.slane %v1107, %v1113
    %v1115 = vcombine.high %v1114, 0
    %v1116 = vcombine.low %v1063, %v1070
    %v1118 = vunpack.c.l.s4 1983009808
    %v1119 = vunpack.c.0.s8 %v1118
    %v1120 = vlaneseq
    %v1121 = vshrl.u32 %v1120, 7
    %v1122 = vsub.s32 %v1119, %v1121
    %v1123 = vrot.slane %v1116, %v1122
    %v1124 = vcombine.low %v1087, %v1088
    %v1126 = vunpack.c.l.s4 1983009808
    %v1127 = vunpack.c.0.s8 %v1126
    %v1128 = vlaneseq
    %v1129 = vshrl.u32 %v1128, 7
    %v1130 = vsub.s32 %v1127, %v1129
    %v1131 = vrot.slane %v1124, %v1130
    %v1132 = vcombine.low %v1123, %v1131
    %v1134 = vunpack.c.l.s4 1934713408
    %v1135 = vunpack.c.0.s8 %v1134
    %v1136 = vlaneseq
    %v1137 = vshrl.u32 %v1136, 7
    %v1138 = vsub.s32 %v1135, %v1137
    %v1139 = vrot.slane %v1132, %v1138
    %v1140 = vcombine.high %v1139, 0
    %v1141 = vcombine.low %v1013, %v1020
    %v1143 = vunpack.c.l.s4 1983009808
    %v1144 = vunpack.c.0.s8 %v1143
    %v1145 = vlaneseq
    %v1146 = vshrl.u32 %v1145, 7
    %v1147 = vsub.s32 %v1144, %v1146
    %v1148 = vrot.slane %v1141, %v1147
    %v1149 = vcombine.low %v1023, %v1024
    %v1151 = vunpack.c.l.s4 1983009808
    %v1152 = vunpack.c.0.s8 %v1151
    %v1153 = vlaneseq
    %v1154 = vshrl.u32 %v1153, 7
    %v1155 = vsub.s32 %v1152, %v1154
    %v1156 = vrot.slane %v1149, %v1155
    %v1157 = vcombine.low %v1148, %v1156
    %v1159 = vunpack.c.l.s4 1934713408
    %v1160 = vunpack.c.0.s8 %v1159
    %v1161 = vlaneseq
    %v1162 = vshrl.u32 %v1161, 7
    %v1163 = vsub.s32 %v1160, %v1162
    %v1164 = vrot.slane %v1157, %v1163
    %v1165 = vcombine.high %v1164, 0
    %v1166 = vcombine.low %v1079, %v1086
    %v1168 = vunpack.c.l.s4 1983009808
    %v1169 = vunpack.c.0.s8 %v1168
    %v1170 = vlaneseq
    %v1171 = vshrl.u32 %v1170, 7
    %v1172 = vsub.s32 %v1169, %v1171
    %v1173 = vrot.slane %v1166, %v1172
    %v1174 = vcombine.low %v1089, %v1090
    %v1176 = vunpack.c.l.s4 1983009808
    %v1177 = vunpack.c.0.s8 %v1176
    %v1178 = vlaneseq
    %v1179 = vshrl.u32 %v1178, 7
    %v1180 = vsub.s32 %v1177, %v1179
    %v1181 = vrot.slane %v1174, %v1180
    %v1182 = vcombine.low %v1173, %v1181
    %v1184 = vunpack.c.l.s4 1934713408
    %v1185 = vunpack.c.0.s8 %v1184
    %v1186 = vlaneseq
    %v1187 = vshrl.u32 %v1186, 7
    %v1188 = vsub.s32 %v1185, %v1187
    %v1189 = vrot.slane %v1182, %v1188
    %v1190 = vcombine.high %v1189, 0
    %v1193 = vpack.i.b16 %v1139, %v1114
    %v1194 = vshrl.u32 %v1114, 16
    %v1195 = vshrl.u32 %v1139, 16
    %v1196 = vpack.i.b16 %v1195, %v1194
    %v1199 = vpack.i.b16 %v1140, %v1115
    %v1200 = vshrl.u32 %v1115, 16
    %v1201 = vshrl.u32 %v1140, 16
    %v1202 = vpack.i.b16 %v1201, %v1200
    %v1205 = vpack.i.b16 %v1189, %v1164
    %v1206 = vshrl.u32 %v1164, 16
    %v1207 = vshrl.u32 %v1189, 16
    %v1208 = vpack.i.b16 %v1207, %v1206
    %v1211 = vpack.i.b16 %v1190, %v1165
    %v1212 = vshrl.u32 %v1165, 16
    %v1213 = vshrl.u32 %v1190, 16
    %v1214 = vpack.i.b16 %v1213, %v1212
    %v1215 = vlaneseq
    %v1216 = vshrl.u32 %v1215, 7
    %v1217 = vlaneseq
    %v1218 = vand.u32 %v1217, 127
    %vm1219 = vcmp.ge.s32.totalorder %v1216, %v1218
    %v1220 = vsel %vm1219, 0.0, -10000.0
    %v1221 = vld [vmem:[%s1] sm:$0x1]
    %v1222 = vld [vmem:[%s1 + $0x1] sm:$0x1]
    %v1223 = vsub.f32 1.0, %v1221
    %v1224 = vsub.f32 1.0, %v1222
    %v1225 = vmul.f32 %v1223, -10000.0
    %v1226 = vmul.f32 %v1224, -10000.0
    %vm1227 = vcmask 261120
    %v1229 = vsel %vm1227, %v635, 0
    %v1232 = vsel %vm1227, %v914, 0
    %1234 = vmatprep.subr.bf16.mxu0 0
    %1235 = vmatpush1.bf16.xpose.msra.mxu0 %v1232
    %1236 = vmatprep.subr.bf16.mxu0 0
    %1237 = vmatpush1.bf16.xpose.msra.mxu0 0
    %1238 = vmatprep.subr.bf16.mxu0 0
    %1239 = vmatpush1.bf16.xpose.msra.mxu0 0
    %1240 = vmatprep.subr.bf16.mxu0 0
    %1241 = vmatpush1.bf16.xpose.msra.mxu0 0
    %1242 = vmatprep.subr.bf16.mxu0 0
    %1243 = vmatpush1.bf16.xpose.msra.mxu0 0
    %1244 = vmatprep.subr.bf16.mxu0 0
    %1245 = vmatpush1.bf16.xpose.msra.mxu0 0
    %1246 = vmatprep.subr.bf16.mxu0 0
    %1247 = vmatpush1.bf16.xpose.msra.mxu0 0
    %1248 = vmatprep.subr.bf16.mxu0 0
    %1249 = vmatpush1.bf16.xpose.msra.mxu0 0
    %1250 = vmatprep.subr.bf16.mxu0 0
    %1251 = vmatpush1.bf16.xpose.msra.mxu0 0
    %1252 = vmatprep.subr.bf16.mxu0 0
    %1253 = vmatpush1.bf16.xpose.msra.mxu0 0
    %1254 = vmatprep.subr.bf16.mxu0 0
    %1255 = vmatpush1.bf16.xpose.msra.mxu0 0
    %1256 = vmatprep.subr.bf16.mxu0 0
    %1257 = vmatpush1.bf16.xpose.msra.mxu0 0
    %1258 = vmatprep.subr.bf16.mxu0 0
    %1259 = vmatpush1.bf16.xpose.msra.mxu0 0
    %1260 = vmatprep.subr.bf16.mxu0 0
    %1261 = vmatpush1.bf16.xpose.msra.mxu0 0
    %1262 = vmatprep.subr.bf16.mxu0 0
    %1263 = vmatpush1.bf16.xpose.msra.mxu0 0
    %1264 = vmatprep.subr.bf16.mxu0 0
    %1265 = vmatpush1.bf16.xpose.msra.mxu0 0
    %1266 = vmatprep.mubr.bf16.mxu0 0
    %1267 = vmatmul.mubr.bf16.gmra.mrb[0].mxu0 %v1229
    %v1268 = vpop.f32.mrb[0].mxu0
    %v1269 = vadd.f32 0.0, %v1268
    %v1270 = vpop.f32.mrb[0].mxu0
    %v1271 = vpop.f32.mrb[0].mxu0
    %v1272 = vpop.f32.mrb[0].mxu0
    %1273 = vdwg.mxu0
    %v1275 = vsel %vm1227, %v638, 0
    %v1278 = vsel %vm1227, %v917, 0
    %1280 = vmatprep.subr.bf16.mxu0 0
    %1281 = vmatpush1.bf16.xpose.msra.mxu0 %v1278
    %1282 = vmatprep.subr.bf16.mxu0 0
    %1283 = vmatpush1.bf16.xpose.msra.mxu0 0
    %1284 = vmatprep.subr.bf16.mxu0 0
    %1285 = vmatpush1.bf16.xpose.msra.mxu0 0
    %1286 = vmatprep.subr.bf16.mxu0 0
    %1287 = vmatpush1.bf16.xpose.msra.mxu0 0
    %1288 = vmatprep.subr.bf16.mxu0 0
    %1289 = vmatpush1.bf16.xpose.msra.mxu0 0
    %1290 = vmatprep.subr.bf16.mxu0 0
    %1291 = vmatpush1.bf16.xpose.msra.mxu0 0
    %1292 = vmatprep.subr.bf16.mxu0 0
    %1293 = vmatpush1.bf16.xpose.msra.mxu0 0
    %1294 = vmatprep.subr.bf16.mxu0 0
    %1295 = vmatpush1.bf16.xpose.msra.mxu0 0
    %1296 = vmatprep.subr.bf16.mxu0 0
    %1297 = vmatpush1.bf16.xpose.msra.mxu0 0
    %1298 = vmatprep.subr.bf16.mxu0 0
    %1299 = vmatpush1.bf16.xpose.msra.mxu0 0
    %1300 = vmatprep.subr.bf16.mxu0 0
    %1301 = vmatpush1.bf16.xpose.msra.mxu0 0
    %1302 = vmatprep.subr.bf16.mxu0 0
    %1303 = vmatpush1.bf16.xpose.msra.mxu0 0
    %1304 = vmatprep.subr.bf16.mxu0 0
    %1305 = vmatpush1.bf16.xpose.msra.mxu0 0
    %1306 = vmatprep.subr.bf16.mxu0 0
    %1307 = vmatpush1.bf16.xpose.msra.mxu0 0
    %1308 = vmatprep.subr.bf16.mxu0 0
    %1309 = vmatpush1.bf16.xpose.msra.mxu0 0
    %1310 = vmatprep.subr.bf16.mxu0 0
    %1311 = vmatpush1.bf16.xpose.msra.mxu0 0
    %1312 = vmatprep.mubr.bf16.mxu0 0
    %1313 = vmatmul.mubr.bf16.gmra.mrb[0].mxu0 %v1275
    %v1314 = vpop.f32.mrb[0].mxu0
    %v1315 = vadd.f32 0.0, %v1314
    %v1316 = vpop.f32.mrb[0].mxu0
    %v1317 = vpop.f32.mrb[0].mxu0
    %v1318 = vpop.f32.mrb[0].mxu0
    %1319 = vdwg.mxu0
    %v1321 = vsel %vm1227, %v641, 0
    %v1324 = vsel %vm1227, %v920, 0
    %1326 = vmatprep.subr.bf16.mxu0 0
    %1327 = vmatpush1.bf16.xpose.msra.mxu0 %v1324
    %1328 = vmatprep.subr.bf16.mxu0 0
    %1329 = vmatpush1.bf16.xpose.msra.mxu0 0
    %1330 = vmatprep.subr.bf16.mxu0 0
    %1331 = vmatpush1.bf16.xpose.msra.mxu0 0
    %1332 = vmatprep.subr.bf16.mxu0 0
    %1333 = vmatpush1.bf16.xpose.msra.mxu0 0
    %1334 = vmatprep.subr.bf16.mxu0 0
    %1335 = vmatpush1.bf16.xpose.msra.mxu0 0
    %1336 = vmatprep.subr.bf16.mxu0 0
    %1337 = vmatpush1.bf16.xpose.msra.mxu0 0
    %1338 = vmatprep.subr.bf16.mxu0 0
    %1339 = vmatpush1.bf16.xpose.msra.mxu0 0
    %1340 = vmatprep.subr.bf16.mxu0 0
    %1341 = vmatpush1.bf16.xpose.msra.mxu0 0
    %1342 = vmatprep.subr.bf16.mxu0 0
    %1343 = vmatpush1.bf16.xpose.msra.mxu0 0
    %1344 = vmatprep.subr.bf16.mxu0 0
    %1345 = vmatpush1.bf16.xpose.msra.mxu0 0
    %1346 = vmatprep.subr.bf16.mxu0 0
    %1347 = vmatpush1.bf16.xpose.msra.mxu0 0
    %1348 = vmatprep.subr.bf16.mxu0 0
    %1349 = vmatpush1.bf16.xpose.msra.mxu0 0
    %1350 = vmatprep.subr.bf16.mxu0 0
    %1351 = vmatpush1.bf16.xpose.msra.mxu0 0
    %1352 = vmatprep.subr.bf16.mxu0 0
    %1353 = vmatpush1.bf16.xpose.msra.mxu0 0
    %1354 = vmatprep.subr.bf16.mxu0 0
    %1355 = vmatpush1.bf16.xpose.msra.mxu0 0
    %1356 = vmatprep.subr.bf16.mxu0 0
    %1357 = vmatpush1.bf16.xpose.msra.mxu0 0
    %1358 = vmatprep.mubr.bf16.mxu0 0
    %1359 = vmatmul.mubr.bf16.gmra.mrb[0].mxu0 %v1321
    %v1360 = vpop.f32.mrb[0].mxu0
    %v1361 = vadd.f32 0.0, %v1360
    %v1362 = vpop.f32.mrb[0].mxu0
    %v1363 = vpop.f32.mrb[0].mxu0
    %v1364 = vpop.f32.mrb[0].mxu0
    %1365 = vdwg.mxu0
    %v1367 = vsel %vm1227, %v644, 0
    %v1370 = vsel %vm1227, %v923, 0
    %1372 = vmatprep.subr.bf16.mxu0 0
    %1373 = vmatpush1.bf16.xpose.msra.mxu0 %v1370
    %1374 = vmatprep.subr.bf16.mxu0 0
    %1375 = vmatpush1.bf16.xpose.msra.mxu0 0
    %1376 = vmatprep.subr.bf16.mxu0 0
    %1377 = vmatpush1.bf16.xpose.msra.mxu0 0
    %1378 = vmatprep.subr.bf16.mxu0 0
    %1379 = vmatpush1.bf16.xpose.msra.mxu0 0
    %1380 = vmatprep.subr.bf16.mxu0 0
    %1381 = vmatpush1.bf16.xpose.msra.mxu0 0
    %1382 = vmatprep.subr.bf16.mxu0 0
    %1383 = vmatpush1.bf16.xpose.msra.mxu0 0
    %1384 = vmatprep.subr.bf16.mxu0 0
    %1385 = vmatpush1.bf16.xpose.msra.mxu0 0
    %1386 = vmatprep.subr.bf16.mxu0 0
    %1387 = vmatpush1.bf16.xpose.msra.mxu0 0
    %1388 = vmatprep.subr.bf16.mxu0 0
    %1389 = vmatpush1.bf16.xpose.msra.mxu0 0
    %1390 = vmatprep.subr.bf16.mxu0 0
    %1391 = vmatpush1.bf16.xpose.msra.mxu0 0
    %1392 = vmatprep.subr.bf16.mxu0 0
    %1393 = vmatpush1.bf16.xpose.msra.mxu0 0
    %1394 = vmatprep.subr.bf16.mxu0 0
    %1395 = vmatpush1.bf16.xpose.msra.mxu0 0
    %1396 = vmatprep.subr.bf16.mxu0 0
    %1397 = vmatpush1.bf16.xpose.msra.mxu0 0
    %1398 = vmatprep.subr.bf16.mxu0 0
    %1399 = vmatpush1.bf16.xpose.msra.mxu0 0
    %1400 = vmatprep.subr.bf16.mxu0 0
    %1401 = vmatpush1.bf16.xpose.msra.mxu0 0
    %1402 = vmatprep.subr.bf16.mxu0 0
    %1403 = vmatpush1.bf16.xpose.msra.mxu0 0
    %1404 = vmatprep.mubr.bf16.mxu0 0
    %1405 = vmatmul.mubr.bf16.gmra.mrb[0].mxu0 %v1367
    %v1406 = vpop.f32.mrb[0].mxu0
    %v1407 = vadd.f32 0.0, %v1406
    %v1408 = vpop.f32.mrb[0].mxu0
    %v1409 = vpop.f32.mrb[0].mxu0
    %v1410 = vpop.f32.mrb[0].mxu0
    %1411 = vdwg.mxu0
    %v1413 = vsel %vm1227, %v647, 0
    %v1416 = vsel %vm1227, %v926, 0
    %1418 = vmatprep.subr.bf16.mxu0 0
    %1419 = vmatpush1.bf16.xpose.msra.mxu0 %v1416
    %1420 = vmatprep.subr.bf16.mxu0 0
    %1421 = vmatpush1.bf16.xpose.msra.mxu0 0
    %1422 = vmatprep.subr.bf16.mxu0 0
    %1423 = vmatpush1.bf16.xpose.msra.mxu0 0
    %1424 = vmatprep.subr.bf16.mxu0 0
    %1425 = vmatpush1.bf16.xpose.msra.mxu0 0
    %1426 = vmatprep.subr.bf16.mxu0 0
    %1427 = vmatpush1.bf16.xpose.msra.mxu0 0
    %1428 = vmatprep.subr.bf16.mxu0 0
    %1429 = vmatpush1.bf16.xpose.msra.mxu0 0
    %1430 = vmatprep.subr.bf16.mxu0 0
    %1431 = vmatpush1.bf16.xpose.msra.mxu0 0
    %1432 = vmatprep.subr.bf16.mxu0 0
    %1433 = vmatpush1.bf16.xpose.msra.mxu0 0
    %1434 = vmatprep.subr.bf16.mxu0 0
    %1435 = vmatpush1.bf16.xpose.msra.mxu0 0
    %1436 = vmatprep.subr.bf16.mxu0 0
    %1437 = vmatpush1.bf16.xpose.msra.mxu0 0
    %1438 = vmatprep.subr.bf16.mxu0 0
    %1439 = vmatpush1.bf16.xpose.msra.mxu0 0
    %1440 = vmatprep.subr.bf16.mxu0 0
    %1441 = vmatpush1.bf16.xpose.msra.mxu0 0
    %1442 = vmatprep.subr.bf16.mxu0 0
    %1443 = vmatpush1.bf16.xpose.msra.mxu0 0
    %1444 = vmatprep.subr.bf16.mxu0 0
    %1445 = vmatpush1.bf16.xpose.msra.mxu0 0
    %1446 = vmatprep.subr.bf16.mxu0 0
    %1447 = vmatpush1.bf16.xpose.msra.mxu0 0
    %1448 = vmatprep.subr.bf16.mxu0 0
    %1449 = vmatpush1.bf16.xpose.msra.mxu0 0
    %1450 = vmatprep.mubr.bf16.mxu0 0
    %1451 = vmatmul.mubr.bf16.gmra.mrb[0].mxu0 %v1413
    %v1452 = vpop.f32.mrb[0].mxu0
    %v1453 = vadd.f32 0.0, %v1452
    %v1454 = vpop.f32.mrb[0].mxu0
    %v1455 = vpop.f32.mrb[0].mxu0
    %v1456 = vpop.f32.mrb[0].mxu0
    %1457 = vdwg.mxu0
    %v1459 = vsel %vm1227, %v650, 0
    %v1462 = vsel %vm1227, %v929, 0
    %1464 = vmatprep.subr.bf16.mxu0 0
    %1465 = vmatpush1.bf16.xpose.msra.mxu0 %v1462
    %1466 = vmatprep.subr.bf16.mxu0 0
    %1467 = vmatpush1.bf16.xpose.msra.mxu0 0
    %1468 = vmatprep.subr.bf16.mxu0 0
    %1469 = vmatpush1.bf16.xpose.msra.mxu0 0
    %1470 = vmatprep.subr.bf16.mxu0 0
    %1471 = vmatpush1.bf16.xpose.msra.mxu0 0
    %1472 = vmatprep.subr.bf16.mxu0 0
    %1473 = vmatpush1.bf16.xpose.msra.mxu0 0
    %1474 = vmatprep.subr.bf16.mxu0 0
    %1475 = vmatpush1.bf16.xpose.msra.mxu0 0
    %1476 = vmatprep.subr.bf16.mxu0 0
    %1477 = vmatpush1.bf16.xpose.msra.mxu0 0
    %1478 = vmatprep.subr.bf16.mxu0 0
    %1479 = vmatpush1.bf16.xpose.msra.mxu0 0
    %1480 = vmatprep.subr.bf16.mxu0 0
    %1481 = vmatpush1.bf16.xpose.msra.mxu0 0
    %1482 = vmatprep.subr.bf16.mxu0 0
    %1483 = vmatpush1.bf16.xpose.msra.mxu0 0
    %1484 = vmatprep.subr.bf16.mxu0 0
    %1485 = vmatpush1.bf16.xpose.msra.mxu0 0
    %1486 = vmatprep.subr.bf16.mxu0 0
    %1487 = vmatpush1.bf16.xpose.msra.mxu0 0
    %1488 = vmatprep.subr.bf16.mxu0 0
    %1489 = vmatpush1.bf16.xpose.msra.mxu0 0
    %1490 = vmatprep.subr.bf16.mxu0 0
    %1491 = vmatpush1.bf16.xpose.msra.mxu0 0
    %1492 = vmatprep.subr.bf16.mxu0 0
    %1493 = vmatpush1.bf16.xpose.msra.mxu0 0
    %1494 = vmatprep.subr.bf16.mxu0 0
    %1495 = vmatpush1.bf16.xpose.msra.mxu0 0
    %1496 = vmatprep.mubr.bf16.mxu0 0
    %1497 = vmatmul.mubr.bf16.gmra.mrb[0].mxu0 %v1459
    %v1498 = vpop.f32.mrb[0].mxu0
    %v1499 = vadd.f32 0.0, %v1498
    %v1500 = vpop.f32.mrb[0].mxu0
    %v1501 = vpop.f32.mrb[0].mxu0
    %v1502 = vpop.f32.mrb[0].mxu0
    %1503 = vdwg.mxu0
    %v1505 = vsel %vm1227, %v653, 0
    %v1508 = vsel %vm1227, %v932, 0
    %1510 = vmatprep.subr.bf16.mxu0 0
    %1511 = vmatpush1.bf16.xpose.msra.mxu0 %v1508
    %1512 = vmatprep.subr.bf16.mxu0 0
    %1513 = vmatpush1.bf16.xpose.msra.mxu0 0
    %1514 = vmatprep.subr.bf16.mxu0 0
    %1515 = vmatpush1.bf16.xpose.msra.mxu0 0
    %1516 = vmatprep.subr.bf16.mxu0 0
    %1517 = vmatpush1.bf16.xpose.msra.mxu0 0
    %1518 = vmatprep.subr.bf16.mxu0 0
    %1519 = vmatpush1.bf16.xpose.msra.mxu0 0
    %1520 = vmatprep.subr.bf16.mxu0 0
    %1521 = vmatpush1.bf16.xpose.msra.mxu0 0
    %1522 = vmatprep.subr.bf16.mxu0 0
    %1523 = vmatpush1.bf16.xpose.msra.mxu0 0
    %1524 = vmatprep.subr.bf16.mxu0 0
    %1525 = vmatpush1.bf16.xpose.msra.mxu0 0
    %1526 = vmatprep.subr.bf16.mxu0 0
    %1527 = vmatpush1.bf16.xpose.msra.mxu0 0
    %1528 = vmatprep.subr.bf16.mxu0 0
    %1529 = vmatpush1.bf16.xpose.msra.mxu0 0
    %1530 = vmatprep.subr.bf16.mxu0 0
    %1531 = vmatpush1.bf16.xpose.msra.mxu0 0
    %1532 = vmatprep.subr.bf16.mxu0 0
    %1533 = vmatpush1.bf16.xpose.msra.mxu0 0
    %1534 = vmatprep.subr.bf16.mxu0 0
    %1535 = vmatpush1.bf16.xpose.msra.mxu0 0
    %1536 = vmatprep.subr.bf16.mxu0 0
    %1537 = vmatpush1.bf16.xpose.msra.mxu0 0
    %1538 = vmatprep.subr.bf16.mxu0 0
    %1539 = vmatpush1.bf16.xpose.msra.mxu0 0
    %1540 = vmatprep.subr.bf16.mxu0 0
    %1541 = vmatpush1.bf16.xpose.msra.mxu0 0
    %1542 = vmatprep.mubr.bf16.mxu0 0
    %1543 = vmatmul.mubr.bf16.gmra.mrb[0].mxu0 %v1505
    %v1544 = vpop.f32.mrb[0].mxu0
    %v1545 = vadd.f32 0.0, %v1544
    %v1546 = vpop.f32.mrb[0].mxu0
    %v1547 = vpop.f32.mrb[0].mxu0
    %v1548 = vpop.f32.mrb[0].mxu0
    %1549 = vdwg.mxu0
    %v1551 = vsel %vm1227, %v656, 0
    %v1554 = vsel %vm1227, %v935, 0
    %1556 = vmatprep.subr.bf16.mxu0 0
    %1557 = vmatpush1.bf16.xpose.msra.mxu0 %v1554
    %1558 = vmatprep.subr.bf16.mxu0 0
    %1559 = vmatpush1.bf16.xpose.msra.mxu0 0
    %1560 = vmatprep.subr.bf16.mxu0 0
    %1561 = vmatpush1.bf16.xpose.msra.mxu0 0
    %1562 = vmatprep.subr.bf16.mxu0 0
    %1563 = vmatpush1.bf16.xpose.msra.mxu0 0
    %1564 = vmatprep.subr.bf16.mxu0 0
    %1565 = vmatpush1.bf16.xpose.msra.mxu0 0
    %1566 = vmatprep.subr.bf16.mxu0 0
    %1567 = vmatpush1.bf16.xpose.msra.mxu0 0
    %1568 = vmatprep.subr.bf16.mxu0 0
    %1569 = vmatpush1.bf16.xpose.msra.mxu0 0
    %1570 = vmatprep.subr.bf16.mxu0 0
    %1571 = vmatpush1.bf16.xpose.msra.mxu0 0
    %1572 = vmatprep.subr.bf16.mxu0 0
    %1573 = vmatpush1.bf16.xpose.msra.mxu0 0
    %1574 = vmatprep.subr.bf16.mxu0 0
    %1575 = vmatpush1.bf16.xpose.msra.mxu0 0
    %1576 = vmatprep.subr.bf16.mxu0 0
    %1577 = vmatpush1.bf16.xpose.msra.mxu0 0
    %1578 = vmatprep.subr.bf16.mxu0 0
    %1579 = vmatpush1.bf16.xpose.msra.mxu0 0
    %1580 = vmatprep.subr.bf16.mxu0 0
    %1581 = vmatpush1.bf16.xpose.msra.mxu0 0
    %1582 = vmatprep.subr.bf16.mxu0 0
    %1583 = vmatpush1.bf16.xpose.msra.mxu0 0
    %1584 = vmatprep.subr.bf16.mxu0 0
    %1585 = vmatpush1.bf16.xpose.msra.mxu0 0
    %1586 = vmatprep.subr.bf16.mxu0 0
    %1587 = vmatpush1.bf16.xpose.msra.mxu0 0
    %1588 = vmatprep.mubr.bf16.mxu0 0
    %1589 = vmatmul.mubr.bf16.gmra.mrb[0].mxu0 %v1551
    %v1590 = vpop.f32.mrb[0].mxu0
    %v1591 = vadd.f32 0.0, %v1590
    %v1592 = vpop.f32.mrb[0].mxu0
    %v1593 = vpop.f32.mrb[0].mxu0
    %v1594 = vpop.f32.mrb[0].mxu0
    %1595 = vdwg.mxu0
    %v1596 = vmul.f32 %v1269, 0.17677669
    %v1597 = vmul.f32 %v1315, 0.17677669
    %v1598 = vmul.f32 %v1361, 0.17677669
    %v1599 = vmul.f32 %v1407, 0.17677669
    %v1600 = vmul.f32 %v1453, 0.17677669
    %v1601 = vmul.f32 %v1499, 0.17677669
    %v1602 = vmul.f32 %v1545, 0.17677669
    %v1603 = vmul.f32 %v1591, 0.17677669
    %v1604 = vadd.f32 %v1596, %v1220
    %v1605 = vadd.f32 %v1597, %v1220
    %v1606 = vadd.f32 %v1598, %v1220
    %v1607 = vadd.f32 %v1599, %v1220
    %v1608 = vadd.f32 %v1600, %v1220
    %v1609 = vadd.f32 %v1601, %v1220
    %v1610 = vadd.f32 %v1602, %v1220
    %v1611 = vadd.f32 %v1603, %v1220
    %v1614 = vlaneseq
    %v1615 = vshrl.u32 %v1614, 7
    %v1616 = vsub.s32 0, %v1615
    %v1617 = vrot.slane %v1225, %v1616
    %v1618 = vlaneseq
    %v1619 = vshrl.u32 %v1618, 7
    %v1620 = vsub.s32 0, %v1619
    %v1621 = vrot.slane %v1226, %v1620
    %v1624 = vadd.f32 %v1604, %v1617
    %v1625 = vadd.f32 %v1605, %v1617
    %v1626 = vadd.f32 %v1606, %v1617
    %v1627 = vadd.f32 %v1607, %v1617
    %v1628 = vadd.f32 %v1608, %v1621
    %v1629 = vadd.f32 %v1609, %v1621
    %v1630 = vadd.f32 %v1610, %v1621
    %v1631 = vadd.f32 %v1611, %v1621
    %vm1632 = vcmask 64512
    %v1633 = vsel %vm1632, %v1624, -inf
    %1634 = vmax.xlane.f32.xlu0 %v1633
    %v1635 = vpop.xlane.xlu0 %1634
    %v1636 = vsel %vm1632, %v1625, -inf
    %1637 = vmax.xlane.f32.xlu0 %v1636
    %v1638 = vpop.xlane.xlu0 %1637
    %v1639 = vsel %vm1632, %v1626, -inf
    %1640 = vmax.xlane.f32.xlu0 %v1639
    %v1641 = vpop.xlane.xlu0 %1640
    %v1642 = vsel %vm1632, %v1627, -inf
    %1643 = vmax.xlane.f32.xlu0 %v1642
    %v1644 = vpop.xlane.xlu0 %1643
    %v1645 = vsel %vm1632, %v1628, -inf
    %1646 = vmax.xlane.f32.xlu0 %v1645
    %v1647 = vpop.xlane.xlu0 %1646
    %v1648 = vsel %vm1632, %v1629, -inf
    %1649 = vmax.xlane.f32.xlu0 %v1648
    %v1650 = vpop.xlane.xlu0 %1649
    %v1651 = vsel %vm1632, %v1630, -inf
    %1652 = vmax.xlane.f32.xlu0 %v1651
    %v1653 = vpop.xlane.xlu0 %1652
    %v1654 = vsel %vm1632, %v1631, -inf
    %1655 = vmax.xlane.f32.xlu0 %v1654
    %v1656 = vpop.xlane.xlu0 %1655
    %v1657 = vsub.f32 %v1624, %v1635
    %v1658 = vsub.f32 %v1625, %v1638
    %v1659 = vsub.f32 %v1626, %v1641
    %v1660 = vsub.f32 %v1627, %v1644
    %v1661 = vsub.f32 %v1628, %v1647
    %v1662 = vsub.f32 %v1629, %v1650
    %v1663 = vsub.f32 %v1630, %v1653
    %v1664 = vsub.f32 %v1631, %v1656
    %v1665 = vmul.f32 %v1657, 1.442695
    %v1666 = vpow.pop %v1665
    %v1667 = vmul.f32 %v1658, 1.442695
    %v1668 = vpow.pop %v1667
    %v1669 = vmul.f32 %v1659, 1.442695
    %v1670 = vpow.pop %v1669
    %v1671 = vmul.f32 %v1660, 1.442695
    %v1672 = vpow.pop %v1671
    %v1673 = vmul.f32 %v1661, 1.442695
    %v1674 = vpow.pop %v1673
    %v1675 = vmul.f32 %v1662, 1.442695
    %v1676 = vpow.pop %v1675
    %v1677 = vmul.f32 %v1663, 1.442695
    %v1678 = vpow.pop %v1677
    %v1679 = vmul.f32 %v1664, 1.442695
    %v1680 = vpow.pop %v1679
    %v1681 = vsel %vm1632, %v1666, 0.0
    %1682 = vadd.xlane.f32.xlu0 %v1681
    %v1683 = vpop.xlane.xlu0 %1682
    %v1684 = vsel %vm1632, %v1668, 0.0
    %1685 = vadd.xlane.f32.xlu0 %v1684
    %v1686 = vpop.xlane.xlu0 %1685
    %v1687 = vsel %vm1632, %v1670, 0.0
    %1688 = vadd.xlane.f32.xlu0 %v1687
    %v1689 = vpop.xlane.xlu0 %1688
    %v1690 = vsel %vm1632, %v1672, 0.0
    %1691 = vadd.xlane.f32.xlu0 %v1690
    %v1692 = vpop.xlane.xlu0 %1691
    %v1693 = vsel %vm1632, %v1674, 0.0
    %1694 = vadd.xlane.f32.xlu0 %v1693
    %v1695 = vpop.xlane.xlu0 %1694
    %v1696 = vsel %vm1632, %v1676, 0.0
    %1697 = vadd.xlane.f32.xlu0 %v1696
    %v1698 = vpop.xlane.xlu0 %1697
    %v1699 = vsel %vm1632, %v1678, 0.0
    %1700 = vadd.xlane.f32.xlu0 %v1699
    %v1701 = vpop.xlane.xlu0 %1700
    %v1702 = vsel %vm1632, %v1680, 0.0
    %1703 = vadd.xlane.f32.xlu0 %v1702
    %v1704 = vpop.xlane.xlu0 %1703
    %v1705 = vrcp.pop %v1683
    %v1706 = vrcp.pop %v1686
    %v1707 = vrcp.pop %v1689
    %v1708 = vrcp.pop %v1692
    %v1709 = vrcp.pop %v1695
    %v1710 = vrcp.pop %v1698
    %v1711 = vrcp.pop %v1701
    %v1712 = vrcp.pop %v1704
    %v1713 = vmul.f32 %v1666, %v1705
    %v1714 = vmul.f32 %v1668, %v1706
    %v1715 = vmul.f32 %v1670, %v1707
    %v1716 = vmul.f32 %v1672, %v1708
    %v1717 = vmul.f32 %v1674, %v1709
    %v1718 = vmul.f32 %v1676, %v1710
    %v1719 = vmul.f32 %v1678, %v1711
    %v1720 = vmul.f32 %v1680, %v1712
    %v1721 = vpack.c.bf16 %v1713, %v1713
    %v1722 = vpack.c.bf16 %v1714, %v1714
    %v1723 = vpack.c.bf16 %v1715, %v1715
    %v1724 = vpack.c.bf16 %v1716, %v1716
    %v1725 = vpack.c.bf16 %v1717, %v1717
    %v1726 = vpack.c.bf16 %v1718, %v1718
    %v1727 = vpack.c.bf16 %v1719, %v1719
    %v1728 = vpack.c.bf16 %v1720, %v1720
    %v1730 = vsel %vm1632, %v1721, 0
    %vm1732 = vcmask 1043456
    %v1734 = vsel %vm1732, %v1193, 0
    %1736 = vmatprep.subr.bf16.mxu0 0
    %1737 = vmatpush1.bf16.msra.mxu0 %v1734
    %1738 = vmatprep.subr.bf16.mxu0 0
    %1739 = vmatpush1.bf16.msra.mxu0 0
    %1740 = vmatprep.subr.bf16.mxu0 0
    %1741 = vmatpush1.bf16.msra.mxu0 0
    %1742 = vmatprep.subr.bf16.mxu0 0
    %1743 = vmatpush1.bf16.msra.mxu0 0
    %1744 = vmatprep.subr.bf16.mxu0 0
    %1745 = vmatpush1.bf16.msra.mxu0 0
    %1746 = vmatprep.subr.bf16.mxu0 0
    %1747 = vmatpush1.bf16.msra.mxu0 0
    %1748 = vmatprep.subr.bf16.mxu0 0
    %1749 = vmatpush1.bf16.msra.mxu0 0
    %1750 = vmatprep.subr.bf16.mxu0 0
    %1751 = vmatpush1.bf16.msra.mxu0 0
    %1752 = vmatprep.subr.bf16.mxu0 0
    %1753 = vmatpush1.bf16.msra.mxu0 0
    %1754 = vmatprep.subr.bf16.mxu0 0
    %1755 = vmatpush1.bf16.msra.mxu0 0
    %1756 = vmatprep.subr.bf16.mxu0 0
    %1757 = vmatpush1.bf16.msra.mxu0 0
    %1758 = vmatprep.subr.bf16.mxu0 0
    %1759 = vmatpush1.bf16.msra.mxu0 0
    %1760 = vmatprep.subr.bf16.mxu0 0
    %1761 = vmatpush1.bf16.msra.mxu0 0
    %1762 = vmatprep.subr.bf16.mxu0 0
    %1763 = vmatpush1.bf16.msra.mxu0 0
    %1764 = vmatprep.subr.bf16.mxu0 0
    %1765 = vmatpush1.bf16.msra.mxu0 0
    %1766 = vmatprep.subr.bf16.mxu0 0
    %1767 = vmatpush1.bf16.msra.mxu0 0
    %1768 = vmatprep.mubr.bf16.mxu0 0
    %1769 = vmatmul.mubr.bf16.gmra.mrb[0].mxu0 %v1730
    %v1770 = vpop.f32.mrb[0].mxu0
    %v1771 = vadd.f32 0.0, %v1770
    %v1772 = vpop.f32.mrb[0].mxu0
    %v1773 = vpop.f32.mrb[0].mxu0
    %v1774 = vpop.f32.mrb[0].mxu0
    %1775 = vdwg.mxu0
    %v1777 = vsel %vm1632, %v1722, 0
    %v1780 = vsel %vm1732, %v1196, 0
    %1782 = vmatprep.subr.bf16.mxu0 0
    %1783 = vmatpush1.bf16.msra.mxu0 %v1780
    %1784 = vmatprep.subr.bf16.mxu0 0
    %1785 = vmatpush1.bf16.msra.mxu0 0
    %1786 = vmatprep.subr.bf16.mxu0 0
    %1787 = vmatpush1.bf16.msra.mxu0 0
    %1788 = vmatprep.subr.bf16.mxu0 0
    %1789 = vmatpush1.bf16.msra.mxu0 0
    %1790 = vmatprep.subr.bf16.mxu0 0
    %1791 = vmatpush1.bf16.msra.mxu0 0
    %1792 = vmatprep.subr.bf16.mxu0 0
    %1793 = vmatpush1.bf16.msra.mxu0 0
    %1794 = vmatprep.subr.bf16.mxu0 0
    %1795 = vmatpush1.bf16.msra.mxu0 0
    %1796 = vmatprep.subr.bf16.mxu0 0
    %1797 = vmatpush1.bf16.msra.mxu0 0
    %1798 = vmatprep.subr.bf16.mxu0 0
    %1799 = vmatpush1.bf16.msra.mxu0 0
    %1800 = vmatprep.subr.bf16.mxu0 0
    %1801 = vmatpush1.bf16.msra.mxu0 0
    %1802 = vmatprep.subr.bf16.mxu0 0
    %1803 = vmatpush1.bf16.msra.mxu0 0
    %1804 = vmatprep.subr.bf16.mxu0 0
    %1805 = vmatpush1.bf16.msra.mxu0 0
    %1806 = vmatprep.subr.bf16.mxu0 0
    %1807 = vmatpush1.bf16.msra.mxu0 0
    %1808 = vmatprep.subr.bf16.mxu0 0
    %1809 = vmatpush1.bf16.msra.mxu0 0
    %1810 = vmatprep.subr.bf16.mxu0 0
    %1811 = vmatpush1.bf16.msra.mxu0 0
    %1812 = vmatprep.subr.bf16.mxu0 0
    %1813 = vmatpush1.bf16.msra.mxu0 0
    %1814 = vmatprep.mubr.bf16.mxu0 0
    %1815 = vmatmul.mubr.bf16.gmra.mrb[0].mxu0 %v1777
    %v1816 = vpop.f32.mrb[0].mxu0
    %v1817 = vadd.f32 0.0, %v1816
    %v1818 = vpop.f32.mrb[0].mxu0
    %v1819 = vpop.f32.mrb[0].mxu0
    %v1820 = vpop.f32.mrb[0].mxu0
    %1821 = vdwg.mxu0
    %v1823 = vsel %vm1632, %v1723, 0
    %v1826 = vsel %vm1732, %v1199, 0
    %1828 = vmatprep.subr.bf16.mxu0 0
    %1829 = vmatpush1.bf16.msra.mxu0 %v1826
    %1830 = vmatprep.subr.bf16.mxu0 0
    %1831 = vmatpush1.bf16.msra.mxu0 0
    %1832 = vmatprep.subr.bf16.mxu0 0
    %1833 = vmatpush1.bf16.msra.mxu0 0
    %1834 = vmatprep.subr.bf16.mxu0 0
    %1835 = vmatpush1.bf16.msra.mxu0 0
    %1836 = vmatprep.subr.bf16.mxu0 0
    %1837 = vmatpush1.bf16.msra.mxu0 0
    %1838 = vmatprep.subr.bf16.mxu0 0
    %1839 = vmatpush1.bf16.msra.mxu0 0
    %1840 = vmatprep.subr.bf16.mxu0 0
    %1841 = vmatpush1.bf16.msra.mxu0 0
    %1842 = vmatprep.subr.bf16.mxu0 0
    %1843 = vmatpush1.bf16.msra.mxu0 0
    %1844 = vmatprep.subr.bf16.mxu0 0
    %1845 = vmatpush1.bf16.msra.mxu0 0
    %1846 = vmatprep.subr.bf16.mxu0 0
    %1847 = vmatpush1.bf16.msra.mxu0 0
    %1848 = vmatprep.subr.bf16.mxu0 0
    %1849 = vmatpush1.bf16.msra.mxu0 0
    %1850 = vmatprep.subr.bf16.mxu0 0
    %1851 = vmatpush1.bf16.msra.mxu0 0
    %1852 = vmatprep.subr.bf16.mxu0 0
    %1853 = vmatpush1.bf16.msra.mxu0 0
    %1854 = vmatprep.subr.bf16.mxu0 0
    %1855 = vmatpush1.bf16.msra.mxu0 0
    %1856 = vmatprep.subr.bf16.mxu0 0
    %1857 = vmatpush1.bf16.msra.mxu0 0
    %1858 = vmatprep.subr.bf16.mxu0 0
    %1859 = vmatpush1.bf16.msra.mxu0 0
    %1860 = vmatprep.mubr.bf16.mxu0 0
    %1861 = vmatmul.mubr.bf16.gmra.mrb[0].mxu0 %v1823
    %v1862 = vpop.f32.mrb[0].mxu0
    %v1863 = vadd.f32 0.0, %v1862
    %v1864 = vpop.f32.mrb[0].mxu0
    %v1865 = vpop.f32.mrb[0].mxu0
    %v1866 = vpop.f32.mrb[0].mxu0
    %1867 = vdwg.mxu0
    %v1869 = vsel %vm1632, %v1724, 0
    %v1872 = vsel %vm1732, %v1202, 0
    %1874 = vmatprep.subr.bf16.mxu0 0
    %1875 = vmatpush1.bf16.msra.mxu0 %v1872
    %1876 = vmatprep.subr.bf16.mxu0 0
    %1877 = vmatpush1.bf16.msra.mxu0 0
    %1878 = vmatprep.subr.bf16.mxu0 0
    %1879 = vmatpush1.bf16.msra.mxu0 0
    %1880 = vmatprep.subr.bf16.mxu0 0
    %1881 = vmatpush1.bf16.msra.mxu0 0
    %1882 = vmatprep.subr.bf16.mxu0 0
    %1883 = vmatpush1.bf16.msra.mxu0 0
    %1884 = vmatprep.subr.bf16.mxu0 0
    %1885 = vmatpush1.bf16.msra.mxu0 0
    %1886 = vmatprep.subr.bf16.mxu0 0
    %1887 = vmatpush1.bf16.msra.mxu0 0
    %1888 = vmatprep.subr.bf16.mxu0 0
    %1889 = vmatpush1.bf16.msra.mxu0 0
    %1890 = vmatprep.subr.bf16.mxu0 0
    %1891 = vmatpush1.bf16.msra.mxu0 0
    %1892 = vmatprep.subr.bf16.mxu0 0
    %1893 = vmatpush1.bf16.msra.mxu0 0
    %1894 = vmatprep.subr.bf16.mxu0 0
    %1895 = vmatpush1.bf16.msra.mxu0 0
    %1896 = vmatprep.subr.bf16.mxu0 0
    %1897 = vmatpush1.bf16.msra.mxu0 0
    %1898 = vmatprep.subr.bf16.mxu0 0
    %1899 = vmatpush1.bf16.msra.mxu0 0
    %1900 = vmatprep.subr.bf16.mxu0 0
    %1901 = vmatpush1.bf16.msra.mxu0 0
    %1902 = vmatprep.subr.bf16.mxu0 0
    %1903 = vmatpush1.bf16.msra.mxu0 0
    %1904 = vmatprep.subr.bf16.mxu0 0
    %1905 = vmatpush1.bf16.msra.mxu0 0
    %1906 = vmatprep.mubr.bf16.mxu0 0
    %1907 = vmatmul.mubr.bf16.gmra.mrb[0].mxu0 %v1869
    %v1908 = vpop.f32.mrb[0].mxu0
    %v1909 = vadd.f32 0.0, %v1908
    %v1910 = vpop.f32.mrb[0].mxu0
    %v1911 = vpop.f32.mrb[0].mxu0
    %v1912 = vpop.f32.mrb[0].mxu0
    %1913 = vdwg.mxu0
    %v1915 = vsel %vm1632, %v1725, 0
    %v1918 = vsel %vm1732, %v1205, 0
    %1920 = vmatprep.subr.bf16.mxu0 0
    %1921 = vmatpush1.bf16.msra.mxu0 %v1918
    %1922 = vmatprep.subr.bf16.mxu0 0
    %1923 = vmatpush1.bf16.msra.mxu0 0
    %1924 = vmatprep.subr.bf16.mxu0 0
    %1925 = vmatpush1.bf16.msra.mxu0 0
    %1926 = vmatprep.subr.bf16.mxu0 0
    %1927 = vmatpush1.bf16.msra.mxu0 0
    %1928 = vmatprep.subr.bf16.mxu0 0
    %1929 = vmatpush1.bf16.msra.mxu0 0
    %1930 = vmatprep.subr.bf16.mxu0 0
    %1931 = vmatpush1.bf16.msra.mxu0 0
    %1932 = vmatprep.subr.bf16.mxu0 0
    %1933 = vmatpush1.bf16.msra.mxu0 0
    %1934 = vmatprep.subr.bf16.mxu0 0
    %1935 = vmatpush1.bf16.msra.mxu0 0
    %1936 = vmatprep.subr.bf16.mxu0 0
    %1937 = vmatpush1.bf16.msra.mxu0 0
    %1938 = vmatprep.subr.bf16.mxu0 0
    %1939 = vmatpush1.bf16.msra.mxu0 0
    %1940 = vmatprep.subr.bf16.mxu0 0
    %1941 = vmatpush1.bf16.msra.mxu0 0
    %1942 = vmatprep.subr.bf16.mxu0 0
    %1943 = vmatpush1.bf16.msra.mxu0 0
    %1944 = vmatprep.subr.bf16.mxu0 0
    %1945 = vmatpush1.bf16.msra.mxu0 0
    %1946 = vmatprep.subr.bf16.mxu0 0
    %1947 = vmatpush1.bf16.msra.mxu0 0
    %1948 = vmatprep.subr.bf16.mxu0 0
    %1949 = vmatpush1.bf16.msra.mxu0 0
    %1950 = vmatprep.subr.bf16.mxu0 0
    %1951 = vmatpush1.bf16.msra.mxu0 0
    %1952 = vmatprep.mubr.bf16.mxu0 0
    %1953 = vmatmul.mubr.bf16.gmra.mrb[0].mxu0 %v1915
    %v1954 = vpop.f32.mrb[0].mxu0
    %v1955 = vadd.f32 0.0, %v1954
    %v1956 = vpop.f32.mrb[0].mxu0
    %v1957 = vpop.f32.mrb[0].mxu0
    %v1958 = vpop.f32.mrb[0].mxu0
    %1959 = vdwg.mxu0
    %v1961 = vsel %vm1632, %v1726, 0
    %v1964 = vsel %vm1732, %v1208, 0
    %1966 = vmatprep.subr.bf16.mxu0 0
    %1967 = vmatpush1.bf16.msra.mxu0 %v1964
    %1968 = vmatprep.subr.bf16.mxu0 0
    %1969 = vmatpush1.bf16.msra.mxu0 0
    %1970 = vmatprep.subr.bf16.mxu0 0
    %1971 = vmatpush1.bf16.msra.mxu0 0
    %1972 = vmatprep.subr.bf16.mxu0 0
    %1973 = vmatpush1.bf16.msra.mxu0 0
    %1974 = vmatprep.subr.bf16.mxu0 0
    %1975 = vmatpush1.bf16.msra.mxu0 0
    %1976 = vmatprep.subr.bf16.mxu0 0
    %1977 = vmatpush1.bf16.msra.mxu0 0
    %1978 = vmatprep.subr.bf16.mxu0 0
    %1979 = vmatpush1.bf16.msra.mxu0 0
    %1980 = vmatprep.subr.bf16.mxu0 0
    %1981 = vmatpush1.bf16.msra.mxu0 0
    %1982 = vmatprep.subr.bf16.mxu0 0
    %1983 = vmatpush1.bf16.msra.mxu0 0
    %1984 = vmatprep.subr.bf16.mxu0 0
    %1985 = vmatpush1.bf16.msra.mxu0 0
    %1986 = vmatprep.subr.bf16.mxu0 0
    %1987 = vmatpush1.bf16.msra.mxu0 0
    %1988 = vmatprep.subr.bf16.mxu0 0
    %1989 = vmatpush1.bf16.msra.mxu0 0
    %1990 = vmatprep.subr.bf16.mxu0 0
    %1991 = vmatpush1.bf16.msra.mxu0 0
    %1992 = vmatprep.subr.bf16.mxu0 0
    %1993 = vmatpush1.bf16.msra.mxu0 0
    %1994 = vmatprep.subr.bf16.mxu0 0
    %1995 = vmatpush1.bf16.msra.mxu0 0
    %1996 = vmatprep.subr.bf16.mxu0 0
    %1997 = vmatpush1.bf16.msra.mxu0 0
    %1998 = vmatprep.mubr.bf16.mxu0 0
    %1999 = vmatmul.mubr.bf16.gmra.mrb[0].mxu0 %v1961
    %v2000 = vpop.f32.mrb[0].mxu0
    %v2001 = vadd.f32 0.0, %v2000
    %v2002 = vpop.f32.mrb[0].mxu0
    %v2003 = vpop.f32.mrb[0].mxu0
    %v2004 = vpop.f32.mrb[0].mxu0
    %2005 = vdwg.mxu0
    %v2007 = vsel %vm1632, %v1727, 0
    %v2010 = vsel %vm1732, %v1211, 0
    %2012 = vmatprep.subr.bf16.mxu0 0
    %2013 = vmatpush1.bf16.msra.mxu0 %v2010
    %2014 = vmatprep.subr.bf16.mxu0 0
    %2015 = vmatpush1.bf16.msra.mxu0 0
    %2016 = vmatprep.subr.bf16.mxu0 0
    %2017 = vmatpush1.bf16.msra.mxu0 0
    %2018 = vmatprep.subr.bf16.mxu0 0
    %2019 = vmatpush1.bf16.msra.mxu0 0
    %2020 = vmatprep.subr.bf16.mxu0 0
    %2021 = vmatpush1.bf16.msra.mxu0 0
    %2022 = vmatprep.subr.bf16.mxu0 0
    %2023 = vmatpush1.bf16.msra.mxu0 0
    %2024 = vmatprep.subr.bf16.mxu0 0
    %2025 = vmatpush1.bf16.msra.mxu0 0
    %2026 = vmatprep.subr.bf16.mxu0 0
    %2027 = vmatpush1.bf16.msra.mxu0 0
    %2028 = vmatprep.subr.bf16.mxu0 0
    %2029 = vmatpush1.bf16.msra.mxu0 0
    %2030 = vmatprep.subr.bf16.mxu0 0
    %2031 = vmatpush1.bf16.msra.mxu0 0
    %2032 = vmatprep.subr.bf16.mxu0 0
    %2033 = vmatpush1.bf16.msra.mxu0 0
    %2034 = vmatprep.subr.bf16.mxu0 0
    %2035 = vmatpush1.bf16.msra.mxu0 0
    %2036 = vmatprep.subr.bf16.mxu0 0
    %2037 = vmatpush1.bf16.msra.mxu0 0
    %2038 = vmatprep.subr.bf16.mxu0 0
    %2039 = vmatpush1.bf16.msra.mxu0 0
    %2040 = vmatprep.subr.bf16.mxu0 0
    %2041 = vmatpush1.bf16.msra.mxu0 0
    %2042 = vmatprep.subr.bf16.mxu0 0
    %2043 = vmatpush1.bf16.msra.mxu0 0
    %2044 = vmatprep.mubr.bf16.mxu0 0
    %2045 = vmatmul.mubr.bf16.gmra.mrb[0].mxu0 %v2007
    %v2046 = vpop.f32.mrb[0].mxu0
    %v2047 = vadd.f32 0.0, %v2046
    %v2048 = vpop.f32.mrb[0].mxu0
    %v2049 = vpop.f32.mrb[0].mxu0
    %v2050 = vpop.f32.mrb[0].mxu0
    %2051 = vdwg.mxu0
    %v2053 = vsel %vm1632, %v1728, 0
    %v2056 = vsel %vm1732, %v1214, 0
    %2058 = vmatprep.subr.bf16.mxu0 0
    %2059 = vmatpush1.bf16.msra.mxu0 %v2056
    %2060 = vmatprep.subr.bf16.mxu0 0
    %2061 = vmatpush1.bf16.msra.mxu0 0
    %2062 = vmatprep.subr.bf16.mxu0 0
    %2063 = vmatpush1.bf16.msra.mxu0 0
    %2064 = vmatprep.subr.bf16.mxu0 0
    %2065 = vmatpush1.bf16.msra.mxu0 0
    %2066 = vmatprep.subr.bf16.mxu0 0
    %2067 = vmatpush1.bf16.msra.mxu0 0
    %2068 = vmatprep.subr.bf16.mxu0 0
    %2069 = vmatpush1.bf16.msra.mxu0 0
    %2070 = vmatprep.subr.bf16.mxu0 0
    %2071 = vmatpush1.bf16.msra.mxu0 0
    %2072 = vmatprep.subr.bf16.mxu0 0
    %2073 = vmatpush1.bf16.msra.mxu0 0
    %2074 = vmatprep.subr.bf16.mxu0 0
    %2075 = vmatpush1.bf16.msra.mxu0 0
    %2076 = vmatprep.subr.bf16.mxu0 0
    %2077 = vmatpush1.bf16.msra.mxu0 0
    %2078 = vmatprep.subr.bf16.mxu0 0
    %2079 = vmatpush1.bf16.msra.mxu0 0
    %2080 = vmatprep.subr.bf16.mxu0 0
    %2081 = vmatpush1.bf16.msra.mxu0 0
    %2082 = vmatprep.subr.bf16.mxu0 0
    %2083 = vmatpush1.bf16.msra.mxu0 0
    %2084 = vmatprep.subr.bf16.mxu0 0
    %2085 = vmatpush1.bf16.msra.mxu0 0
    %2086 = vmatprep.subr.bf16.mxu0 0
    %2087 = vmatpush1.bf16.msra.mxu0 0
    %2088 = vmatprep.subr.bf16.mxu0 0
    %2089 = vmatpush1.bf16.msra.mxu0 0
    %2090 = vmatprep.mubr.bf16.mxu0 0
    %2091 = vmatmul.mubr.bf16.gmra.mrb[0].mxu0 %v2053
    %v2092 = vpop.f32.mrb[0].mxu0
    %v2093 = vadd.f32 0.0, %v2092
    %v2094 = vpop.f32.mrb[0].mxu0
    %v2095 = vpop.f32.mrb[0].mxu0
    %v2096 = vpop.f32.mrb[0].mxu0
    %2097 = vdwg.mxu0
    %v2098 = vcombine.low %v1771, %v1863
    %v2099 = vcombine.high %v1771, %v1863
    %v2101 = vunpack.c.l.s4 1983009808
    %v2102 = vunpack.c.0.s8 %v2101
    %v2103 = vlaneseq
    %v2104 = vshrl.u32 %v2103, 7
    %v2105 = vsub.s32 %v2102, %v2104
    %v2106 = vrot.slane %v2098, %v2105
    %v2108 = vunpack.c.l.s4 1983009808
    %v2109 = vunpack.c.0.s8 %v2108
    %v2110 = vlaneseq
    %v2111 = vshrl.u32 %v2110, 7
    %v2112 = vsub.s32 %v2109, %v2111
    %v2113 = vrot.slane %v2099, %v2112
    %v2114 = vcombine.low %v1817, %v1909
    %v2115 = vcombine.high %v1817, %v1909
    %v2117 = vunpack.c.l.s4 1983009808
    %v2118 = vunpack.c.0.s8 %v2117
    %v2119 = vlaneseq
    %v2120 = vshrl.u32 %v2119, 7
    %v2121 = vsub.s32 %v2118, %v2120
    %v2122 = vrot.slane %v2114, %v2121
    %v2124 = vunpack.c.l.s4 1983009808
    %v2125 = vunpack.c.0.s8 %v2124
    %v2126 = vlaneseq
    %v2127 = vshrl.u32 %v2126, 7
    %v2128 = vsub.s32 %v2125, %v2127
    %v2129 = vrot.slane %v2115, %v2128
    %v2130 = vcombine.low %v2106, %v2122
    %v2131 = vcombine.high %v2106, %v2122
    %v2133 = vunpack.c.l.s4 1934713408
    %v2134 = vunpack.c.0.s8 %v2133
    %v2135 = vlaneseq
    %v2136 = vshrl.u32 %v2135, 7
    %v2137 = vsub.s32 %v2134, %v2136
    %v2138 = vrot.slane %v2130, %v2137
    %v2140 = vunpack.c.l.s4 1934713408
    %v2141 = vunpack.c.0.s8 %v2140
    %v2142 = vlaneseq
    %v2143 = vshrl.u32 %v2142, 7
    %v2144 = vsub.s32 %v2141, %v2143
    %v2145 = vrot.slane %v2131, %v2144
    %v2146 = vcombine.low %v2113, %v2129
    %v2147 = vcombine.high %v2113, %v2129
    %v2149 = vunpack.c.l.s4 1934713408
    %v2150 = vunpack.c.0.s8 %v2149
    %v2151 = vlaneseq
    %v2152 = vshrl.u32 %v2151, 7
    %v2153 = vsub.s32 %v2150, %v2152
    %v2154 = vrot.slane %v2146, %v2153
    %v2156 = vunpack.c.l.s4 1934713408
    %v2157 = vunpack.c.0.s8 %v2156
    %v2158 = vlaneseq
    %v2159 = vshrl.u32 %v2158, 7
    %v2160 = vsub.s32 %v2157, %v2159
    %v2161 = vrot.slane %v2147, %v2160
    %v2162 = vcombine.high %v2138, 0.0
    %v2163 = vcombine.high %v2145, 0.0
    %v2164 = vcombine.high %v2154, 0.0
    %v2165 = vcombine.high %v2161, 0.0
    %v2166 = vcombine.low %v1955, %v2047
    %v2167 = vcombine.high %v1955, %v2047
    %v2169 = vunpack.c.l.s4 1983009808
    %v2170 = vunpack.c.0.s8 %v2169
    %v2171 = vlaneseq
    %v2172 = vshrl.u32 %v2171, 7
    %v2173 = vsub.s32 %v2170, %v2172
    %v2174 = vrot.slane %v2166, %v2173
    %v2176 = vunpack.c.l.s4 1983009808
    %v2177 = vunpack.c.0.s8 %v2176
    %v2178 = vlaneseq
    %v2179 = vshrl.u32 %v2178, 7
    %v2180 = vsub.s32 %v2177, %v2179
    %v2181 = vrot.slane %v2167, %v2180
    %v2182 = vcombine.low %v2001, %v2093
    %v2183 = vcombine.high %v2001, %v2093
    %v2185 = vunpack.c.l.s4 1983009808
    %v2186 = vunpack.c.0.s8 %v2185
    %v2187 = vlaneseq
    %v2188 = vshrl.u32 %v2187, 7
    %v2189 = vsub.s32 %v2186, %v2188
    %v2190 = vrot.slane %v2182, %v2189
    %v2192 = vunpack.c.l.s4 1983009808
    %v2193 = vunpack.c.0.s8 %v2192
    %v2194 = vlaneseq
    %v2195 = vshrl.u32 %v2194, 7
    %v2196 = vsub.s32 %v2193, %v2195
    %v2197 = vrot.slane %v2183, %v2196
    %v2198 = vcombine.low %v2174, %v2190
    %v2199 = vcombine.high %v2174, %v2190
    %v2201 = vunpack.c.l.s4 1934713408
    %v2202 = vunpack.c.0.s8 %v2201
    %v2203 = vlaneseq
    %v2204 = vshrl.u32 %v2203, 7
    %v2205 = vsub.s32 %v2202, %v2204
    %v2206 = vrot.slane %v2198, %v2205
    %v2208 = vunpack.c.l.s4 1934713408
    %v2209 = vunpack.c.0.s8 %v2208
    %v2210 = vlaneseq
    %v2211 = vshrl.u32 %v2210, 7
    %v2212 = vsub.s32 %v2209, %v2211
    %v2213 = vrot.slane %v2199, %v2212
    %v2214 = vcombine.low %v2181, %v2197
    %v2215 = vcombine.high %v2181, %v2197
    %v2217 = vunpack.c.l.s4 1934713408
    %v2218 = vunpack.c.0.s8 %v2217
    %v2219 = vlaneseq
    %v2220 = vshrl.u32 %v2219, 7
    %v2221 = vsub.s32 %v2218, %v2220
    %v2222 = vrot.slane %v2214, %v2221
    %v2224 = vunpack.c.l.s4 1934713408
    %v2225 = vunpack.c.0.s8 %v2224
    %v2226 = vlaneseq
    %v2227 = vshrl.u32 %v2226, 7
    %v2228 = vsub.s32 %v2225, %v2227
    %v2229 = vrot.slane %v2215, %v2228
    %v2230 = vcombine.high %v2206, 0.0
    %v2231 = vcombine.high %v2213, 0.0
    %v2232 = vcombine.high %v2222, 0.0
    %v2233 = vcombine.high %v2229, 0.0
    %v2234 = vcombine.low %v2138, %v2145
    %v2236 = vunpack.c.l.s4 1983009808
    %v2237 = vunpack.c.0.s8 %v2236
    %v2238 = vlaneseq
    %v2239 = vshrl.u32 %v2238, 7
    %v2240 = vsub.s32 %v2237, %v2239
    %v2241 = vrot.slane %v2234, %v2240
    %v2242 = vcombine.low %v2162, %v2163
    %v2244 = vunpack.c.l.s4 1983009808
    %v2245 = vunpack.c.0.s8 %v2244
    %v2246 = vlaneseq
    %v2247 = vshrl.u32 %v2246, 7
    %v2248 = vsub.s32 %v2245, %v2247
    %v2249 = vrot.slane %v2242, %v2248
    %v2250 = vcombine.low %v2154, %v2161
    %v2252 = vunpack.c.l.s4 1983009808
    %v2253 = vunpack.c.0.s8 %v2252
    %v2254 = vlaneseq
    %v2255 = vshrl.u32 %v2254, 7
    %v2256 = vsub.s32 %v2253, %v2255
    %v2257 = vrot.slane %v2250, %v2256
    %v2258 = vcombine.low %v2164, %v2165
    %v2260 = vunpack.c.l.s4 1983009808
    %v2261 = vunpack.c.0.s8 %v2260
    %v2262 = vlaneseq
    %v2263 = vshrl.u32 %v2262, 7
    %v2264 = vsub.s32 %v2261, %v2263
    %v2265 = vrot.slane %v2258, %v2264
    %v2266 = vcombine.low %v2241, %v2249
    %v2267 = vcombine.high %v2241, %v2249
    %v2269 = vunpack.c.l.s4 1934713408
    %v2270 = vunpack.c.0.s8 %v2269
    %v2271 = vlaneseq
    %v2272 = vshrl.u32 %v2271, 7
    %v2273 = vsub.s32 %v2270, %v2272
    %v2274 = vrot.slane %v2266, %v2273
    %v2276 = vunpack.c.l.s4 1934713408
    %v2277 = vunpack.c.0.s8 %v2276
    %v2278 = vlaneseq
    %v2279 = vshrl.u32 %v2278, 7
    %v2280 = vsub.s32 %v2277, %v2279
    %v2281 = vrot.slane %v2267, %v2280
    %v2282 = vcombine.low %v2257, %v2265
    %v2283 = vcombine.high %v2257, %v2265
    %v2285 = vunpack.c.l.s4 1934713408
    %v2286 = vunpack.c.0.s8 %v2285
    %v2287 = vlaneseq
    %v2288 = vshrl.u32 %v2287, 7
    %v2289 = vsub.s32 %v2286, %v2288
    %v2290 = vrot.slane %v2282, %v2289
    %v2292 = vunpack.c.l.s4 1934713408
    %v2293 = vunpack.c.0.s8 %v2292
    %v2294 = vlaneseq
    %v2295 = vshrl.u32 %v2294, 7
    %v2296 = vsub.s32 %v2293, %v2295
    %v2297 = vrot.slane %v2283, %v2296
    %v2298 = vcombine.low %v2274, %v2290
    %v2299 = vcombine.high %v2274, %v2290
    %v2300 = vcombine.low %v2281, %v2297
    %v2301 = vcombine.high %v2281, %v2297
    %v2302 = vcombine.low %v2206, %v2213
    %v2304 = vunpack.c.l.s4 1983009808
    %v2305 = vunpack.c.0.s8 %v2304
    %v2306 = vlaneseq
    %v2307 = vshrl.u32 %v2306, 7
    %v2308 = vsub.s32 %v2305, %v2307
    %v2309 = vrot.slane %v2302, %v2308
    %v2310 = vcombine.low %v2230, %v2231
    %v2312 = vunpack.c.l.s4 1983009808
    %v2313 = vunpack.c.0.s8 %v2312
    %v2314 = vlaneseq
    %v2315 = vshrl.u32 %v2314, 7
    %v2316 = vsub.s32 %v2313, %v2315
    %v2317 = vrot.slane %v2310, %v2316
    %v2318 = vcombine.low %v2222, %v2229
    %v2320 = vunpack.c.l.s4 1983009808
    %v2321 = vunpack.c.0.s8 %v2320
    %v2322 = vlaneseq
    %v2323 = vshrl.u32 %v2322, 7
    %v2324 = vsub.s32 %v2321, %v2323
    %v2325 = vrot.slane %v2318, %v2324
    %v2326 = vcombine.low %v2232, %v2233
    %v2328 = vunpack.c.l.s4 1983009808
    %v2329 = vunpack.c.0.s8 %v2328
    %v2330 = vlaneseq
    %v2331 = vshrl.u32 %v2330, 7
    %v2332 = vsub.s32 %v2329, %v2331
    %v2333 = vrot.slane %v2326, %v2332
    %v2334 = vcombine.low %v2309, %v2317
    %v2335 = vcombine.high %v2309, %v2317
    %v2337 = vunpack.c.l.s4 1934713408
    %v2338 = vunpack.c.0.s8 %v2337
    %v2339 = vlaneseq
    %v2340 = vshrl.u32 %v2339, 7
    %v2341 = vsub.s32 %v2338, %v2340
    %v2342 = vrot.slane %v2334, %v2341
    %v2344 = vunpack.c.l.s4 1934713408
    %v2345 = vunpack.c.0.s8 %v2344
    %v2346 = vlaneseq
    %v2347 = vshrl.u32 %v2346, 7
    %v2348 = vsub.s32 %v2345, %v2347
    %v2349 = vrot.slane %v2335, %v2348
    %v2350 = vcombine.low %v2325, %v2333
    %v2351 = vcombine.high %v2325, %v2333
    %v2353 = vunpack.c.l.s4 1934713408
    %v2354 = vunpack.c.0.s8 %v2353
    %v2355 = vlaneseq
    %v2356 = vshrl.u32 %v2355, 7
    %v2357 = vsub.s32 %v2354, %v2356
    %v2358 = vrot.slane %v2350, %v2357
    %v2360 = vunpack.c.l.s4 1934713408
    %v2361 = vunpack.c.0.s8 %v2360
    %v2362 = vlaneseq
    %v2363 = vshrl.u32 %v2362, 7
    %v2364 = vsub.s32 %v2361, %v2363
    %v2365 = vrot.slane %v2351, %v2364
    %v2366 = vcombine.low %v2342, %v2358
    %v2367 = vcombine.high %v2342, %v2358
    %v2368 = vcombine.low %v2349, %v2365
    %v2369 = vcombine.high %v2349, %v2365
    %2372 = vrot.lane.b32.xlu0 %v2299, 32
    %v2373 = vpop.permute.xlu0 %2372
    %2374 = vrot.lane.b32.xlu0 %v2367, 32
    %v2375 = vpop.permute.xlu0 %2374
    %2380 = vrot.lane.b32.xlu0 %v2300, 64
    %v2381 = vpop.permute.xlu0 %2380
    %2382 = vrot.lane.b32.xlu0 %v2368, 64
    %v2383 = vpop.permute.xlu0 %2382
    %2388 = vrot.lane.b32.xlu0 %v2301, 96
    %v2389 = vpop.permute.xlu0 %2388
    %2390 = vrot.lane.b32.xlu0 %v2369, 96
    %v2391 = vpop.permute.xlu0 %2390
    %v2394 = vsel %vm1227, %v2298, %v2373
    %v2395 = vsel %vm1227, %v2366, %v2375
    %vm2396 = vcmask 523264
    %v2397 = vsel %vm2396, %v2394, %v2381
    %v2398 = vsel %vm2396, %v2395, %v2383
    %vm2399 = vcmask 785408
    %v2400 = vsel %vm2399, %v2397, %v2389
    %v2401 = vsel %vm2399, %v2398, %v2391
    %v2402 = vadd.f32 %v100, %v2400
    %v2403 = vadd.f32 %v101, %v2401
    %v2404 = vld [vmem:[%s8] sm:$0x1]
    %v2405 = vld [vmem:[%s9] sm:$0x1]
    %2406 = vadd.xlane.f32.xlu0 %v2402
    %v2407 = vpop.xlane.xlu0 %2406
    %2408 = vadd.xlane.f32.xlu0 %v2403
    %v2409 = vpop.xlane.xlu0 %2408
    %v2410 = vrcp.pop 128.0
    %v2411 = vmul.f32 %v2407, %v2410
    %v2412 = vmul.f32 %v2409, %v2410
    %v2413 = vmul.f32 %v2402, %v2402
    %v2414 = vmul.f32 %v2403, %v2403
    %2415 = vadd.xlane.f32.xlu0 %v2413
    %v2416 = vpop.xlane.xlu0 %2415
    %2417 = vadd.xlane.f32.xlu0 %v2414
    %v2418 = vpop.xlane.xlu0 %2417
    %v2419 = vmul.f32 %v2416, %v2410
    %v2420 = vmul.f32 %v2418, %v2410
    %v2421 = vmul.f32 %v2411, %v2411
    %v2422 = vmul.f32 %v2412, %v2412
    %v2423 = vsub.f32 %v2419, %v2421
    %v2424 = vsub.f32 %v2420, %v2422
    %v2425 = vsub.f32 %v2402, %v2411
    %v2426 = vsub.f32 %v2403, %v2412
    %v2427 = vadd.f32 %v2423, 1e-05
    %v2428 = vadd.f32 %v2424, 1e-05
    %v2429 = vrsqrt.pop %v2427
    %v2430 = vrsqrt.pop %v2428
    %v2431 = vmul.f32 %v2425, %v2429
    %v2432 = vmul.f32 %v2426, %v2430
    %v2434 = vlaneseq
    %v2435 = vshrl.u32 %v2434, 7
    %v2436 = vsub.s32 0, %v2435
    %v2437 = vrot.slane %v2404, %v2436
    %v2439 = vmul.f32 %v2431, %v2437
    %v2440 = vmul.f32 %v2432, %v2437
    %v2442 = vlaneseq
    %v2443 = vshrl.u32 %v2442, 7
    %v2444 = vsub.s32 0, %v2443
    %v2445 = vrot.slane %v2405, %v2444
    %v2447 = vadd.f32 %v2439, %v2445
    %v2448 = vadd.f32 %v2440, %v2445
    %v2449 = vpack.c.bf16 %v2448, %v2447
    %v2450 = vld [vmem:[#allocation7] sm:$0xff]
    %v2451 = vld [vmem:[#allocation7 + $0x8] sm:$0xff]
    %v2452 = vld [vmem:[#allocation7 + $0x10] sm:$0xff]
    %v2453 = vld [vmem:[#allocation7 + $0x18] sm:$0xff]
    %v2454 = vld [vmem:[#allocation7 + $0x20] sm:$0xff]
    %v2455 = vld [vmem:[#allocation7 + $0x28] sm:$0xff]
    %v2456 = vld [vmem:[#allocation7 + $0x30] sm:$0xff]
    %v2457 = vld [vmem:[#allocation7 + $0x38] sm:$0xff]
    %v2458 = vld [vmem:[#allocation7 + $0x40] sm:$0xff]
    %v2459 = vld [vmem:[#allocation7 + $0x48] sm:$0xff]
    %v2460 = vld [vmem:[#allocation7 + $0x50] sm:$0xff]
    %v2461 = vld [vmem:[#allocation7 + $0x58] sm:$0xff]
    %v2462 = vld [vmem:[#allocation7 + $0x60] sm:$0xff]
    %v2463 = vld [vmem:[#allocation7 + $0x68] sm:$0xff]
    %v2464 = vld [vmem:[#allocation7 + $0x70] sm:$0xff]
    %v2465 = vld [vmem:[#allocation7 + $0x78] sm:$0xff]
    %v2466 = vld [vmem:[%s5] sm:$0x3]
    %v2468 = vlaneseq
    %v2469 = vshrl.u32 %v2468, 7
    %v2470 = vsub.s32 0, %v2469
    %v2471 = vrot.slane %v2466, %v2470
    %v2472 = vlaneseq
    %v2473 = vshrl.u32 %v2472, 7
    %v2474 = vsub.s32 1, %v2473
    %v2475 = vrot.slane %v2466, %v2474
    %v2494 = vunpack.c.l.b16 %v2450
    %v2495 = vunpack.c.h.b16 %v2450
    %v2496 = vunpack.c.l.b16 %v2451
    %v2497 = vunpack.c.h.b16 %v2451
    %v2498 = vunpack.c.l.b16 %v2452
    %v2499 = vunpack.c.h.b16 %v2452
    %v2500 = vunpack.c.l.b16 %v2453
    %v2501 = vunpack.c.h.b16 %v2453
    %v2502 = vunpack.c.l.b16 %v2454
    %v2503 = vunpack.c.h.b16 %v2454
    %v2504 = vunpack.c.l.b16 %v2455
    %v2505 = vunpack.c.h.b16 %v2455
    %v2506 = vunpack.c.l.b16 %v2456
    %v2507 = vunpack.c.h.b16 %v2456
    %v2508 = vunpack.c.l.b16 %v2457
    %v2509 = vunpack.c.h.b16 %v2457
    %v2510 = vunpack.c.l.b16 %v2458
    %v2511 = vunpack.c.h.b16 %v2458
    %v2512 = vunpack.c.l.b16 %v2459
    %v2513 = vunpack.c.h.b16 %v2459
    %v2514 = vunpack.c.l.b16 %v2460
    %v2515 = vunpack.c.h.b16 %v2460
    %v2516 = vunpack.c.l.b16 %v2461
    %v2517 = vunpack.c.h.b16 %v2461
    %v2518 = vunpack.c.l.b16 %v2462
    %v2519 = vunpack.c.h.b16 %v2462
    %v2520 = vunpack.c.l.b16 %v2463
    %v2521 = vunpack.c.h.b16 %v2463
    %v2522 = vunpack.c.l.b16 %v2464
    %v2523 = vunpack.c.h.b16 %v2464
    %v2524 = vunpack.c.l.b16 %v2465
    %v2525 = vunpack.c.h.b16 %v2465
    %v2526 = vpack.c.b16 %v2496, %v2494
    %v2527 = vpack.c.b16 %v2497, %v2495
    %v2528 = vpack.c.b16 %v2500, %v2498
    %v2529 = vpack.c.b16 %v2501, %v2499
    %v2530 = vpack.c.b16 %v2504, %v2502
    %v2531 = vpack.c.b16 %v2505, %v2503
    %v2532 = vpack.c.b16 %v2508, %v2506
    %v2533 = vpack.c.b16 %v2509, %v2507
    %v2534 = vpack.c.b16 %v2512, %v2510
    %v2535 = vpack.c.b16 %v2513, %v2511
    %v2536 = vpack.c.b16 %v2516, %v2514
    %v2537 = vpack.c.b16 %v2517, %v2515
    %v2538 = vpack.c.b16 %v2520, %v2518
    %v2539 = vpack.c.b16 %v2521, %v2519
    %v2540 = vpack.c.b16 %v2524, %v2522
    %v2541 = vpack.c.b16 %v2525, %v2523
    %2558 = vmatprep.subr.bf16.mxu0 %v2527
    %2559 = vmatpush1.bf16.msra.mxu0 %v2526
    %2560 = vmatprep.subr.bf16.mxu0 %v2529
    %2561 = vmatpush1.bf16.msra.mxu0 %v2528
    %2562 = vmatprep.subr.bf16.mxu0 %v2531
    %2563 = vmatpush1.bf16.msra.mxu0 %v2530
    %2564 = vmatprep.subr.bf16.mxu0 %v2533
    %2565 = vmatpush1.bf16.msra.mxu0 %v2532
    %2566 = vmatprep.subr.bf16.mxu0 %v2535
    %2567 = vmatpush1.bf16.msra.mxu0 %v2534
    %2568 = vmatprep.subr.bf16.mxu0 %v2537
    %2569 = vmatpush1.bf16.msra.mxu0 %v2536
    %2570 = vmatprep.subr.bf16.mxu0 %v2539
    %2571 = vmatpush1.bf16.msra.mxu0 %v2538
    %2572 = vmatprep.subr.bf16.mxu0 %v2541
    %2573 = vmatpush1.bf16.msra.mxu0 %v2540
    %2574 = vmatprep.subr.bf16.mxu0 0
    %2575 = vmatpush1.bf16.msra.mxu0 0
    %2576 = vmatprep.subr.bf16.mxu0 0
    %2577 = vmatpush1.bf16.msra.mxu0 0
    %2578 = vmatprep.subr.bf16.mxu0 0
    %2579 = vmatpush1.bf16.msra.mxu0 0
    %2580 = vmatprep.subr.bf16.mxu0 0
    %2581 = vmatpush1.bf16.msra.mxu0 0
    %2582 = vmatprep.subr.bf16.mxu0 0
    %2583 = vmatpush1.bf16.msra.mxu0 0
    %2584 = vmatprep.subr.bf16.mxu0 0
    %2585 = vmatpush1.bf16.msra.mxu0 0
    %2586 = vmatprep.subr.bf16.mxu0 0
    %2587 = vmatpush1.bf16.msra.mxu0 0
    %2588 = vmatprep.subr.bf16.mxu0 0
    %2589 = vmatpush1.bf16.msra.mxu0 0
    %2590 = vmatprep.mubr.bf16.mxu0 0
    %2591 = vmatmul.mubr.bf16.gmra.mrb[0].mxu0 %v2449
    %v2592 = vpop.f32.mrb[0].mxu0
    %v2593 = vadd.f32 %v2471, %v2592
    %v2594 = vpop.f32.mrb[0].mxu0
    %v2595 = vadd.f32 %v2475, %v2594
    %v2596 = vpop.f32.mrb[0].mxu0
    %v2597 = vadd.f32 %v2471, %v2596
    %v2598 = vpop.f32.mrb[0].mxu0
    %v2599 = vadd.f32 %v2475, %v2598
    %2600 = vdwg.mxu0
    %v2601 = vmax.f32 %v2593, 0.0
    %v2602 = vmax.f32 %v2595, 0.0
    %v2603 = vmax.f32 %v2597, 0.0
    %v2604 = vmax.f32 %v2599, 0.0
    %v2605 = vpack.c.bf16 %v2603, %v2601
    %v2606 = vpack.c.bf16 %v2604, %v2602
    %v2607 = vld [vmem:[#allocation8] sm:$0xf]
    %v2608 = vld [vmem:[#allocation8 + $0x4] sm:$0xf]
    %v2609 = vld [vmem:[#allocation8 + $0x8] sm:$0xf]
    %v2610 = vld [vmem:[#allocation8 + $0xc] sm:$0xf]
    %v2611 = vld [vmem:[#allocation8 + $0x10] sm:$0xf]
    %v2612 = vld [vmem:[#allocation8 + $0x14] sm:$0xf]
    %v2613 = vld [vmem:[#allocation8 + $0x18] sm:$0xf]
    %v2614 = vld [vmem:[#allocation8 + $0x1c] sm:$0xf]
    %v2615 = vld [vmem:[#allocation8 + $0x20] sm:$0xf]
    %v2616 = vld [vmem:[#allocation8 + $0x24] sm:$0xf]
    %v2617 = vld [vmem:[#allocation8 + $0x28] sm:$0xf]
    %v2618 = vld [vmem:[#allocation8 + $0x2c] sm:$0xf]
    %v2619 = vld [vmem:[#allocation8 + $0x30] sm:$0xf]
    %v2620 = vld [vmem:[#allocation8 + $0x34] sm:$0xf]
    %v2621 = vld [vmem:[#allocation8 + $0x38] sm:$0xf]
    %v2622 = vld [vmem:[#allocation8 + $0x3c] sm:$0xf]
    %v2623 = vld [vmem:[#allocation8 + $0x40] sm:$0xf]
    %v2624 = vld [vmem:[#allocation8 + $0x44] sm:$0xf]
    %v2625 = vld [vmem:[#allocation8 + $0x48] sm:$0xf]
    %v2626 = vld [vmem:[#allocation8 + $0x4c] sm:$0xf]
    %v2627 = vld [vmem:[#allocation8 + $0x50] sm:$0xf]
    %v2628 = vld [vmem:[#allocation8 + $0x54] sm:$0xf]
    %v2629 = vld [vmem:[#allocation8 + $0x58] sm:$0xf]
    %v2630 = vld [vmem:[#allocation8 + $0x5c] sm:$0xf]
    %v2631 = vld [vmem:[#allocation8 + $0x60] sm:$0xf]
    %v2632 = vld [vmem:[#allocation8 + $0x64] sm:$0xf]
    %v2633 = vld [vmem:[#allocation8 + $0x68] sm:$0xf]
    %v2634 = vld [vmem:[#allocation8 + $0x6c] sm:$0xf]
    %v2635 = vld [vmem:[#allocation8 + $0x70] sm:$0xf]
    %v2636 = vld [vmem:[#allocation8 + $0x74] sm:$0xf]
    %v2637 = vld [vmem:[#allocation8 + $0x78] sm:$0xf]
    %v2638 = vld [vmem:[#allocation8 + $0x7c] sm:$0xf]
    %v2639 = vld [vmem:[%s7] sm:$0x1]
    %v2641 = vlaneseq
    %v2642 = vshrl.u32 %v2641, 7
    %v2643 = vsub.s32 0, %v2642
    %v2644 = vrot.slane %v2639, %v2643
    %v2678 = vunpack.c.l.b16 %v2607
    %v2679 = vunpack.c.l.b16 %v2608
    %v2680 = vunpack.c.l.b16 %v2609
    %v2681 = vunpack.c.l.b16 %v2610
    %v2682 = vunpack.c.l.b16 %v2611
    %v2683 = vunpack.c.l.b16 %v2612
    %v2684 = vunpack.c.l.b16 %v2613
    %v2685 = vunpack.c.l.b16 %v2614
    %v2686 = vunpack.c.l.b16 %v2615
    %v2687 = vunpack.c.l.b16 %v2616
    %v2688 = vunpack.c.l.b16 %v2617
    %v2689 = vunpack.c.l.b16 %v2618
    %v2690 = vunpack.c.l.b16 %v2619
    %v2691 = vunpack.c.l.b16 %v2620
    %v2692 = vunpack.c.l.b16 %v2621
    %v2693 = vunpack.c.l.b16 %v2622
    %v2694 = vunpack.c.l.b16 %v2623
    %v2695 = vunpack.c.l.b16 %v2624
    %v2696 = vunpack.c.l.b16 %v2625
    %v2697 = vunpack.c.l.b16 %v2626
    %v2698 = vunpack.c.l.b16 %v2627
    %v2699 = vunpack.c.l.b16 %v2628
    %v2700 = vunpack.c.l.b16 %v2629
    %v2701 = vunpack.c.l.b16 %v2630
    %v2702 = vunpack.c.l.b16 %v2631
    %v2703 = vunpack.c.l.b16 %v2632
    %v2704 = vunpack.c.l.b16 %v2633
    %v2705 = vunpack.c.l.b16 %v2634
    %v2706 = vunpack.c.l.b16 %v2635
    %v2707 = vunpack.c.l.b16 %v2636
    %v2708 = vunpack.c.l.b16 %v2637
    %v2709 = vunpack.c.l.b16 %v2638
    %v2710 = vpack.c.b16 %v2679, %v2678
    %v2711 = vpack.c.b16 %v2681, %v2680
    %v2712 = vpack.c.b16 %v2683, %v2682
    %v2713 = vpack.c.b16 %v2685, %v2684
    %v2714 = vpack.c.b16 %v2687, %v2686
    %v2715 = vpack.c.b16 %v2689, %v2688
    %v2716 = vpack.c.b16 %v2691, %v2690
    %v2717 = vpack.c.b16 %v2693, %v2692
    %v2718 = vpack.c.b16 %v2695, %v2694
    %v2719 = vpack.c.b16 %v2697, %v2696
    %v2720 = vpack.c.b16 %v2699, %v2698
    %v2721 = vpack.c.b16 %v2701, %v2700
    %v2722 = vpack.c.b16 %v2703, %v2702
    %v2723 = vpack.c.b16 %v2705, %v2704
    %v2724 = vpack.c.b16 %v2707, %v2706
    %v2725 = vpack.c.b16 %v2709, %v2708
    %2742 = vmatprep.subr.bf16.mxu0 0
    %2743 = vmatpush1.bf16.msra.mxu0 %v2710
    %2744 = vmatprep.subr.bf16.mxu0 0
    %2745 = vmatpush1.bf16.msra.mxu0 %v2711
    %2746 = vmatprep.subr.bf16.mxu0 0
    %2747 = vmatpush1.bf16.msra.mxu0 %v2712
    %2748 = vmatprep.subr.bf16.mxu0 0
    %2749 = vmatpush1.bf16.msra.mxu0 %v2713
    %2750 = vmatprep.subr.bf16.mxu0 0
    %2751 = vmatpush1.bf16.msra.mxu0 %v2714
    %2752 = vmatprep.subr.bf16.mxu0 0
    %2753 = vmatpush1.bf16.msra.mxu0 %v2715
    %2754 = vmatprep.subr.bf16.mxu0 0
    %2755 = vmatpush1.bf16.msra.mxu0 %v2716
    %2756 = vmatprep.subr.bf16.mxu0 0
    %2757 = vmatpush1.bf16.msra.mxu0 %v2717
    %2758 = vmatprep.subr.bf16.mxu0 0
    %2759 = vmatpush1.bf16.msra.mxu0 %v2718
    %2760 = vmatprep.subr.bf16.mxu0 0
    %2761 = vmatpush1.bf16.msra.mxu0 %v2719
    %2762 = vmatprep.subr.bf16.mxu0 0
    %2763 = vmatpush1.bf16.msra.mxu0 %v2720
    %2764 = vmatprep.subr.bf16.mxu0 0
    %2765 = vmatpush1.bf16.msra.mxu0 %v2721
    %2766 = vmatprep.subr.bf16.mxu0 0
    %2767 = vmatpush1.bf16.msra.mxu0 %v2722
    %2768 = vmatprep.subr.bf16.mxu0 0
    %2769 = vmatpush1.bf16.msra.mxu0 %v2723
    %2770 = vmatprep.subr.bf16.mxu0 0
    %2771 = vmatpush1.bf16.msra.mxu0 %v2724
    %2772 = vmatprep.subr.bf16.mxu0 0
    %2773 = vmatpush1.bf16.msra.mxu0 %v2725
    %2774 = vmatprep.mubr.bf16.mxu0 %v2606
    %2775 = vmatmul.mubr.bf16.gmra.mrb[0].mxu0 %v2605
    %v2776 = vpop.f32.mrb[0].mxu0
    %v2777 = vadd.f32 %v2644, %v2776
    %v2778 = vpop.f32.mrb[0].mxu0
    %v2779 = vpop.f32.mrb[0].mxu0
    %v2780 = vadd.f32 %v2644, %v2779
    %v2781 = vpop.f32.mrb[0].mxu0
    %2782 = vdwg.mxu0
    %v2783 = vadd.f32 %v2447, %v2777
    %v2784 = vadd.f32 %v2448, %v2780
    %v2785 = vld [vmem:[%s10] sm:$0x1]
    %v2786 = vld [vmem:[%s11] sm:$0x1]
    %2787 = vadd.xlane.f32.xlu0 %v2783
    %v2788 = vpop.xlane.xlu0 %2787
    %2789 = vadd.xlane.f32.xlu0 %v2784
    %v2790 = vpop.xlane.xlu0 %2789
    %v2791 = vmul.f32 %v2788, %v2410
    %v2792 = vmul.f32 %v2790, %v2410
    %v2793 = vmul.f32 %v2783, %v2783
    %v2794 = vmul.f32 %v2784, %v2784
    %2795 = vadd.xlane.f32.xlu0 %v2793
    %v2796 = vpop.xlane.xlu0 %2795
    %2797 = vadd.xlane.f32.xlu0 %v2794
    %v2798 = vpop.xlane.xlu0 %2797
    %v2799 = vmul.f32 %v2796, %v2410
    %v2800 = vmul.f32 %v2798, %v2410
    %v2801 = vmul.f32 %v2791, %v2791
    %v2802 = vmul.f32 %v2792, %v2792
    %v2803 = vsub.f32 %v2799, %v2801
    %v2804 = vsub.f32 %v2800, %v2802
    %v2805 = vsub.f32 %v2783, %v2791
    %v2806 = vsub.f32 %v2784, %v2792
    %v2807 = vadd.f32 %v2803, 1e-05
    %v2808 = vadd.f32 %v2804, 1e-05
    %v2809 = vrsqrt.pop %v2807
    %v2810 = vrsqrt.pop %v2808
    %v2811 = vmul.f32 %v2805, %v2809
    %v2812 = vmul.f32 %v2806, %v2810
    %v2814 = vlaneseq
    %v2815 = vshrl.u32 %v2814, 7
    %v2816 = vsub.s32 0, %v2815
    %v2817 = vrot.slane %v2785, %v2816
    %v2819 = vmul.f32 %v2811, %v2817
    %v2820 = vmul.f32 %v2812, %v2817
    %v2822 = vlaneseq
    %v2823 = vshrl.u32 %v2822, 7
    %v2824 = vsub.s32 0, %v2823
    %v2825 = vrot.slane %v2786, %v2824
    %v2827 = vadd.f32 %v2819, %v2825
    %v2828 = vadd.f32 %v2820, %v2825
    %v2829 = vpack.c.bf16 %v2827, %v2827
    %v2830 = vpack.c.bf16 %v2828, %v2828
    %2831 = vst [vmem:[#allocation10] sm:$0xf] %v2829
    %2832 = vst [vmem:[#allocation10 + $0x4] sm:$0xf] %v2830
    // Predicated region
    $region66: #{tpu_custom_call.1} parent=1 // pred_check
      _
    $region67: #{tpu_custom_call.1} parent=1 // pred_check_branch
      %2834 = sbr.rel (0) target = $region69
    $region68: #{tpu_custom_call.1} parent=1 // pred_region
      %s2836 = ssub.s32 128, 128
      %2837 = vsyncadd [#allocation4], %s2836
      %s2838 = sshll.u32 [#allocation10], 4
      %s2839 = int_to_ptr.vmem [resolvable:$true] %s2838
      %2844 = dma.vmem_to_hbm [thread:$0]  %s2839, 128, %s12, [#allocation4], 64, 64, 4
    $region69: #{tpu_custom_call.1} parent=1 // pred_fallthru
      _
    // Predicated region
    $region70: #{tpu_custom_call.1} parent=1 // pred_check
      _
    $region71: #{tpu_custom_call.1} parent=1 // pred_check_branch
      %2846 = sbr.rel (0) target = $region73
    $region72: #{tpu_custom_call.1} parent=1 // pred_region
      %2847 = dma.done [#allocation4], 128
    $region73: #{tpu_custom_call.1} parent=1 // pred_fallthru
      _
    %2848 = vsyncpa [#allocation3], 1
    %2849 = vsyncpa [#allocation6], 1
    %2850 = vsyncpa [#allocation9], 1
    %2851 = vsyncpa [#allocation4], 1

// kernel: tpu_custom_call.1
$region0: #{tpu_custom_call.1}
  #allocation0 [shape = 'u32[]', space=smem, size = 0x4, offset = 0x4, fixed_abs, tag = 'smem constant byte address 0x4 - core index']
  #allocation1 [shape = 'u32[144,128]{1,0:T(1,128)}', space=vmem, size = 0x12000, scoped, tag = 'internal scratch']
  %s0 = inlined_call_operand.hbm [shape: bf16[2,8,128], index: 0, kind: input, shape index: {}]
  %s1 = inlined_call_operand.vmem [shape: f32[2,1,8], index: 1, kind: input, shape index: {}]
  %s2 = inlined_call_operand.hbm [shape: bf16[128,384], index: 2, kind: input, shape index: {}]
  %s3 = inlined_call_operand.vmem [shape: f32[1,384], index: 3, kind: input, shape index: {}]
  %s4 = inlined_call_operand.hbm [shape: bf16[128,256], index: 4, kind: input, shape index: {}]
  %s5 = inlined_call_operand.vmem [shape: f32[1,256], index: 5, kind: input, shape index: {}]
  %s6 = inlined_call_operand.hbm [shape: bf16[256,128], index: 6, kind: input, shape index: {}]
  %s7 = inlined_call_operand.vmem [shape: f32[1,128], index: 7, kind: input, shape index: {}]
  %s8 = inlined_call_operand.vmem [shape: f32[1,128], index: 8, kind: input, shape index: {}]
  %s9 = inlined_call_operand.vmem [shape: f32[1,128], index: 9, kind: input, shape index: {}]
  %s10 = inlined_call_operand.vmem [shape: f32[1,128], index: 10, kind: input, shape index: {}]
  %s11 = inlined_call_operand.vmem [shape: f32[1,128], index: 11, kind: input, shape index: {}]
  %s12 = inlined_call_operand.hbm [shape: bf16[2,8,128], index: 12, kind: output, shape index: {}]
  %s13 = sld [smem:[#allocation0]]
  $region74: #{tpu_custom_call.1} parent=0
    _
  %s15 = ssub.s32 1, %s13
  %s16 = scalar_select 0, %s15, %s13
  $region1: #{tpu_custom_call.1} parent=0
    #allocation2 [shape = 'u8[4096]{0}', space=vmem, size = 0x1000, scoped, tag = 'input window, operand 0, single buffered']
    #allocation3 [shape = 's32[1]{0}', space=sflag, size = 0x4, scoped, tag = 'scoped memory for tpu_custom_call.1']
    #allocation4 [shape = 's32[1]{0}', space=sflag, size = 0x4, scoped, tag = 'scoped memory for tpu_custom_call.1']
    #allocation5 [shape = 'u8[98304]{0}', space=vmem, size = 0x18000, scoped, tag = 'input window, operand 2, single buffered']
    #allocation6 [shape = 's32[1]{0}', space=sflag, size = 0x4, scoped, tag = 'scoped memory for tpu_custom_call.1']
    #allocation7 [shape = 'u8[65536]{0}', space=vmem, size = 0x10000, scoped, tag = 'input window, operand 4, single buffered']
    #allocation8 [shape = 'u8[65536]{0}', space=vmem, size = 0x10000, scoped, tag = 'input window, operand 6, single buffered']
    #allocation9 [shape = 's32[1]{0}', space=sflag, size = 0x4, scoped, tag = 'scoped memory for tpu_custom_call.1']
    #allocation10 [shape = 'u8[4096]{0}', space=vmem, size = 0x1000, scoped, tag = 'output window, operand 0, single buffered']
    %17 = vsyncpa [#allocation3], 0
    %18 = vsyncpa [#allocation6], 0
    %19 = vsyncpa [#allocation9], 0
    %20 = vsyncpa [#allocation4], 0
    // Predicated region
    $region2: #{tpu_custom_call.1} parent=1 // pred_check
      _
    $region3: #{tpu_custom_call.1} parent=1 // pred_check_branch
      %22 = sbr.rel (0) target = $region5
    $region4: #{tpu_custom_call.1} parent=1 // pred_region
      %s24 = ssub.s32 128, 128
      %25 = vsyncadd [#allocation3], %s24
      %s26 = sshll.u32 [#allocation2], 4
      %s27 = int_to_ptr.vmem [resolvable:$true] %s26
      %32 = dma.hbm_to_vmem [thread:$0]  %s0, 128, %s27, [#allocation3], 64, 64, 4
    $region5: #{tpu_custom_call.1} parent=1 // pred_fallthru
      _
    // Predicated region
    $region6: #{tpu_custom_call.1} parent=1 // pred_check
      _
    $region7: #{tpu_custom_call.1} parent=1 // pred_check_branch
      %34 = sbr.rel (0) target = $region9
    $region8: #{tpu_custom_call.1} parent=1 // pred_region
      _
    $region9: #{tpu_custom_call.1} parent=1 // pred_fallthru
      _
    // Predicated region
    $region10: #{tpu_custom_call.1} parent=1 // pred_check
      _
    $region11: #{tpu_custom_call.1} parent=1 // pred_check_branch
      %36 = sbr.rel (0) target = $region13
    $region12: #{tpu_custom_call.1} parent=1 // pred_region
      %s38 = ssub.s32 3072, 3072
      %39 = vsyncadd [#allocation6], %s38
      %s40 = sshll.u32 [#allocation5], 4
      %s41 = int_to_ptr.vmem [resolvable:$true] %s40
      %46 = dma.hbm_to_vmem [thread:$0]  %s2, 3072, %s41, [#allocation6], 192, 192, 12
    $region13: #{tpu_custom_call.1} parent=1 // pred_fallthru
      _
    // Predicated region
    $region14: #{tpu_custom_call.1} parent=1 // pred_check
      _
    $region15: #{tpu_custom_call.1} parent=1 // pred_check_branch
      %48 = sbr.rel (0) target = $region17
    $region16: #{tpu_custom_call.1} parent=1 // pred_region
      _
    $region17: #{tpu_custom_call.1} parent=1 // pred_fallthru
      _
    // Predicated region
    $region18: #{tpu_custom_call.1} parent=1 // pred_check
      _
    $region19: #{tpu_custom_call.1} parent=1 // pred_check_branch
      %50 = sbr.rel (0) target = $region21
    $region20: #{tpu_custom_call.1} parent=1 // pred_region
      %s52 = ssub.s32 2048, 2048
      %53 = vsyncadd [#allocation6], %s52
      %s54 = sshll.u32 [#allocation7], 4
      %s55 = int_to_ptr.vmem [resolvable:$true] %s54
      %60 = dma.hbm_to_vmem [thread:$0]  %s4, 2048, %s55, [#allocation6], 128, 128, 8
    $region21: #{tpu_custom_call.1} parent=1 // pred_fallthru
      _
    // Predicated region
    $region22: #{tpu_custom_call.1} parent=1 // pred_check
      _
    $region23: #{tpu_custom_call.1} parent=1 // pred_check_branch
      %62 = sbr.rel (0) target = $region25
    $region24: #{tpu_custom_call.1} parent=1 // pred_region
      _
    $region25: #{tpu_custom_call.1} parent=1 // pred_fallthru
      _
    // Predicated region
    $region26: #{tpu_custom_call.1} parent=1 // pred_check
      _
    $region27: #{tpu_custom_call.1} parent=1 // pred_check_branch
      %64 = sbr.rel (0) target = $region29
    $region28: #{tpu_custom_call.1} parent=1 // pred_region
      %s66 = ssub.s32 2048, 2048
      %67 = vsyncadd [#allocation9], %s66
      %s68 = sshll.u32 [#allocation8], 4
      %s69 = int_to_ptr.vmem [resolvable:$true] %s68
      %74 = dma.hbm_to_vmem [thread:$0]  %s6, 2048, %s69, [#allocation9], 64, 64, 4
    $region29: #{tpu_custom_call.1} parent=1 // pred_fallthru
      _
    // Predicated region
    $region30: #{tpu_custom_call.1} parent=1 // pred_check
      _
    $region31: #{tpu_custom_call.1} parent=1 // pred_check_branch
      %76 = sbr.rel (0) target = $region33
    $region32: #{tpu_custom_call.1} parent=1 // pred_region
      _
    $region33: #{tpu_custom_call.1} parent=1 // pred_fallthru
      _
    // Predicated region
    $region34: #{tpu_custom_call.1} parent=1 // pred_check
      _
    $region35: #{tpu_custom_call.1} parent=1 // pred_check_branch
      %78 = sbr.rel (0) target = $region37
    $region36: #{tpu_custom_call.1} parent=1 // pred_region
      _
    $region37: #{tpu_custom_call.1} parent=1 // pred_fallthru
      _
    // Predicated region
    $region38: #{tpu_custom_call.1} parent=1 // pred_check
      _
    $region39: #{tpu_custom_call.1} parent=1 // pred_check_branch
      %80 = sbr.rel (0) target = $region41
    $region40: #{tpu_custom_call.1} parent=1 // pred_region
      _
    $region41: #{tpu_custom_call.1} parent=1 // pred_fallthru
      _
    // Predicated region
    $region42: #{tpu_custom_call.1} parent=1 // pred_check
      _
    $region43: #{tpu_custom_call.1} parent=1 // pred_check_branch
      %82 = sbr.rel (0) target = $region45
    $region44: #{tpu_custom_call.1} parent=1 // pred_region
      _
    $region45: #{tpu_custom_call.1} parent=1 // pred_fallthru
      _
    // Predicated region
    $region46: #{tpu_custom_call.1} parent=1 // pred_check
      _
    $region47: #{tpu_custom_call.1} parent=1 // pred_check_branch
      %84 = sbr.rel (0) target = $region49
    $region48: #{tpu_custom_call.1} parent=1 // pred_region
      _
    $region49: #{tpu_custom_call.1} parent=1 // pred_fallthru
      _
    // Predicated region
    $region50: #{tpu_custom_call.1} parent=1 // pred_check
      _
    $region51: #{tpu_custom_call.1} parent=1 // pred_check_branch
      %86 = sbr.rel (0) target = $region53
    $region52: #{tpu_custom_call.1} parent=1 // pred_region
      %87 = dma.done [#allocation3], 128
    $region53: #{tpu_custom_call.1} parent=1 // pred_fallthru
      _
    // Predicated region
    $region54: #{tpu_custom_call.1} parent=1 // pred_check
      _
    $region55: #{tpu_custom_call.1} parent=1 // pred_check_branch
      %89 = sbr.rel (0) target = $region57
    $region56: #{tpu_custom_call.1} parent=1 // pred_region
      %90 = dma.done [#allocation6], 3072
    $region57: #{tpu_custom_call.1} parent=1 // pred_fallthru
      _
    // Predicated region
    $region58: #{tpu_custom_call.1} parent=1 // pred_check
      _
    $region59: #{tpu_custom_call.1} parent=1 // pred_check_branch
      %92 = sbr.rel (0) target = $region61
    $region60: #{tpu_custom_call.1} parent=1 // pred_region
      %93 = dma.done [#allocation6], 2048
    $region61: #{tpu_custom_call.1} parent=1 // pred_fallthru
      _
    // Predicated region
    $region62: #{tpu_custom_call.1} parent=1 // pred_check
      _
    $region63: #{tpu_custom_call.1} parent=1 // pred_check_branch
      %95 = sbr.rel (0) target = $region65
    $region64: #{tpu_custom_call.1} parent=1 // pred_region
      %96 = dma.done [#allocation9], 2048
    $region65: #{tpu_custom_call.1} parent=1 // pred_fallthru
      _
    %v98 = vld [vmem:[#allocation2] sm:$0xf]
    %v99 = vld [vmem:[#allocation2 + $0x4] sm:$0xf]
    %v100 = vunpack.c.l.bf16 %v98
    %v101 = vunpack.c.l.bf16 %v99
    %v102 = vld [vmem:[#allocation5] sm:$0xff]
    %v103 = vld [vmem:[#allocation5 + $0x8] sm:$0xf]
    %v104 = vld [vmem:[#allocation5 + $0xc] sm:$0xff]
    %v105 = vld [vmem:[#allocation5 + $0x14] sm:$0xf]
    %v106 = vld [vmem:[#allocation5 + $0x18] sm:$0xff]
    %v107 = vld [vmem:[#allocation5 + $0x20] sm:$0xf]
    %v108 = vld [vmem:[#allocation5 + $0x24] sm:$0xff]
    %v109 = vld [vmem:[#allocation5 + $0x2c] sm:$0xf]
    %v110 = vld [vmem:[#allocation5 + $0x30] sm:$0xff]
    %v111 = vld [vmem:[#allocation5 + $0x38] sm:$0xf]
    %v112 = vld [vmem:[#allocation5 + $0x3c] sm:$0xff]
    %v113 = vld [vmem:[#allocation5 + $0x44] sm:$0xf]
    %v114 = vld [vmem:[#allocation5 + $0x48] sm:$0xff]
    %v115 = vld [vmem:[#allocation5 + $0x50] sm:$0xf]
    %v116 = vld [vmem:[#allocation5 + $0x54] sm:$0xff]
    %v117 = vld [vmem:[#allocation5 + $0x5c] sm:$0xf]
    %v118 = vld [vmem:[#allocation5 + $0x60] sm:$0xff]
    %v119 = vld [vmem:[#allocation5 + $0x68] sm:$0xf]
    %v120 = vld [vmem:[#allocation5 + $0x6c] sm:$0xff]
    %v121 = vld [vmem:[#allocation5 + $0x74] sm:$0xf]
    %v122 = vld [vmem:[#allocation5 + $0x78] sm:$0xff]
    %v123 = vld [vmem:[#allocation5 + $0x80] sm:$0xf]
    %v124 = vld [vmem:[#allocation5 + $0x84] sm:$0xff]
    %v125 = vld [vmem:[#allocation5 + $0x8c] sm:$0xf]
    %v126 = vld [vmem:[#allocation5 + $0x90] sm:$0xff]
    %v127 = vld [vmem:[#allocation5 + $0x98] sm:$0xf]
    %v128 = vld [vmem:[#allocation5 + $0x9c] sm:$0xff]
    %v129 = vld [vmem:[#allocation5 + $0xa4] sm:$0xf]
    %v130 = vld [vmem:[#allocation5 + $0xa8] sm:$0xff]
    %v131 = vld [vmem:[#allocation5 + $0xb0] sm:$0xf]
    %v132 = vld [vmem:[#allocation5 + $0xb4] sm:$0xff]
    %v133 = vld [vmem:[#allocation5 + $0xbc] sm:$0xf]
    %v134 = vld [vmem:[%s3] sm:$0x7]
    %v136 = vlaneseq
    %v137 = vshrl.u32 %v136, 7
    %v138 = vsub.s32 0, %v137
    %v139 = vrot.slane %v134, %v138
    %v140 = vlaneseq
    %v141 = vshrl.u32 %v140, 7
    %v142 = vsub.s32 1, %v141
    %v143 = vrot.slane %v134, %v142
    %v144 = vlaneseq
    %v145 = vshrl.u32 %v144, 7
    %v146 = vsub.s32 2, %v145
    %v147 = vrot.slane %v134, %v146
    %v153 = vunpack.c.l.b16 %v98
    %v154 = vunpack.c.l.b16 %v99
    %v155 = vpack.c.b16 %v154, %v153
    %v189 = vunpack.c.l.b16 %v102
    %v190 = vunpack.c.h.b16 %v102
    %v191 = vunpack.c.l.b16 %v103
    %v192 = vunpack.c.l.b16 %v104
    %v193 = vunpack.c.h.b16 %v104
    %v194 = vunpack.c.l.b16 %v105
    %v195 = vunpack.c.l.b16 %v106
    %v196 = vunpack.c.h.b16 %v106
    %v197 = vunpack.c.l.b16 %v107
    %v198 = vunpack.c.l.b16 %v108
    %v199 = vunpack.c.h.b16 %v108
    %v200 = vunpack.c.l.b16 %v109
    %v201 = vunpack.c.l.b16 %v110
    %v202 = vunpack.c.h.b16 %v110
    %v203 = vunpack.c.l.b16 %v111
    %v204 = vunpack.c.l.b16 %v112
    %v205 = vunpack.c.h.b16 %v112
    %v206 = vunpack.c.l.b16 %v113
    %v207 = vunpack.c.l.b16 %v114
    %v208 = vunpack.c.h.b16 %v114
    %v209 = vunpack.c.l.b16 %v115
    %v210 = vunpack.c.l.b16 %v116
    %v211 = vunpack.c.h.b16 %v116
    %v212 = vunpack.c.l.b16 %v117
    %v213 = vunpack.c.l.b16 %v118
    %v214 = vunpack.c.h.b16 %v118
    %v215 = vunpack.c.l.b16 %v119
    %v216 = vunpack.c.l.b16 %v120
    %v217 = vunpack.c.h.b16 %v120
    %v218 = vunpack.c.l.b16 %v121
    %v219 = vunpack.c.l.b16 %v122
    %v220 = vunpack.c.h.b16 %v122
    %v221 = vunpack.c.l.b16 %v123
    %v222 = vunpack.c.l.b16 %v124
    %v223 = vunpack.c.h.b16 %v124
    %v224 = vunpack.c.l.b16 %v125
    %v225 = vunpack.c.l.b16 %v126
    %v226 = vunpack.c.h.b16 %v126
    %v227 = vunpack.c.l.b16 %v127
    %v228 = vunpack.c.l.b16 %v128
    %v229 = vunpack.c.h.b16 %v128
    %v230 = vunpack.c.l.b16 %v129
    %v231 = vunpack.c.l.b16 %v130
    %v232 = vunpack.c.h.b16 %v130
    %v233 = vunpack.c.l.b16 %v131
    %v234 = vunpack.c.l.b16 %v132
    %v235 = vunpack.c.h.b16 %v132
    %v236 = vunpack.c.l.b16 %v133
    %v237 = vpack.c.b16 %v192, %v189
    %v238 = vpack.c.b16 %v193, %v190
    %v239 = vpack.c.b16 %v194, %v191
    %v240 = vpack.c.b16 %v198, %v195
    %v241 = vpack.c.b16 %v199, %v196
    %v242 = vpack.c.b16 %v200, %v197
    %v243 = vpack.c.b16 %v204, %v201
    %v244 = vpack.c.b16 %v205, %v202
    %v245 = vpack.c.b16 %v206, %v203
    %v246 = vpack.c.b16 %v210, %v207
    %v247 = vpack.c.b16 %v211, %v208
    %v248 = vpack.c.b16 %v212, %v209
    %v249 = vpack.c.b16 %v216, %v213
    %v250 = vpack.c.b16 %v217, %v214
    %v251 = vpack.c.b16 %v218, %v215
    %v252 = vpack.c.b16 %v222, %v219
    %v253 = vpack.c.b16 %v223, %v220
    %v254 = vpack.c.b16 %v224, %v221
    %v255 = vpack.c.b16 %v228, %v225
    %v256 = vpack.c.b16 %v229, %v226
    %v257 = vpack.c.b16 %v230, %v227
    %v258 = vpack.c.b16 %v234, %v231
    %v259 = vpack.c.b16 %v235, %v232
    %v260 = vpack.c.b16 %v236, %v233
    %285 = vmatprep.subr.bf16.mxu0 %v238
    %286 = vmatpush1.bf16.msra.mxu0 %v237
    %287 = vmatprep.subr.bf16.mxu0 %v241
    %288 = vmatpush1.bf16.msra.mxu0 %v240
    %289 = vmatprep.subr.bf16.mxu0 %v244
    %290 = vmatpush1.bf16.msra.mxu0 %v243
    %291 = vmatprep.subr.bf16.mxu0 %v247
    %292 = vmatpush1.bf16.msra.mxu0 %v246
    %293 = vmatprep.subr.bf16.mxu0 %v250
    %294 = vmatpush1.bf16.msra.mxu0 %v249
    %295 = vmatprep.subr.bf16.mxu0 %v253
    %296 = vmatpush1.bf16.msra.mxu0 %v252
    %297 = vmatprep.subr.bf16.mxu0 %v256
    %298 = vmatpush1.bf16.msra.mxu0 %v255
    %299 = vmatprep.subr.bf16.mxu0 %v259
    %300 = vmatpush1.bf16.msra.mxu0 %v258
    %301 = vmatprep.subr.bf16.mxu0 0
    %302 = vmatpush1.bf16.msra.mxu0 0
    %303 = vmatprep.subr.bf16.mxu0 0
    %304 = vmatpush1.bf16.msra.mxu0 0
    %305 = vmatprep.subr.bf16.mxu0 0
    %306 = vmatpush1.bf16.msra.mxu0 0
    %307 = vmatprep.subr.bf16.mxu0 0
    %308 = vmatpush1.bf16.msra.mxu0 0
    %309 = vmatprep.subr.bf16.mxu0 0
    %310 = vmatpush1.bf16.msra.mxu0 0
    %311 = vmatprep.subr.bf16.mxu0 0
    %312 = vmatpush1.bf16.msra.mxu0 0
    %313 = vmatprep.subr.bf16.mxu0 0
    %314 = vmatpush1.bf16.msra.mxu0 0
    %315 = vmatprep.subr.bf16.mxu0 0
    %316 = vmatpush1.bf16.msra.mxu0 0
    %317 = vmatprep.mubr.bf16.mxu0 0
    %318 = vmatmul.mubr.bf16.gmra.mrb[0].mxu0 %v155
    %v319 = vpop.f32.mrb[0].mxu0
    %v320 = vadd.f32 %v139, %v319
    %v321 = vpop.f32.mrb[0].mxu0
    %v322 = vadd.f32 %v143, %v321
    %v323 = vpop.f32.mrb[0].mxu0
    %v324 = vadd.f32 %v139, %v323
    %v325 = vpop.f32.mrb[0].mxu0
    %v326 = vadd.f32 %v143, %v325
    %327 = vdwg.mxu0
    %328 = vmatprep.subr.bf16.mxu0 0
    %329 = vmatpush1.bf16.msra.mxu0 %v239
    %330 = vmatprep.subr.bf16.mxu0 0
    %331 = vmatpush1.bf16.msra.mxu0 %v242
    %332 = vmatprep.subr.bf16.mxu0 0
    %333 = vmatpush1.bf16.msra.mxu0 %v245
    %334 = vmatprep.subr.bf16.mxu0 0
    %335 = vmatpush1.bf16.msra.mxu0 %v248
    %336 = vmatprep.subr.bf16.mxu0 0
    %337 = vmatpush1.bf16.msra.mxu0 %v251
    %338 = vmatprep.subr.bf16.mxu0 0
    %339 = vmatpush1.bf16.msra.mxu0 %v254
    %340 = vmatprep.subr.bf16.mxu0 0
    %341 = vmatpush1.bf16.msra.mxu0 %v257
    %342 = vmatprep.subr.bf16.mxu0 0
    %343 = vmatpush1.bf16.msra.mxu0 %v260
    %344 = vmatprep.subr.bf16.mxu0 0
    %345 = vmatpush1.bf16.msra.mxu0 0
    %346 = vmatprep.subr.bf16.mxu0 0
    %347 = vmatpush1.bf16.msra.mxu0 0
    %348 = vmatprep.subr.bf16.mxu0 0
    %349 = vmatpush1.bf16.msra.mxu0 0
    %350 = vmatprep.subr.bf16.mxu0 0
    %351 = vmatpush1.bf16.msra.mxu0 0
    %352 = vmatprep.subr.bf16.mxu0 0
    %353 = vmatpush1.bf16.msra.mxu0 0
    %354 = vmatprep.subr.bf16.mxu0 0
    %355 = vmatpush1.bf16.msra.mxu0 0
    %356 = vmatprep.subr.bf16.mxu0 0
    %357 = vmatpush1.bf16.msra.mxu0 0
    %358 = vmatprep.subr.bf16.mxu0 0
    %359 = vmatpush1.bf16.msra.mxu0 0
    %360 = vmatprep.mubr.bf16.mxu0 0
    %361 = vmatmul.mubr.bf16.gmra.mrb[0].mxu0 %v155
    %v362 = vpop.f32.mrb[0].mxu0
    %v363 = vadd.f32 %v147, %v362
    %v364 = vpop.f32.mrb[0].mxu0
    %v365 = vpop.f32.mrb[0].mxu0
    %v366 = vadd.f32 %v147, %v365
    %v367 = vpop.f32.mrb[0].mxu0
    %368 = vdwg.mxu0
    %v369 = vpack.c.bf16 %v324, %v320
    %v370 = vpack.c.bf16 %v326, %v322
    %v371 = vpack.c.bf16 %v366, %v363
    %373 = vrot.lane.b32.xlu0 %v369, 96
    %v374 = vpop.permute.xlu0 %373
    %375 = vrot.lane.b32.xlu0 %v369, 64
    %v376 = vpop.permute.xlu0 %375
    %377 = vrot.lane.b32.xlu0 %v369, 32
    %v378 = vpop.permute.xlu0 %377
    %v381 = vpack.i.b16 %v374, %v369
    %v383 = vshrl.u32 %v369, 16
    %v384 = vshrl.u32 %v374, 16
    %v385 = vpack.i.b16 %v384, %v383
    %v389 = vpack.i.b16 %v378, %v376
    %v391 = vshrl.u32 %v376, 16
    %v392 = vshrl.u32 %v378, 16
    %v393 = vpack.i.b16 %v392, %v391
    %v396 = vpack.i.b16 0, 0
    %v398 = vshrl.u32 0, 16
    %v399 = vpack.i.b16 %v398, %v398
    %v401 = vcombine.high %v381, %v396
    %v403 = vunpack.c.l.s4 1983009808
    %v404 = vunpack.c.0.s8 %v403
    %v405 = vlaneseq
    %v406 = vshrl.u32 %v405, 7
    %v407 = vsub.s32 %v404, %v406
    %v408 = vrot.slane %v381, %v407
    %v410 = vunpack.c.l.s4 1983009808
    %v411 = vunpack.c.0.s8 %v410
    %v412 = vlaneseq
    %v413 = vshrl.u32 %v412, 7
    %v414 = vsub.s32 %v411, %v413
    %v415 = vrot.slane %v401, %v414
    %v416 = vcombine.high %v389, %v396
    %v418 = vunpack.c.l.s4 1983009808
    %v419 = vunpack.c.0.s8 %v418
    %v420 = vlaneseq
    %v421 = vshrl.u32 %v420, 7
    %v422 = vsub.s32 %v419, %v421
    %v423 = vrot.slane %v389, %v422
    %v425 = vunpack.c.l.s4 1983009808
    %v426 = vunpack.c.0.s8 %v425
    %v427 = vlaneseq
    %v428 = vshrl.u32 %v427, 7
    %v429 = vsub.s32 %v426, %v428
    %v430 = vrot.slane %v416, %v429
    %v431 = vcombine.low %v408, %v423
    %v432 = vcombine.high %v408, %v423
    %v434 = vunpack.c.l.s4 1934713408
    %v435 = vunpack.c.0.s8 %v434
    %v436 = vlaneseq
    %v437 = vshrl.u32 %v436, 7
    %v438 = vsub.s32 %v435, %v437
    %v439 = vrot.slane %v431, %v438
    %v441 = vunpack.c.l.s4 1934713408
    %v442 = vunpack.c.0.s8 %v441
    %v443 = vlaneseq
    %v444 = vshrl.u32 %v443, 7
    %v445 = vsub.s32 %v442, %v444
    %v446 = vrot.slane %v432, %v445
    %v447 = vcombine.low %v415, %v430
    %v448 = vcombine.high %v415, %v430
    %v450 = vunpack.c.l.s4 1934713408
    %v451 = vunpack.c.0.s8 %v450
    %v452 = vlaneseq
    %v453 = vshrl.u32 %v452, 7
    %v454 = vsub.s32 %v451, %v453
    %v455 = vrot.slane %v447, %v454
    %v457 = vunpack.c.l.s4 1934713408
    %v458 = vunpack.c.0.s8 %v457
    %v459 = vlaneseq
    %v460 = vshrl.u32 %v459, 7
    %v461 = vsub.s32 %v458, %v460
    %v462 = vrot.slane %v448, %v461
    %v463 = vcombine.high %v439, 0
    %v464 = vcombine.high %v446, 0
    %v465 = vcombine.high %v455, 0
    %v466 = vcombine.high %v462, 0
    %v467 = vcombine.high %v385, %v399
    %v469 = vunpack.c.l.s4 1983009808
    %v470 = vunpack.c.0.s8 %v469
    %v471 = vlaneseq
    %v472 = vshrl.u32 %v471, 7
    %v473 = vsub.s32 %v470, %v472
    %v474 = vrot.slane %v385, %v473
    %v476 = vunpack.c.l.s4 1983009808
    %v477 = vunpack.c.0.s8 %v476
    %v478 = vlaneseq
    %v479 = vshrl.u32 %v478, 7
    %v480 = vsub.s32 %v477, %v479
    %v481 = vrot.slane %v467, %v480
    %v482 = vcombine.high %v393, %v399
    %v484 = vunpack.c.l.s4 1983009808
    %v485 = vunpack.c.0.s8 %v484
    %v486 = vlaneseq
    %v487 = vshrl.u32 %v486, 7
    %v488 = vsub.s32 %v485, %v487
    %v489 = vrot.slane %v393, %v488
    %v491 = vunpack.c.l.s4 1983009808
    %v492 = vunpack.c.0.s8 %v491
    %v493 = vlaneseq
    %v494 = vshrl.u32 %v493, 7
    %v495 = vsub.s32 %v492, %v494
    %v496 = vrot.slane %v482, %v495
    %v497 = vcombine.low %v474, %v489
    %v498 = vcombine.high %v474, %v489
    %v500 = vunpack.c.l.s4 1934713408
    %v501 = vunpack.c.0.s8 %v500
    %v502 = vlaneseq
    %v503 = vshrl.u32 %v502, 7
    %v504 = vsub.s32 %v501, %v503
    %v505 = vrot.slane %v497, %v504
    %v507 = vunpack.c.l.s4 1934713408
    %v508 = vunpack.c.0.s8 %v507
    %v509 = vlaneseq
    %v510 = vshrl.u32 %v509, 7
    %v511 = vsub.s32 %v508, %v510
    %v512 = vrot.slane %v498, %v511
    %v513 = vcombine.low %v481, %v496
    %v514 = vcombine.high %v481, %v496
    %v516 = vunpack.c.l.s4 1934713408
    %v517 = vunpack.c.0.s8 %v516
    %v518 = vlaneseq
    %v519 = vshrl.u32 %v518, 7
    %v520 = vsub.s32 %v517, %v519
    %v521 = vrot.slane %v513, %v520
    %v523 = vunpack.c.l.s4 1934713408
    %v524 = vunpack.c.0.s8 %v523
    %v525 = vlaneseq
    %v526 = vshrl.u32 %v525, 7
    %v527 = vsub.s32 %v524, %v526
    %v528 = vrot.slane %v514, %v527
    %v529 = vcombine.high %v505, 0
    %v530 = vcombine.high %v512, 0
    %v531 = vcombine.high %v521, 0
    %v532 = vcombine.high %v528, 0
    %v533 = vcombine.low %v439, %v446
    %v535 = vunpack.c.l.s4 1983009808
    %v536 = vunpack.c.0.s8 %v535
    %v537 = vlaneseq
    %v538 = vshrl.u32 %v537, 7
    %v539 = vsub.s32 %v536, %v538
    %v540 = vrot.slane %v533, %v539
    %v541 = vcombine.low %v463, %v464
    %v543 = vunpack.c.l.s4 1983009808
    %v544 = vunpack.c.0.s8 %v543
    %v545 = vlaneseq
    %v546 = vshrl.u32 %v545, 7
    %v547 = vsub.s32 %v544, %v546
    %v548 = vrot.slane %v541, %v547
    %v549 = vcombine.low %v540, %v548
    %v551 = vunpack.c.l.s4 1934713408
    %v552 = vunpack.c.0.s8 %v551
    %v553 = vlaneseq
    %v554 = vshrl.u32 %v553, 7
    %v555 = vsub.s32 %v552, %v554
    %v556 = vrot.slane %v549, %v555
    %v557 = vcombine.high %v556, 0
    %v558 = vcombine.low %v505, %v512
    %v560 = vunpack.c.l.s4 1983009808
    %v561 = vunpack.c.0.s8 %v560
    %v562 = vlaneseq
    %v563 = vshrl.u32 %v562, 7
    %v564 = vsub.s32 %v561, %v563
    %v565 = vrot.slane %v558, %v564
    %v566 = vcombine.low %v529, %v530
    %v568 = vunpack.c.l.s4 1983009808
    %v569 = vunpack.c.0.s8 %v568
    %v570 = vlaneseq
    %v571 = vshrl.u32 %v570, 7
    %v572 = vsub.s32 %v569, %v571
    %v573 = vrot.slane %v566, %v572
    %v574 = vcombine.low %v565, %v573
    %v576 = vunpack.c.l.s4 1934713408
    %v577 = vunpack.c.0.s8 %v576
    %v578 = vlaneseq
    %v579 = vshrl.u32 %v578, 7
    %v580 = vsub.s32 %v577, %v579
    %v581 = vrot.slane %v574, %v580
    %v582 = vcombine.high %v581, 0
    %v583 = vcombine.low %v455, %v462
    %v585 = vunpack.c.l.s4 1983009808
    %v586 = vunpack.c.0.s8 %v585
    %v587 = vlaneseq
    %v588 = vshrl.u32 %v587, 7
    %v589 = vsub.s32 %v586, %v588
    %v590 = vrot.slane %v583, %v589
    %v591 = vcombine.low %v465, %v466
    %v593 = vunpack.c.l.s4 1983009808
    %v594 = vunpack.c.0.s8 %v593
    %v595 = vlaneseq
    %v596 = vshrl.u32 %v595, 7
    %v597 = vsub.s32 %v594, %v596
    %v598 = vrot.slane %v591, %v597
    %v599 = vcombine.low %v590, %v598
    %v601 = vunpack.c.l.s4 1934713408
    %v602 = vunpack.c.0.s8 %v601
    %v603 = vlaneseq
    %v604 = vshrl.u32 %v603, 7
    %v605 = vsub.s32 %v602, %v604
    %v606 = vrot.slane %v599, %v605
    %v607 = vcombine.high %v606, 0
    %v608 = vcombine.low %v521, %v528
    %v610 = vunpack.c.l.s4 1983009808
    %v611 = vunpack.c.0.s8 %v610
    %v612 = vlaneseq
    %v613 = vshrl.u32 %v612, 7
    %v614 = vsub.s32 %v611, %v613
    %v615 = vrot.slane %v608, %v614
    %v616 = vcombine.low %v531, %v532
    %v618 = vunpack.c.l.s4 1983009808
    %v619 = vunpack.c.0.s8 %v618
    %v620 = vlaneseq
    %v621 = vshrl.u32 %v620, 7
    %v622 = vsub.s32 %v619, %v621
    %v623 = vrot.slane %v616, %v622
    %v624 = vcombine.low %v615, %v623
    %v626 = vunpack.c.l.s4 1934713408
    %v627 = vunpack.c.0.s8 %v626
    %v628 = vlaneseq
    %v629 = vshrl.u32 %v628, 7
    %v630 = vsub.s32 %v627, %v629
    %v631 = vrot.slane %v624, %v630
    %v632 = vcombine.high %v631, 0
    %v635 = vpack.i.b16 %v581, %v556
    %v636 = vshrl.u32 %v556, 16
    %v637 = vshrl.u32 %v581, 16
    %v638 = vpack.i.b16 %v637, %v636
    %v641 = vpack.i.b16 %v582, %v557
    %v642 = vshrl.u32 %v557, 16
    %v643 = vshrl.u32 %v582, 16
    %v644 = vpack.i.b16 %v643, %v642
    %v647 = vpack.i.b16 %v631, %v606
    %v648 = vshrl.u32 %v606, 16
    %v649 = vshrl.u32 %v631, 16
    %v650 = vpack.i.b16 %v649, %v648
    %v653 = vpack.i.b16 %v632, %v607
    %v654 = vshrl.u32 %v607, 16
    %v655 = vshrl.u32 %v632, 16
    %v656 = vpack.i.b16 %v655, %v654
    %658 = vrot.lane.b32.xlu0 %v370, 96
    %v659 = vpop.permute.xlu0 %658
    %660 = vrot.lane.b32.xlu0 %v370, 64
    %v661 = vpop.permute.xlu0 %660
    %662 = vrot.lane.b32.xlu0 %v370, 32
    %v663 = vpop.permute.xlu0 %662
    %v666 = vpack.i.b16 %v659, %v370
    %v668 = vshrl.u32 %v370, 16
    %v669 = vshrl.u32 %v659, 16
    %v670 = vpack.i.b16 %v669, %v668
    %v674 = vpack.i.b16 %v663, %v661
    %v676 = vshrl.u32 %v661, 16
    %v677 = vshrl.u32 %v663, 16
    %v678 = vpack.i.b16 %v677, %v676
    %v680 = vcombine.high %v666, %v396
    %v682 = vunpack.c.l.s4 1983009808
    %v683 = vunpack.c.0.s8 %v682
    %v684 = vlaneseq
    %v685 = vshrl.u32 %v684, 7
    %v686 = vsub.s32 %v683, %v685
    %v687 = vrot.slane %v666, %v686
    %v689 = vunpack.c.l.s4 1983009808
    %v690 = vunpack.c.0.s8 %v689
    %v691 = vlaneseq
    %v692 = vshrl.u32 %v691, 7
    %v693 = vsub.s32 %v690, %v692
    %v694 = vrot.slane %v680, %v693
    %v695 = vcombine.high %v674, %v396
    %v697 = vunpack.c.l.s4 1983009808
    %v698 = vunpack.c.0.s8 %v697
    %v699 = vlaneseq
    %v700 = vshrl.u32 %v699, 7
    %v701 = vsub.s32 %v698, %v700
    %v702 = vrot.slane %v674, %v701
    %v704 = vunpack.c.l.s4 1983009808
    %v705 = vunpack.c.0.s8 %v704
    %v706 = vlaneseq
    %v707 = vshrl.u32 %v706, 7
    %v708 = vsub.s32 %v705, %v707
    %v709 = vrot.slane %v695, %v708
    %v710 = vcombine.low %v687, %v702
    %v711 = vcombine.high %v687, %v702
    %v713 = vunpack.c.l.s4 1934713408
    %v714 = vunpack.c.0.s8 %v713
    %v715 = vlaneseq
    %v716 = vshrl.u32 %v715, 7
    %v717 = vsub.s32 %v714, %v716
    %v718 = vrot.slane %v710, %v717
    %v720 = vunpack.c.l.s4 1934713408
    %v721 = vunpack.c.0.s8 %v720
    %v722 = vlaneseq
    %v723 = vshrl.u32 %v722, 7
    %v724 = vsub.s32 %v721, %v723
    %v725 = vrot.slane %v711, %v724
    %v726 = vcombine.low %v694, %v709
    %v727 = vcombine.high %v694, %v709
    %v729 = vunpack.c.l.s4 1934713408
    %v730 = vunpack.c.0.s8 %v729
    %v731 = vlaneseq
    %v732 = vshrl.u32 %v731, 7
    %v733 = vsub.s32 %v730, %v732
    %v734 = vrot.slane %v726, %v733
    %v736 = vunpack.c.l.s4 1934713408
    %v737 = vunpack.c.0.s8 %v736
    %v738 = vlaneseq
    %v739 = vshrl.u32 %v738, 7
    %v740 = vsub.s32 %v737, %v739
    %v741 = vrot.slane %v727, %v740
    %v742 = vcombine.high %v718, 0
    %v743 = vcombine.high %v725, 0
    %v744 = vcombine.high %v734, 0
    %v745 = vcombine.high %v741, 0
    %v746 = vcombine.high %v670, %v399
    %v748 = vunpack.c.l.s4 1983009808
    %v749 = vunpack.c.0.s8 %v748
    %v750 = vlaneseq
    %v751 = vshrl.u32 %v750, 7
    %v752 = vsub.s32 %v749, %v751
    %v753 = vrot.slane %v670, %v752
    %v755 = vunpack.c.l.s4 1983009808
    %v756 = vunpack.c.0.s8 %v755
    %v757 = vlaneseq
    %v758 = vshrl.u32 %v757, 7
    %v759 = vsub.s32 %v756, %v758
    %v760 = vrot.slane %v746, %v759
    %v761 = vcombine.high %v678, %v399
    %v763 = vunpack.c.l.s4 1983009808
    %v764 = vunpack.c.0.s8 %v763
    %v765 = vlaneseq
    %v766 = vshrl.u32 %v765, 7
    %v767 = vsub.s32 %v764, %v766
    %v768 = vrot.slane %v678, %v767
    %v770 = vunpack.c.l.s4 1983009808
    %v771 = vunpack.c.0.s8 %v770
    %v772 = vlaneseq
    %v773 = vshrl.u32 %v772, 7
    %v774 = vsub.s32 %v771, %v773
    %v775 = vrot.slane %v761, %v774
    %v776 = vcombine.low %v753, %v768
    %v777 = vcombine.high %v753, %v768
    %v779 = vunpack.c.l.s4 1934713408
    %v780 = vunpack.c.0.s8 %v779
    %v781 = vlaneseq
    %v782 = vshrl.u32 %v781, 7
    %v783 = vsub.s32 %v780, %v782
    %v784 = vrot.slane %v776, %v783
    %v786 = vunpack.c.l.s4 1934713408
    %v787 = vunpack.c.0.s8 %v786
    %v788 = vlaneseq
    %v789 = vshrl.u32 %v788, 7
    %v790 = vsub.s32 %v787, %v789
    %v791 = vrot.slane %v777, %v790
    %v792 = vcombine.low %v760, %v775
    %v793 = vcombine.high %v760, %v775
    %v795 = vunpack.c.l.s4 1934713408
    %v796 = vunpack.c.0.s8 %v795
    %v797 = vlaneseq
    %v798 = vshrl.u32 %v797, 7
    %v799 = vsub.s32 %v796, %v798
    %v800 = vrot.slane %v792, %v799
    %v802 = vunpack.c.l.s4 1934713408
    %v803 = vunpack.c.0.s8 %v802
    %v804 = vlaneseq
    %v805 = vshrl.u32 %v804, 7
    %v806 = vsub.s32 %v803, %v805
    %v807 = vrot.slane %v793, %v806
    %v808 = vcombine.high %v784, 0
    %v809 = vcombine.high %v791, 0
    %v810 = vcombine.high %v800, 0
    %v811 = vcombine.high %v807, 0
    %v812 = vcombine.low %v718, %v725
    %v814 = vunpack.c.l.s4 1983009808
    %v815 = vunpack.c.0.s8 %v814
    %v816 = vlaneseq
    %v817 = vshrl.u32 %v816, 7
    %v818 = vsub.s32 %v815, %v817
    %v819 = vrot.slane %v812, %v818
    %v820 = vcombine.low %v742, %v743
    %v822 = vunpack.c.l.s4 1983009808
    %v823 = vunpack.c.0.s8 %v822
    %v824 = vlaneseq
    %v825 = vshrl.u32 %v824, 7
    %v826 = vsub.s32 %v823, %v825
    %v827 = vrot.slane %v820, %v826
    %v828 = vcombine.low %v819, %v827
    %v830 = vunpack.c.l.s4 1934713408
    %v831 = vunpack.c.0.s8 %v830
    %v832 = vlaneseq
    %v833 = vshrl.u32 %v832, 7
    %v834 = vsub.s32 %v831, %v833
    %v835 = vrot.slane %v828, %v834
    %v836 = vcombine.high %v835, 0
    %v837 = vcombine.low %v784, %v791
    %v839 = vunpack.c.l.s4 1983009808
    %v840 = vunpack.c.0.s8 %v839
    %v841 = vlaneseq
    %v842 = vshrl.u32 %v841, 7
    %v843 = vsub.s32 %v840, %v842
    %v844 = vrot.slane %v837, %v843
    %v845 = vcombine.low %v808, %v809
    %v847 = vunpack.c.l.s4 1983009808
    %v848 = vunpack.c.0.s8 %v847
    %v849 = vlaneseq
    %v850 = vshrl.u32 %v849, 7
    %v851 = vsub.s32 %v848, %v850
    %v852 = vrot.slane %v845, %v851
    %v853 = vcombine.low %v844, %v852
    %v855 = vunpack.c.l.s4 1934713408
    %v856 = vunpack.c.0.s8 %v855
    %v857 = vlaneseq
    %v858 = vshrl.u32 %v857, 7
    %v859 = vsub.s32 %v856, %v858
    %v860 = vrot.slane %v853, %v859
    %v861 = vcombine.high %v860, 0
    %v862 = vcombine.low %v734, %v741
    %v864 = vunpack.c.l.s4 1983009808
    %v865 = vunpack.c.0.s8 %v864
    %v866 = vlaneseq
    %v867 = vshrl.u32 %v866, 7
    %v868 = vsub.s32 %v865, %v867
    %v869 = vrot.slane %v862, %v868
    %v870 = vcombine.low %v744, %v745
    %v872 = vunpack.c.l.s4 1983009808
    %v873 = vunpack.c.0.s8 %v872
    %v874 = vlaneseq
    %v875 = vshrl.u32 %v874, 7
    %v876 = vsub.s32 %v873, %v875
    %v877 = vrot.slane %v870, %v876
    %v878 = vcombine.low %v869, %v877
    %v880 = vunpack.c.l.s4 1934713408
    %v881 = vunpack.c.0.s8 %v880
    %v882 = vlaneseq
    %v883 = vshrl.u32 %v882, 7
    %v884 = vsub.s32 %v881, %v883
    %v885 = vrot.slane %v878, %v884
    %v886 = vcombine.high %v885, 0
    %v887 = vcombine.low %v800, %v807
    %v889 = vunpack.c.l.s4 1983009808
    %v890 = vunpack.c.0.s8 %v889
    %v891 = vlaneseq
    %v892 = vshrl.u32 %v891, 7
    %v893 = vsub.s32 %v890, %v892
    %v894 = vrot.slane %v887, %v893
    %v895 = vcombine.low %v810, %v811
    %v897 = vunpack.c.l.s4 1983009808
    %v898 = vunpack.c.0.s8 %v897
    %v899 = vlaneseq
    %v900 = vshrl.u32 %v899, 7
    %v901 = vsub.s32 %v898, %v900
    %v902 = vrot.slane %v895, %v901
    %v903 = vcombine.low %v894, %v902
    %v905 = vunpack.c.l.s4 1934713408
    %v906 = vunpack.c.0.s8 %v905
    %v907 = vlaneseq
    %v908 = vshrl.u32 %v907, 7
    %v909 = vsub.s32 %v906, %v908
    %v910 = vrot.slane %v903, %v909
    %v911 = vcombine.high %v910, 0
    %v914 = vpack.i.b16 %v860, %v835
    %v915 = vshrl.u32 %v835, 16
    %v916 = vshrl.u32 %v860, 16
    %v917 = vpack.i.b16 %v916, %v915
    %v920 = vpack.i.b16 %v861, %v836
    %v921 = vshrl.u32 %v836, 16
    %v922 = vshrl.u32 %v861, 16
    %v923 = vpack.i.b16 %v922, %v921
    %v926 = vpack.i.b16 %v910, %v885
    %v927 = vshrl.u32 %v885, 16
    %v928 = vshrl.u32 %v910, 16
    %v929 = vpack.i.b16 %v928, %v927
    %v932 = vpack.i.b16 %v911, %v886
    %v933 = vshrl.u32 %v886, 16
    %v934 = vshrl.u32 %v911, 16
    %v935 = vpack.i.b16 %v934, %v933
    %937 = vrot.lane.b32.xlu0 %v371, 96
    %v938 = vpop.permute.xlu0 %937
    %939 = vrot.lane.b32.xlu0 %v371, 64
    %v940 = vpop.permute.xlu0 %939
    %941 = vrot.lane.b32.xlu0 %v371, 32
    %v942 = vpop.permute.xlu0 %941
    %v945 = vpack.i.b16 %v938, %v371
    %v947 = vshrl.u32 %v371, 16
    %v948 = vshrl.u32 %v938, 16
    %v949 = vpack.i.b16 %v948, %v947
    %v953 = vpack.i.b16 %v942, %v940
    %v955 = vshrl.u32 %v940, 16
    %v956 = vshrl.u32 %v942, 16
    %v957 = vpack.i.b16 %v956, %v955
    %v959 = vcombine.high %v945, %v396
    %v961 = vunpack.c.l.s4 1983009808
    %v962 = vunpack.c.0.s8 %v961
    %v963 = vlaneseq
    %v964 = vshrl.u32 %v963, 7
    %v965 = vsub.s32 %v962, %v964
    %v966 = vrot.slane %v945, %v965
    %v968 = vunpack.c.l.s4 1983009808
    %v969 = vunpack.c.0.s8 %v968
    %v970 = vlaneseq
    %v971 = vshrl.u32 %v970, 7
    %v972 = vsub.s32 %v969, %v971
    %v973 = vrot.slane %v959, %v972
    %v974 = vcombine.high %v953, %v396
    %v976 = vunpack.c.l.s4 1983009808
    %v977 = vunpack.c.0.s8 %v976
    %v978 = vlaneseq
    %v979 = vshrl.u32 %v978, 7
    %v980 = vsub.s32 %v977, %v979
    %v981 = vrot.slane %v953, %v980
    %v983 = vunpack.c.l.s4 1983009808
    %v984 = vunpack.c.0.s8 %v983
    %v985 = vlaneseq
    %v986 = vshrl.u32 %v985, 7
    %v987 = vsub.s32 %v984, %v986
    %v988 = vrot.slane %v974, %v987
    %v989 = vcombine.low %v966, %v981
    %v990 = vcombine.high %v966, %v981
    %v992 = vunpack.c.l.s4 1934713408
    %v993 = vunpack.c.0.s8 %v992
    %v994 = vlaneseq
    %v995 = vshrl.u32 %v994, 7
    %v996 = vsub.s32 %v993, %v995
    %v997 = vrot.slane %v989, %v996
    %v999 = vunpack.c.l.s4 1934713408
    %v1000 = vunpack.c.0.s8 %v999
    %v1001 = vlaneseq
    %v1002 = vshrl.u32 %v1001, 7
    %v1003 = vsub.s32 %v1000, %v1002
    %v1004 = vrot.slane %v990, %v1003
    %v1005 = vcombine.low %v973, %v988
    %v1006 = vcombine.high %v973, %v988
    %v1008 = vunpack.c.l.s4 1934713408
    %v1009 = vunpack.c.0.s8 %v1008
    %v1010 = vlaneseq
    %v1011 = vshrl.u32 %v1010, 7
    %v1012 = vsub.s32 %v1009, %v1011
    %v1013 = vrot.slane %v1005, %v1012
    %v1015 = vunpack.c.l.s4 1934713408
    %v1016 = vunpack.c.0.s8 %v1015
    %v1017 = vlaneseq
    %v1018 = vshrl.u32 %v1017, 7
    %v1019 = vsub.s32 %v1016, %v1018
    %v1020 = vrot.slane %v1006, %v1019
    %v1021 = vcombine.high %v997, 0
    %v1022 = vcombine.high %v1004, 0
    %v1023 = vcombine.high %v1013, 0
    %v1024 = vcombine.high %v1020, 0
    %v1025 = vcombine.high %v949, %v399
    %v1027 = vunpack.c.l.s4 1983009808
    %v1028 = vunpack.c.0.s8 %v1027
    %v1029 = vlaneseq
    %v1030 = vshrl.u32 %v1029, 7
    %v1031 = vsub.s32 %v1028, %v1030
    %v1032 = vrot.slane %v949, %v1031
    %v1034 = vunpack.c.l.s4 1983009808
    %v1035 = vunpack.c.0.s8 %v1034
    %v1036 = vlaneseq
    %v1037 = vshrl.u32 %v1036, 7
    %v1038 = vsub.s32 %v1035, %v1037
    %v1039 = vrot.slane %v1025, %v1038
    %v1040 = vcombine.high %v957, %v399
    %v1042 = vunpack.c.l.s4 1983009808
    %v1043 = vunpack.c.0.s8 %v1042
    %v1044 = vlaneseq
    %v1045 = vshrl.u32 %v1044, 7
    %v1046 = vsub.s32 %v1043, %v1045
    %v1047 = vrot.slane %v957, %v1046
    %v1049 = vunpack.c.l.s4 1983009808
    %v1050 = vunpack.c.0.s8 %v1049
    %v1051 = vlaneseq
    %v1052 = vshrl.u32 %v1051, 7
    %v1053 = vsub.s32 %v1050, %v1052
    %v1054 = vrot.slane %v1040, %v1053
    %v1055 = vcombine.low %v1032, %v1047
    %v1056 = vcombine.high %v1032, %v1047
    %v1058 = vunpack.c.l.s4 1934713408
    %v1059 = vunpack.c.0.s8 %v1058
    %v1060 = vlaneseq
    %v1061 = vshrl.u32 %v1060, 7
    %v1062 = vsub.s32 %v1059, %v1061
    %v1063 = vrot.slane %v1055, %v1062
    %v1065 = vunpack.c.l.s4 1934713408
    %v1066 = vunpack.c.0.s8 %v1065
    %v1067 = vlaneseq
    %v1068 = vshrl.u32 %v1067, 7
    %v1069 = vsub.s32 %v1066, %v1068
    %v1070 = vrot.slane %v1056, %v1069
    %v1071 = vcombine.low %v1039, %v1054
    %v1072 = vcombine.high %v1039, %v1054
    %v1074 = vunpack.c.l.s4 1934713408
    %v1075 = vunpack.c.0.s8 %v1074
    %v1076 = vlaneseq
    %v1077 = vshrl.u32 %v1076, 7
    %v1078 = vsub.s32 %v1075, %v1077
    %v1079 = vrot.slane %v1071, %v1078
    %v1081 = vunpack.c.l.s4 1934713408
    %v1082 = vunpack.c.0.s8 %v1081
    %v1083 = vlaneseq
    %v1084 = vshrl.u32 %v1083, 7
    %v1085 = vsub.s32 %v1082, %v1084
    %v1086 = vrot.slane %v1072, %v1085
    %v1087 = vcombine.high %v1063, 0
    %v1088 = vcombine.high %v1070, 0
    %v1089 = vcombine.high %v1079, 0
    %v1090 = vcombine.high %v1086, 0
    %v1091 = vcombine.low %v997, %v1004
    %v1093 = vunpack.c.l.s4 1983009808
    %v1094 = vunpack.c.0.s8 %v1093
    %v1095 = vlaneseq
    %v1096 = vshrl.u32 %v1095, 7
    %v1097 = vsub.s32 %v1094, %v1096
    %v1098 = vrot.slane %v1091, %v1097
    %v1099 = vcombine.low %v1021, %v1022
    %v1101 = vunpack.c.l.s4 1983009808
    %v1102 = vunpack.c.0.s8 %v1101
    %v1103 = vlaneseq
    %v1104 = vshrl.u32 %v1103, 7
    %v1105 = vsub.s32 %v1102, %v1104
    %v1106 = vrot.slane %v1099, %v1105
    %v1107 = vcombine.low %v1098, %v1106
    %v1109 = vunpack.c.l.s4 1934713408
    %v1110 = vunpack.c.0.s8 %v1109
    %v1111 = vlaneseq
    %v1112 = vshrl.u32 %v1111, 7
    %v1113 = vsub.s32 %v1110, %v1112
    %v1114 = vrot.slane %v1107, %v1113
    %v1115 = vcombine.high %v1114, 0
    %v1116 = vcombine.low %v1063, %v1070
    %v1118 = vunpack.c.l.s4 1983009808
    %v1119 = vunpack.c.0.s8 %v1118
    %v1120 = vlaneseq
    %v1121 = vshrl.u32 %v1120, 7
    %v1122 = vsub.s32 %v1119, %v1121
    %v1123 = vrot.slane %v1116, %v1122
    %v1124 = vcombine.low %v1087, %v1088
    %v1126 = vunpack.c.l.s4 1983009808
    %v1127 = vunpack.c.0.s8 %v1126
    %v1128 = vlaneseq
    %v1129 = vshrl.u32 %v1128, 7
    %v1130 = vsub.s32 %v1127, %v1129
    %v1131 = vrot.slane %v1124, %v1130
    %v1132 = vcombine.low %v1123, %v1131
    %v1134 = vunpack.c.l.s4 1934713408
    %v1135 = vunpack.c.0.s8 %v1134
    %v1136 = vlaneseq
    %v1137 = vshrl.u32 %v1136, 7
    %v1138 = vsub.s32 %v1135, %v1137
    %v1139 = vrot.slane %v1132, %v1138
    %v1140 = vcombine.high %v1139, 0
    %v1141 = vcombine.low %v1013, %v1020
    %v1143 = vunpack.c.l.s4 1983009808
    %v1144 = vunpack.c.0.s8 %v1143
    %v1145 = vlaneseq
    %v1146 = vshrl.u32 %v1145, 7
    %v1147 = vsub.s32 %v1144, %v1146
    %v1148 = vrot.slane %v1141, %v1147
    %v1149 = vcombine.low %v1023, %v1024
    %v1151 = vunpack.c.l.s4 1983009808
    %v1152 = vunpack.c.0.s8 %v1151
    %v1153 = vlaneseq
    %v1154 = vshrl.u32 %v1153, 7
    %v1155 = vsub.s32 %v1152, %v1154
    %v1156 = vrot.slane %v1149, %v1155
    %v1157 = vcombine.low %v1148, %v1156
    %v1159 = vunpack.c.l.s4 1934713408
    %v1160 = vunpack.c.0.s8 %v1159
    %v1161 = vlaneseq
    %v1162 = vshrl.u32 %v1161, 7
    %v1163 = vsub.s32 %v1160, %v1162
    %v1164 = vrot.slane %v1157, %v1163
    %v1165 = vcombine.high %v1164, 0
    %v1166 = vcombine.low %v1079, %v1086
    %v1168 = vunpack.c.l.s4 1983009808
    %v1169 = vunpack.c.0.s8 %v1168
    %v1170 = vlaneseq
    %v1171 = vshrl.u32 %v1170, 7
    %v1172 = vsub.s32 %v1169, %v1171
    %v1173 = vrot.slane %v1166, %v1172
    %v1174 = vcombine.low %v1089, %v1090
    %v1176 = vunpack.c.l.s4 1983009808
    %v1177 = vunpack.c.0.s8 %v1176
    %v1178 = vlaneseq
    %v1179 = vshrl.u32 %v1178, 7
    %v1180 = vsub.s32 %v1177, %v1179
    %v1181 = vrot.slane %v1174, %v1180
    %v1182 = vcombine.low %v1173, %v1181
    %v1184 = vunpack.c.l.s4 1934713408
    %v1185 = vunpack.c.0.s8 %v1184
    %v1186 = vlaneseq
    %v1187 = vshrl.u32 %v1186, 7
    %v1188 = vsub.s32 %v1185, %v1187
    %v1189 = vrot.slane %v1182, %v1188
    %v1190 = vcombine.high %v1189, 0
    %v1193 = vpack.i.b16 %v1139, %v1114
    %v1194 = vshrl.u32 %v1114, 16
    %v1195 = vshrl.u32 %v1139, 16
    %v1196 = vpack.i.b16 %v1195, %v1194
    %v1199 = vpack.i.b16 %v1140, %v1115
    %v1200 = vshrl.u32 %v1115, 16
    %v1201 = vshrl.u32 %v1140, 16
    %v1202 = vpack.i.b16 %v1201, %v1200
    %v1205 = vpack.i.b16 %v1189, %v1164
    %v1206 = vshrl.u32 %v1164, 16
    %v1207 = vshrl.u32 %v1189, 16
    %v1208 = vpack.i.b16 %v1207, %v1206
    %v1211 = vpack.i.b16 %v1190, %v1165
    %v1212 = vshrl.u32 %v1165, 16
    %v1213 = vshrl.u32 %v1190, 16
    %v1214 = vpack.i.b16 %v1213, %v1212
    %v1215 = vlaneseq
    %v1216 = vshrl.u32 %v1215, 7
    %v1217 = vlaneseq
    %v1218 = vand.u32 %v1217, 127
    %vm1219 = vcmp.ge.s32.totalorder %v1216, %v1218
    %v1220 = vsel %vm1219, 0.0, -10000.0
    %v1221 = vld [vmem:[%s1] sm:$0x1]
    %v1222 = vld [vmem:[%s1 + $0x1] sm:$0x1]
    %v1223 = vsub.f32 1.0, %v1221
    %v1224 = vsub.f32 1.0, %v1222
    %v1225 = vmul.f32 %v1223, -10000.0
    %v1226 = vmul.f32 %v1224, -10000.0
    %vm1227 = vcmask 261120
    %v1229 = vsel %vm1227, %v635, 0
    %v1232 = vsel %vm1227, %v914, 0
    %1234 = vmatprep.subr.bf16.mxu0 0
    %1235 = vmatpush1.bf16.xpose.msra.mxu0 %v1232
    %1236 = vmatprep.subr.bf16.mxu0 0
    %1237 = vmatpush1.bf16.xpose.msra.mxu0 0
    %1238 = vmatprep.subr.bf16.mxu0 0
    %1239 = vmatpush1.bf16.xpose.msra.mxu0 0
    %1240 = vmatprep.subr.bf16.mxu0 0
    %1241 = vmatpush1.bf16.xpose.msra.mxu0 0
    %1242 = vmatprep.subr.bf16.mxu0 0
    %1243 = vmatpush1.bf16.xpose.msra.mxu0 0
    %1244 = vmatprep.subr.bf16.mxu0 0
    %1245 = vmatpush1.bf16.xpose.msra.mxu0 0
    %1246 = vmatprep.subr.bf16.mxu0 0
    %1247 = vmatpush1.bf16.xpose.msra.mxu0 0
    %1248 = vmatprep.subr.bf16.mxu0 0
    %1249 = vmatpush1.bf16.xpose.msra.mxu0 0
    %1250 = vmatprep.subr.bf16.mxu0 0
    %1251 = vmatpush1.bf16.xpose.msra.mxu0 0
    %1252 = vmatprep.subr.bf16.mxu0 0
    %1253 = vmatpush1.bf16.xpose.msra.mxu0 0
    %1254 = vmatprep.subr.bf16.mxu0 0
    %1255 = vmatpush1.bf16.xpose.msra.mxu0 0
    %1256 = vmatprep.subr.bf16.mxu0 0
    %1257 = vmatpush1.bf16.xpose.msra.mxu0 0
    %1258 = vmatprep.subr.bf16.mxu0 0
    %1259 = vmatpush1.bf16.xpose.msra.mxu0 0
    %1260 = vmatprep.subr.bf16.mxu0 0
    %1261 = vmatpush1.bf16.xpose.msra.mxu0 0
    %1262 = vmatprep.subr.bf16.mxu0 0
    %1263 = vmatpush1.bf16.xpose.msra.mxu0 0
    %1264 = vmatprep.subr.bf16.mxu0 0
    %1265 = vmatpush1.bf16.xpose.msra.mxu0 0
    %1266 = vmatprep.mubr.bf16.mxu0 0
    %1267 = vmatmul.mubr.bf16.gmra.mrb[0].mxu0 %v1229
    %v1268 = vpop.f32.mrb[0].mxu0
    %v1269 = vadd.f32 0.0, %v1268
    %v1270 = vpop.f32.mrb[0].mxu0
    %v1271 = vpop.f32.mrb[0].mxu0
    %v1272 = vpop.f32.mrb[0].mxu0
    %1273 = vdwg.mxu0
    %v1275 = vsel %vm1227, %v638, 0
    %v1278 = vsel %vm1227, %v917, 0
    %1280 = vmatprep.subr.bf16.mxu0 0
    %1281 = vmatpush1.bf16.xpose.msra.mxu0 %v1278
    %1282 = vmatprep.subr.bf16.mxu0 0
    %1283 = vmatpush1.bf16.xpose.msra.mxu0 0
    %1284 = vmatprep.subr.bf16.mxu0 0
    %1285 = vmatpush1.bf16.xpose.msra.mxu0 0
    %1286 = vmatprep.subr.bf16.mxu0 0
    %1287 = vmatpush1.bf16.xpose.msra.mxu0 0
    %1288 = vmatprep.subr.bf16.mxu0 0
    %1289 = vmatpush1.bf16.xpose.msra.mxu0 0
    %1290 = vmatprep.subr.bf16.mxu0 0
    %1291 = vmatpush1.bf16.xpose.msra.mxu0 0
    %1292 = vmatprep.subr.bf16.mxu0 0
    %1293 = vmatpush1.bf16.xpose.msra.mxu0 0
    %1294 = vmatprep.subr.bf16.mxu0 0
    %1295 = vmatpush1.bf16.xpose.msra.mxu0 0
    %1296 = vmatprep.subr.bf16.mxu0 0
    %1297 = vmatpush1.bf16.xpose.msra.mxu0 0
    %1298 = vmatprep.subr.bf16.mxu0 0
    %1299 = vmatpush1.bf16.xpose.msra.mxu0 0
    %1300 = vmatprep.subr.bf16.mxu0 0
    %1301 = vmatpush1.bf16.xpose.msra.mxu0 0
    %1302 = vmatprep.subr.bf16.mxu0 0
    %1303 = vmatpush1.bf16.xpose.msra.mxu0 0
    %1304 = vmatprep.subr.bf16.mxu0 0
    %1305 = vmatpush1.bf16.xpose.msra.mxu0 0
    %1306 = vmatprep.subr.bf16.mxu0 0
    %1307 = vmatpush1.bf16.xpose.msra.mxu0 0
    %1308 = vmatprep.subr.bf16.mxu0 0
    %1309 = vmatpush1.bf16.xpose.msra.mxu0 0
    %1310 = vmatprep.subr.bf16.mxu0 0
    %1311 = vmatpush1.bf16.xpose.msra.mxu0 0
    %1312 = vmatprep.mubr.bf16.mxu0 0
    %1313 = vmatmul.mubr.bf16.gmra.mrb[0].mxu0 %v1275
    %v1314 = vpop.f32.mrb[0].mxu0
    %v1315 = vadd.f32 0.0, %v1314
    %v1316 = vpop.f32.mrb[0].mxu0
    %v1317 = vpop.f32.mrb[0].mxu0
    %v1318 = vpop.f32.mrb[0].mxu0
    %1319 = vdwg.mxu0
    %v1321 = vsel %vm1227, %v641, 0
    %v1324 = vsel %vm1227, %v920, 0
    %1326 = vmatprep.subr.bf16.mxu0 0
    %1327 = vmatpush1.bf16.xpose.msra.mxu0 %v1324
    %1328 = vmatprep.subr.bf16.mxu0 0
    %1329 = vmatpush1.bf16.xpose.msra.mxu0 0
    %1330 = vmatprep.subr.bf16.mxu0 0
    %1331 = vmatpush1.bf16.xpose.msra.mxu0 0
    %1332 = vmatprep.subr.bf16.mxu0 0
    %1333 = vmatpush1.bf16.xpose.msra.mxu0 0
    %1334 = vmatprep.subr.bf16.mxu0 0
    %1335 = vmatpush1.bf16.xpose.msra.mxu0 0
    %1336 = vmatprep.subr.bf16.mxu0 0
    %1337 = vmatpush1.bf16.xpose.msra.mxu0 0
    %1338 = vmatprep.subr.bf16.mxu0 0
    %1339 = vmatpush1.bf16.xpose.msra.mxu0 0
    %1340 = vmatprep.subr.bf16.mxu0 0
    %1341 = vmatpush1.bf16.xpose.msra.mxu0 0
    %1342 = vmatprep.subr.bf16.mxu0 0
    %1343 = vmatpush1.bf16.xpose.msra.mxu0 0
    %1344 = vmatprep.subr.bf16.mxu0 0
    %1345 = vmatpush1.bf16.xpose.msra.mxu0 0
    %1346 = vmatprep.subr.bf16.mxu0 0
    %1347 = vmatpush1.bf16.xpose.msra.mxu0 0
    %1348 = vmatprep.subr.bf16.mxu0 0
    %1349 = vmatpush1.bf16.xpose.msra.mxu0 0
    %1350 = vmatprep.subr.bf16.mxu0 0
    %1351 = vmatpush1.bf16.xpose.msra.mxu0 0
    %1352 = vmatprep.subr.bf16.mxu0 0
    %1353 = vmatpush1.bf16.xpose.msra.mxu0 0
    %1354 = vmatprep.subr.bf16.mxu0 0
    %1355 = vmatpush1.bf16.xpose.msra.mxu0 0
    %1356 = vmatprep.subr.bf16.mxu0 0
    %1357 = vmatpush1.bf16.xpose.msra.mxu0 0
    %1358 = vmatprep.mubr.bf16.mxu0 0
    %1359 = vmatmul.mubr.bf16.gmra.mrb[0].mxu0 %v1321
    %v1360 = vpop.f32.mrb[0].mxu0
    %v1361 = vadd.f32 0.0, %v1360
    %v1362 = vpop.f32.mrb[0].mxu0
    %v1363 = vpop.f32.mrb[0].mxu0
    %v1364 = vpop.f32.mrb[0].mxu0
    %1365 = vdwg.mxu0
    %v1367 = vsel %vm1227, %v644, 0
    %v1370 = vsel %vm1227, %v923, 0
    %1372 = vmatprep.subr.bf16.mxu0 0
    %1373 = vmatpush1.bf16.xpose.msra.mxu0 %v1370
    %1374 = vmatprep.subr.bf16.mxu0 0
    %1375 = vmatpush1.bf16.xpose.msra.mxu0 0
    %1376 = vmatprep.subr.bf16.mxu0 0
    %1377 = vmatpush1.bf16.xpose.msra.mxu0 0
    %1378 = vmatprep.subr.bf16.mxu0 0
    %1379 = vmatpush1.bf16.xpose.msra.mxu0 0
    %1380 = vmatprep.subr.bf16.mxu0 0
    %1381 = vmatpush1.bf16.xpose.msra.mxu0 0
    %1382 = vmatprep.subr.bf16.mxu0 0
    %1383 = vmatpush1.bf16.xpose.msra.mxu0 0
    %1384 = vmatprep.subr.bf16.mxu0 0
    %1385 = vmatpush1.bf16.xpose.msra.mxu0 0
    %1386 = vmatprep.subr.bf16.mxu0 0
    %1387 = vmatpush1.bf16.xpose.msra.mxu0 0
    %1388 = vmatprep.subr.bf16.mxu0 0
    %1389 = vmatpush1.bf16.xpose.msra.mxu0 0
    %1390 = vmatprep.subr.bf16.mxu0 0
    %1391 = vmatpush1.bf16.xpose.msra.mxu0 0
    %1392 = vmatprep.subr.bf16.mxu0 0
    %1393 = vmatpush1.bf16.xpose.msra.mxu0 0
    %1394 = vmatprep.subr.bf16.mxu0 0
    %1395 = vmatpush1.bf16.xpose.msra.mxu0 0
    %1396 = vmatprep.subr.bf16.mxu0 0
    %1397 = vmatpush1.bf16.xpose.msra.mxu0 0
    %1398 = vmatprep.subr.bf16.mxu0 0
    %1399 = vmatpush1.bf16.xpose.msra.mxu0 0
    %1400 = vmatprep.subr.bf16.mxu0 0
    %1401 = vmatpush1.bf16.xpose.msra.mxu0 0
    %1402 = vmatprep.subr.bf16.mxu0 0
    %1403 = vmatpush1.bf16.xpose.msra.mxu0 0
    %1404 = vmatprep.mubr.bf16.mxu0 0
    %1405 = vmatmul.mubr.bf16.gmra.mrb[0].mxu0 %v1367
    %v1406 = vpop.f32.mrb[0].mxu0
    %v1407 = vadd.f32 0.0, %v1406
    %v1408 = vpop.f32.mrb[0].mxu0
    %v1409 = vpop.f32.mrb[0].mxu0
    %v1410 = vpop.f32.mrb[0].mxu0
    %1411 = vdwg.mxu0
    %v1413 = vsel %vm1227, %v647, 0
    %v1416 = vsel %vm1227, %v926, 0
    %1418 = vmatprep.subr.bf16.mxu0 0
    %1419 = vmatpush1.bf16.xpose.msra.mxu0 %v1416
    %1420 = vmatprep.subr.bf16.mxu0 0
    %1421 = vmatpush1.bf16.xpose.msra.mxu0 0
    %1422 = vmatprep.subr.bf16.mxu0 0
    %1423 = vmatpush1.bf16.xpose.msra.mxu0 0
    %1424 = vmatprep.subr.bf16.mxu0 0
    %1425 = vmatpush1.bf16.xpose.msra.mxu0 0
    %1426 = vmatprep.subr.bf16.mxu0 0
    %1427 = vmatpush1.bf16.xpose.msra.mxu0 0
    %1428 = vmatprep.subr.bf16.mxu0 0
    %1429 = vmatpush1.bf16.xpose.msra.mxu0 0
    %1430 = vmatprep.subr.bf16.mxu0 0
    %1431 = vmatpush1.bf16.xpose.msra.mxu0 0
    %1432 = vmatprep.subr.bf16.mxu0 0
    %1433 = vmatpush1.bf16.xpose.msra.mxu0 0
    %1434 = vmatprep.subr.bf16.mxu0 0
    %1435 = vmatpush1.bf16.xpose.msra.mxu0 0
    %1436 = vmatprep.subr.bf16.mxu0 0
    %1437 = vmatpush1.bf16.xpose.msra.mxu0 0
    %1438 = vmatprep.subr.bf16.mxu0 0
    %1439 = vmatpush1.bf16.xpose.msra.mxu0 0
    %1440 = vmatprep.subr.bf16.mxu0 0
    %1441 = vmatpush1.bf16.xpose.msra.mxu0 0
    %1442 = vmatprep.subr.bf16.mxu0 0
    %1443 = vmatpush1.bf16.xpose.msra.mxu0 0
    %1444 = vmatprep.subr.bf16.mxu0 0
    %1445 = vmatpush1.bf16.xpose.msra.mxu0 0
    %1446 = vmatprep.subr.bf16.mxu0 0
    %1447 = vmatpush1.bf16.xpose.msra.mxu0 0
    %1448 = vmatprep.subr.bf16.mxu0 0
    %1449 = vmatpush1.bf16.xpose.msra.mxu0 0
    %1450 = vmatprep.mubr.bf16.mxu0 0
    %1451 = vmatmul.mubr.bf16.gmra.mrb[0].mxu0 %v1413
    %v1452 = vpop.f32.mrb[0].mxu0
    %v1453 = vadd.f32 0.0, %v1452
    %v1454 = vpop.f32.mrb[0].mxu0
    %v1455 = vpop.f32.mrb[0].mxu0
    %v1456 = vpop.f32.mrb[0].mxu0
    %1457 = vdwg.mxu0
    %v1459 = vsel %vm1227, %v650, 0
    %v1462 = vsel %vm1227, %v929, 0
    %1464 = vmatprep.subr.bf16.mxu0 0
    %1465 = vmatpush1.bf16.xpose.msra.mxu0 %v1462
    %1466 = vmatprep.subr.bf16.mxu0 0
    %1467 = vmatpush1.bf16.xpose.msra.mxu0 0
    %1468 = vmatprep.subr.bf16.mxu0 0
    %1469 = vmatpush1.bf16.xpose.msra.mxu0 0
    %1470 = vmatprep.subr.bf16.mxu0 0
    %1471 = vmatpush1.bf16.xpose.msra.mxu0 0
    %1472 = vmatprep.subr.bf16.mxu0 0
    %1473 = vmatpush1.bf16.xpose.msra.mxu0 0
    %1474 = vmatprep.subr.bf16.mxu0 0
    %1475 = vmatpush1.bf16.xpose.msra.mxu0 0
    %1476 = vmatprep.subr.bf16.mxu0 0
    %1477 = vmatpush1.bf16.xpose.msra.mxu0 0
    %1478 = vmatprep.subr.bf16.mxu0 0
    %1479 = vmatpush1.bf16.xpose.msra.mxu0 0
    %1480 = vmatprep.subr.bf16.mxu0 0
    %1481 = vmatpush1.bf16.xpose.msra.mxu0 0
    %1482 = vmatprep.subr.bf16.mxu0 0
    %1483 = vmatpush1.bf16.xpose.msra.mxu0 0
    %1484 = vmatprep.subr.bf16.mxu0 0
    %1485 = vmatpush1.bf16.xpose.msra.mxu0 0
    %1486 = vmatprep.subr.bf16.mxu0 0
    %1487 = vmatpush1.bf16.xpose.msra.mxu0 0
    %1488 = vmatprep.subr.bf16.mxu0 0
    %1489 = vmatpush1.bf16.xpose.msra.mxu0 0
    %1490 = vmatprep.subr.bf16.mxu0 0
    %1491 = vmatpush1.bf16.xpose.msra.mxu0 0
    %1492 = vmatprep.subr.bf16.mxu0 0
    %1493 = vmatpush1.bf16.xpose.msra.mxu0 0
    %1494 = vmatprep.subr.bf16.mxu0 0
    %1495 = vmatpush1.bf16.xpose.msra.mxu0 0
    %1496 = vmatprep.mubr.bf16.mxu0 0
    %1497 = vmatmul.mubr.bf16.gmra.mrb[0].mxu0 %v1459
    %v1498 = vpop.f32.mrb[0].mxu0
    %v1499 = vadd.f32 0.0, %v1498
    %v1500 = vpop.f32.mrb[0].mxu0
    %v1501 = vpop.f32.mrb[0].mxu0
    %v1502 = vpop.f32.mrb[0].mxu0
    %1503 = vdwg.mxu0
    %v1505 = vsel %vm1227, %v653, 0
    %v1508 = vsel %vm1227, %v932, 0
    %1510 = vmatprep.subr.bf16.mxu0 0
    %1511 = vmatpush1.bf16.xpose.msra.mxu0 %v1508
    %1512 = vmatprep.subr.bf16.mxu0 0
    %1513 = vmatpush1.bf16.xpose.msra.mxu0 0
    %1514 = vmatprep.subr.bf16.mxu0 0
    %1515 = vmatpush1.bf16.xpose.msra.mxu0 0
    %1516 = vmatprep.subr.bf16.mxu0 0
    %1517 = vmatpush1.bf16.xpose.msra.mxu0 0
    %1518 = vmatprep.subr.bf16.mxu0 0
    %1519 = vmatpush1.bf16.xpose.msra.mxu0 0
    %1520 = vmatprep.subr.bf16.mxu0 0
    %1521 = vmatpush1.bf16.xpose.msra.mxu0 0
    %1522 = vmatprep.subr.bf16.mxu0 0
    %1523 = vmatpush1.bf16.xpose.msra.mxu0 0
    %1524 = vmatprep.subr.bf16.mxu0 0
    %1525 = vmatpush1.bf16.xpose.msra.mxu0 0
    %1526 = vmatprep.subr.bf16.mxu0 0
    %1527 = vmatpush1.bf16.xpose.msra.mxu0 0
    %1528 = vmatprep.subr.bf16.mxu0 0
    %1529 = vmatpush1.bf16.xpose.msra.mxu0 0
    %1530 = vmatprep.subr.bf16.mxu0 0
    %1531 = vmatpush1.bf16.xpose.msra.mxu0 0
    %1532 = vmatprep.subr.bf16.mxu0 0
    %1533 = vmatpush1.bf16.xpose.msra.mxu0 0
    %1534 = vmatprep.subr.bf16.mxu0 0
    %1535 = vmatpush1.bf16.xpose.msra.mxu0 0
    %1536 = vmatprep.subr.bf16.mxu0 0
    %1537 = vmatpush1.bf16.xpose.msra.mxu0 0
    %1538 = vmatprep.subr.bf16.mxu0 0
    %1539 = vmatpush1.bf16.xpose.msra.mxu0 0
    %1540 = vmatprep.subr.bf16.mxu0 0
    %1541 = vmatpush1.bf16.xpose.msra.mxu0 0
    %1542 = vmatprep.mubr.bf16.mxu0 0
    %1543 = vmatmul.mubr.bf16.gmra.mrb[0].mxu0 %v1505
    %v1544 = vpop.f32.mrb[0].mxu0
    %v1545 = vadd.f32 0.0, %v1544
    %v1546 = vpop.f32.mrb[0].mxu0
    %v1547 = vpop.f32.mrb[0].mxu0
    %v1548 = vpop.f32.mrb[0].mxu0
    %1549 = vdwg.mxu0
    %v1551 = vsel %vm1227, %v656, 0
    %v1554 = vsel %vm1227, %v935, 0
    %1556 = vmatprep.subr.bf16.mxu0 0
    %1557 = vmatpush1.bf16.xpose.msra.mxu0 %v1554
    %1558 = vmatprep.subr.bf16.mxu0 0
    %1559 = vmatpush1.bf16.xpose.msra.mxu0 0
    %1560 = vmatprep.subr.bf16.mxu0 0
    %1561 = vmatpush1.bf16.xpose.msra.mxu0 0
    %1562 = vmatprep.subr.bf16.mxu0 0
    %1563 = vmatpush1.bf16.xpose.msra.mxu0 0
    %1564 = vmatprep.subr.bf16.mxu0 0
    %1565 = vmatpush1.bf16.xpose.msra.mxu0 0
    %1566 = vmatprep.subr.bf16.mxu0 0
    %1567 = vmatpush1.bf16.xpose.msra.mxu0 0
    %1568 = vmatprep.subr.bf16.mxu0 0
    %1569 = vmatpush1.bf16.xpose.msra.mxu0 0
    %1570 = vmatprep.subr.bf16.mxu0 0
    %1571 = vmatpush1.bf16.xpose.msra.mxu0 0
    %1572 = vmatprep.subr.bf16.mxu0 0
    %1573 = vmatpush1.bf16.xpose.msra.mxu0 0
    %1574 = vmatprep.subr.bf16.mxu0 0
    %1575 = vmatpush1.bf16.xpose.msra.mxu0 0
    %1576 = vmatprep.subr.bf16.mxu0 0
    %1577 = vmatpush1.bf16.xpose.msra.mxu0 0
    %1578 = vmatprep.subr.bf16.mxu0 0
    %1579 = vmatpush1.bf16.xpose.msra.mxu0 0
    %1580 = vmatprep.subr.bf16.mxu0 0
    %1581 = vmatpush1.bf16.xpose.msra.mxu0 0
    %1582 = vmatprep.subr.bf16.mxu0 0
    %1583 = vmatpush1.bf16.xpose.msra.mxu0 0
    %1584 = vmatprep.subr.bf16.mxu0 0
    %1585 = vmatpush1.bf16.xpose.msra.mxu0 0
    %1586 = vmatprep.subr.bf16.mxu0 0
    %1587 = vmatpush1.bf16.xpose.msra.mxu0 0
    %1588 = vmatprep.mubr.bf16.mxu0 0
    %1589 = vmatmul.mubr.bf16.gmra.mrb[0].mxu0 %v1551
    %v1590 = vpop.f32.mrb[0].mxu0
    %v1591 = vadd.f32 0.0, %v1590
    %v1592 = vpop.f32.mrb[0].mxu0
    %v1593 = vpop.f32.mrb[0].mxu0
    %v1594 = vpop.f32.mrb[0].mxu0
    %1595 = vdwg.mxu0
    %v1596 = vmul.f32 %v1269, 0.17677669
    %v1597 = vmul.f32 %v1315, 0.17677669
    %v1598 = vmul.f32 %v1361, 0.17677669
    %v1599 = vmul.f32 %v1407, 0.17677669
    %v1600 = vmul.f32 %v1453, 0.17677669
    %v1601 = vmul.f32 %v1499, 0.17677669
    %v1602 = vmul.f32 %v1545, 0.17677669
    %v1603 = vmul.f32 %v1591, 0.17677669
    %v1604 = vadd.f32 %v1596, %v1220
    %v1605 = vadd.f32 %v1597, %v1220
    %v1606 = vadd.f32 %v1598, %v1220
    %v1607 = vadd.f32 %v1599, %v1220
    %v1608 = vadd.f32 %v1600, %v1220
    %v1609 = vadd.f32 %v1601, %v1220
    %v1610 = vadd.f32 %v1602, %v1220
    %v1611 = vadd.f32 %v1603, %v1220
    %v1614 = vlaneseq
    %v1615 = vshrl.u32 %v1614, 7
    %v1616 = vsub.s32 0, %v1615
    %v1617 = vrot.slane %v1225, %v1616
    %v1618 = vlaneseq
    %v1619 = vshrl.u32 %v1618, 7
    %v1620 = vsub.s32 0, %v1619
    %v1621 = vrot.slane %v1226, %v1620
    %v1624 = vadd.f32 %v1604, %v1617
    %v1625 = vadd.f32 %v1605, %v1617
    %v1626 = vadd.f32 %v1606, %v1617
    %v1627 = vadd.f32 %v1607, %v1617
    %v1628 = vadd.f32 %v1608, %v1621
    %v1629 = vadd.f32 %v1609, %v1621
    %v1630 = vadd.f32 %v1610, %v1621
    %v1631 = vadd.f32 %v1611, %v1621
    %vm1632 = vcmask 64512
    %v1633 = vsel %vm1632, %v1624, -inf
    %1634 = vmax.xlane.f32.xlu0 %v1633
    %v1635 = vpop.xlane.xlu0 %1634
    %v1636 = vsel %vm1632, %v1625, -inf
    %1637 = vmax.xlane.f32.xlu0 %v1636
    %v1638 = vpop.xlane.xlu0 %1637
    %v1639 = vsel %vm1632, %v1626, -inf
    %1640 = vmax.xlane.f32.xlu0 %v1639
    %v1641 = vpop.xlane.xlu0 %1640
    %v1642 = vsel %vm1632, %v1627, -inf
    %1643 = vmax.xlane.f32.xlu0 %v1642
    %v1644 = vpop.xlane.xlu0 %1643
    %v1645 = vsel %vm1632, %v1628, -inf
    %1646 = vmax.xlane.f32.xlu0 %v1645
    %v1647 = vpop.xlane.xlu0 %1646
    %v1648 = vsel %vm1632, %v1629, -inf
    %1649 = vmax.xlane.f32.xlu0 %v1648
    %v1650 = vpop.xlane.xlu0 %1649
    %v1651 = vsel %vm1632, %v1630, -inf
    %1652 = vmax.xlane.f32.xlu0 %v1651
    %v1653 = vpop.xlane.xlu0 %1652
    %v1654 = vsel %vm1632, %v1631, -inf
    %1655 = vmax.xlane.f32.xlu0 %v1654
    %v1656 = vpop.xlane.xlu0 %1655
    %v1657 = vsub.f32 %v1624, %v1635
    %v1658 = vsub.f32 %v1625, %v1638
    %v1659 = vsub.f32 %v1626, %v1641
    %v1660 = vsub.f32 %v1627, %v1644
    %v1661 = vsub.f32 %v1628, %v1647
    %v1662 = vsub.f32 %v1629, %v1650
    %v1663 = vsub.f32 %v1630, %v1653
    %v1664 = vsub.f32 %v1631, %v1656
    %v1665 = vmul.f32 %v1657, 1.442695
    %v1666 = vpow.pop %v1665
    %v1667 = vmul.f32 %v1658, 1.442695
    %v1668 = vpow.pop %v1667
    %v1669 = vmul.f32 %v1659, 1.442695
    %v1670 = vpow.pop %v1669
    %v1671 = vmul.f32 %v1660, 1.442695
    %v1672 = vpow.pop %v1671
    %v1673 = vmul.f32 %v1661, 1.442695
    %v1674 = vpow.pop %v1673
    %v1675 = vmul.f32 %v1662, 1.442695
    %v1676 = vpow.pop %v1675
    %v1677 = vmul.f32 %v1663, 1.442695
    %v1678 = vpow.pop %v1677
    %v1679 = vmul.f32 %v1664, 1.442695
    %v1680 = vpow.pop %v1679
    %v1681 = vsel %vm1632, %v1666, 0.0
    %1682 = vadd.xlane.f32.xlu0 %v1681
    %v1683 = vpop.xlane.xlu0 %1682
    %v1684 = vsel %vm1632, %v1668, 0.0
    %1685 = vadd.xlane.f32.xlu0 %v1684
    %v1686 = vpop.xlane.xlu0 %1685
    %v1687 = vsel %vm1632, %v1670, 0.0
    %1688 = vadd.xlane.f32.xlu0 %v1687
    %v1689 = vpop.xlane.xlu0 %1688
    %v1690 = vsel %vm1632, %v1672, 0.0
    %1691 = vadd.xlane.f32.xlu0 %v1690
    %v1692 = vpop.xlane.xlu0 %1691
    %v1693 = vsel %vm1632, %v1674, 0.0
    %1694 = vadd.xlane.f32.xlu0 %v1693
    %v1695 = vpop.xlane.xlu0 %1694
    %v1696 = vsel %vm1632, %v1676, 0.0
    %1697 = vadd.xlane.f32.xlu0 %v1696
    %v1698 = vpop.xlane.xlu0 %1697
    %v1699 = vsel %vm1632, %v1678, 0.0
    %1700 = vadd.xlane.f32.xlu0 %v1699
    %v1701 = vpop.xlane.xlu0 %1700
    %v1702 = vsel %vm1632, %v1680, 0.0
    %1703 = vadd.xlane.f32.xlu0 %v1702
    %v1704 = vpop.xlane.xlu0 %1703
    %v1705 = vrcp.pop %v1683
    %v1706 = vrcp.pop %v1686
    %v1707 = vrcp.pop %v1689
    %v1708 = vrcp.pop %v1692
    %v1709 = vrcp.pop %v1695
    %v1710 = vrcp.pop %v1698
    %v1711 = vrcp.pop %v1701
    %v1712 = vrcp.pop %v1704
    %v1713 = vmul.f32 %v1666, %v1705
    %v1714 = vmul.f32 %v1668, %v1706
    %v1715 = vmul.f32 %v1670, %v1707
    %v1716 = vmul.f32 %v1672, %v1708
    %v1717 = vmul.f32 %v1674, %v1709
    %v1718 = vmul.f32 %v1676, %v1710
    %v1719 = vmul.f32 %v1678, %v1711
    %v1720 = vmul.f32 %v1680, %v1712
    %v1721 = vpack.c.bf16 %v1713, %v1713
    %v1722 = vpack.c.bf16 %v1714, %v1714
    %v1723 = vpack.c.bf16 %v1715, %v1715
    %v1724 = vpack.c.bf16 %v1716, %v1716
    %v1725 = vpack.c.bf16 %v1717, %v1717
    %v1726 = vpack.c.bf16 %v1718, %v1718
    %v1727 = vpack.c.bf16 %v1719, %v1719
    %v1728 = vpack.c.bf16 %v1720, %v1720
    %v1730 = vsel %vm1632, %v1721, 0
    %vm1732 = vcmask 1043456
    %v1734 = vsel %vm1732, %v1193, 0
    %1736 = vmatprep.subr.bf16.mxu0 0
    %1737 = vmatpush1.bf16.msra.mxu0 %v1734
    %1738 = vmatprep.subr.bf16.mxu0 0
    %1739 = vmatpush1.bf16.msra.mxu0 0
    %1740 = vmatprep.subr.bf16.mxu0 0
    %1741 = vmatpush1.bf16.msra.mxu0 0
    %1742 = vmatprep.subr.bf16.mxu0 0
    %1743 = vmatpush1.bf16.msra.mxu0 0
    %1744 = vmatprep.subr.bf16.mxu0 0
    %1745 = vmatpush1.bf16.msra.mxu0 0
    %1746 = vmatprep.subr.bf16.mxu0 0
    %1747 = vmatpush1.bf16.msra.mxu0 0
    %1748 = vmatprep.subr.bf16.mxu0 0
    %1749 = vmatpush1.bf16.msra.mxu0 0
    %1750 = vmatprep.subr.bf16.mxu0 0
    %1751 = vmatpush1.bf16.msra.mxu0 0
    %1752 = vmatprep.subr.bf16.mxu0 0
    %1753 = vmatpush1.bf16.msra.mxu0 0
    %1754 = vmatprep.subr.bf16.mxu0 0
    %1755 = vmatpush1.bf16.msra.mxu0 0
    %1756 = vmatprep.subr.bf16.mxu0 0
    %1757 = vmatpush1.bf16.msra.mxu0 0
    %1758 = vmatprep.subr.bf16.mxu0 0
    %1759 = vmatpush1.bf16.msra.mxu0 0
    %1760 = vmatprep.subr.bf16.mxu0 0
    %1761 = vmatpush1.bf16.msra.mxu0 0
    %1762 = vmatprep.subr.bf16.mxu0 0
    %1763 = vmatpush1.bf16.msra.mxu0 0
    %1764 = vmatprep.subr.bf16.mxu0 0
    %1765 = vmatpush1.bf16.msra.mxu0 0
    %1766 = vmatprep.subr.bf16.mxu0 0
    %1767 = vmatpush1.bf16.msra.mxu0 0
    %1768 = vmatprep.mubr.bf16.mxu0 0
    %1769 = vmatmul.mubr.bf16.gmra.mrb[0].mxu0 %v1730
    %v1770 = vpop.f32.mrb[0].mxu0
    %v1771 = vadd.f32 0.0, %v1770
    %v1772 = vpop.f32.mrb[0].mxu0
    %v1773 = vpop.f32.mrb[0].mxu0
    %v1774 = vpop.f32.mrb[0].mxu0
    %1775 = vdwg.mxu0
    %v1777 = vsel %vm1632, %v1722, 0
    %v1780 = vsel %vm1732, %v1196, 0
    %1782 = vmatprep.subr.bf16.mxu0 0
    %1783 = vmatpush1.bf16.msra.mxu0 %v1780
    %1784 = vmatprep.subr.bf16.mxu0 0
    %1785 = vmatpush1.bf16.msra.mxu0 0
    %1786 = vmatprep.subr.bf16.mxu0 0
    %1787 = vmatpush1.bf16.msra.mxu0 0
    %1788 = vmatprep.subr.bf16.mxu0 0
    %1789 = vmatpush1.bf16.msra.mxu0 0
    %1790 = vmatprep.subr.bf16.mxu0 0
    %1791 = vmatpush1.bf16.msra.mxu0 0
    %1792 = vmatprep.subr.bf16.mxu0 0
    %1793 = vmatpush1.bf16.msra.mxu0 0
    %1794 = vmatprep.subr.bf16.mxu0 0
    %1795 = vmatpush1.bf16.msra.mxu0 0
    %1796 = vmatprep.subr.bf16.mxu0 0
    %1797 = vmatpush1.bf16.msra.mxu0 0
    %1798 = vmatprep.subr.bf16.mxu0 0
    %1799 = vmatpush1.bf16.msra.mxu0 0
    %1800 = vmatprep.subr.bf16.mxu0 0
    %1801 = vmatpush1.bf16.msra.mxu0 0
    %1802 = vmatprep.subr.bf16.mxu0 0
    %1803 = vmatpush1.bf16.msra.mxu0 0
    %1804 = vmatprep.subr.bf16.mxu0 0
    %1805 = vmatpush1.bf16.msra.mxu0 0
    %1806 = vmatprep.subr.bf16.mxu0 0
    %1807 = vmatpush1.bf16.msra.mxu0 0
    %1808 = vmatprep.subr.bf16.mxu0 0
    %1809 = vmatpush1.bf16.msra.mxu0 0
    %1810 = vmatprep.subr.bf16.mxu0 0
    %1811 = vmatpush1.bf16.msra.mxu0 0
    %1812 = vmatprep.subr.bf16.mxu0 0
    %1813 = vmatpush1.bf16.msra.mxu0 0
    %1814 = vmatprep.mubr.bf16.mxu0 0
    %1815 = vmatmul.mubr.bf16.gmra.mrb[0].mxu0 %v1777
    %v1816 = vpop.f32.mrb[0].mxu0
    %v1817 = vadd.f32 0.0, %v1816
    %v1818 = vpop.f32.mrb[0].mxu0
    %v1819 = vpop.f32.mrb[0].mxu0
    %v1820 = vpop.f32.mrb[0].mxu0
    %1821 = vdwg.mxu0
    %v1823 = vsel %vm1632, %v1723, 0
    %v1826 = vsel %vm1732, %v1199, 0
    %1828 = vmatprep.subr.bf16.mxu0 0
    %1829 = vmatpush1.bf16.msra.mxu0 %v1826
    %1830 = vmatprep.subr.bf16.mxu0 0
    %1831 = vmatpush1.bf16.msra.mxu0 0
    %1832 = vmatprep.subr.bf16.mxu0 0
    %1833 = vmatpush1.bf16.msra.mxu0 0
    %1834 = vmatprep.subr.bf16.mxu0 0
    %1835 = vmatpush1.bf16.msra.mxu0 0
    %1836 = vmatprep.subr.bf16.mxu0 0
    %1837 = vmatpush1.bf16.msra.mxu0 0
    %1838 = vmatprep.subr.bf16.mxu0 0
    %1839 = vmatpush1.bf16.msra.mxu0 0
    %1840 = vmatprep.subr.bf16.mxu0 0
    %1841 = vmatpush1.bf16.msra.mxu0 0
    %1842 = vmatprep.subr.bf16.mxu0 0
    %1843 = vmatpush1.bf16.msra.mxu0 0
    %1844 = vmatprep.subr.bf16.mxu0 0
    %1845 = vmatpush1.bf16.msra.mxu0 0
    %1846 = vmatprep.subr.bf16.mxu0 0
    %1847 = vmatpush1.bf16.msra.mxu0 0
    %1848 = vmatprep.subr.bf16.mxu0 0
    %1849 = vmatpush1.bf16.msra.mxu0 0
    %1850 = vmatprep.subr.bf16.mxu0 0
    %1851 = vmatpush1.bf16.msra.mxu0 0
    %1852 = vmatprep.subr.bf16.mxu0 0
    %1853 = vmatpush1.bf16.msra.mxu0 0
    %1854 = vmatprep.subr.bf16.mxu0 0
    %1855 = vmatpush1.bf16.msra.mxu0 0
    %1856 = vmatprep.subr.bf16.mxu0 0
    %1857 = vmatpush1.bf16.msra.mxu0 0
    %1858 = vmatprep.subr.bf16.mxu0 0
    %1859 = vmatpush1.bf16.msra.mxu0 0
    %1860 = vmatprep.mubr.bf16.mxu0 0
    %1861 = vmatmul.mubr.bf16.gmra.mrb[0].mxu0 %v1823
    %v1862 = vpop.f32.mrb[0].mxu0
    %v1863 = vadd.f32 0.0, %v1862
    %v1864 = vpop.f32.mrb[0].mxu0
    %v1865 = vpop.f32.mrb[0].mxu0
    %v1866 = vpop.f32.mrb[0].mxu0
    %1867 = vdwg.mxu0
    %v1869 = vsel %vm1632, %v1724, 0
    %v1872 = vsel %vm1732, %v1202, 0
    %1874 = vmatprep.subr.bf16.mxu0 0
    %1875 = vmatpush1.bf16.msra.mxu0 %v1872
    %1876 = vmatprep.subr.bf16.mxu0 0
    %1877 = vmatpush1.bf16.msra.mxu0 0
    %1878 = vmatprep.subr.bf16.mxu0 0
    %1879 = vmatpush1.bf16.msra.mxu0 0
    %1880 = vmatprep.subr.bf16.mxu0 0
    %1881 = vmatpush1.bf16.msra.mxu0 0
    %1882 = vmatprep.subr.bf16.mxu0 0
    %1883 = vmatpush1.bf16.msra.mxu0 0
    %1884 = vmatprep.subr.bf16.mxu0 0
    %1885 = vmatpush1.bf16.msra.mxu0 0
    %1886 = vmatprep.subr.bf16.mxu0 0
    %1887 = vmatpush1.bf16.msra.mxu0 0
    %1888 = vmatprep.subr.bf16.mxu0 0
    %1889 = vmatpush1.bf16.msra.mxu0 0
    %1890 = vmatprep.subr.bf16.mxu0 0
    %1891 = vmatpush1.bf16.msra.mxu0 0
    %1892 = vmatprep.subr.bf16.mxu0 0
    %1893 = vmatpush1.bf16.msra.mxu0 0
    %1894 = vmatprep.subr.bf16.mxu0 0
    %1895 = vmatpush1.bf16.msra.mxu0 0
    %1896 = vmatprep.subr.bf16.mxu0 0
    %1897 = vmatpush1.bf16.msra.mxu0 0
    %1898 = vmatprep.subr.bf16.mxu0 0
    %1899 = vmatpush1.bf16.msra.mxu0 0
    %1900 = vmatprep.subr.bf16.mxu0 0
    %1901 = vmatpush1.bf16.msra.mxu0 0
    %1902 = vmatprep.subr.bf16.mxu0 0
    %1903 = vmatpush1.bf16.msra.mxu0 0
    %1904 = vmatprep.subr.bf16.mxu0 0
    %1905 = vmatpush1.bf16.msra.mxu0 0
    %1906 = vmatprep.mubr.bf16.mxu0 0
    %1907 = vmatmul.mubr.bf16.gmra.mrb[0].mxu0 %v1869
    %v1908 = vpop.f32.mrb[0].mxu0
    %v1909 = vadd.f32 0.0, %v1908
    %v1910 = vpop.f32.mrb[0].mxu0
    %v1911 = vpop.f32.mrb[0].mxu0
    %v1912 = vpop.f32.mrb[0].mxu0
    %1913 = vdwg.mxu0
    %v1915 = vsel %vm1632, %v1725, 0
    %v1918 = vsel %vm1732, %v1205, 0
    %1920 = vmatprep.subr.bf16.mxu0 0
    %1921 = vmatpush1.bf16.msra.mxu0 %v1918
    %1922 = vmatprep.subr.bf16.mxu0 0
    %1923 = vmatpush1.bf16.msra.mxu0 0
    %1924 = vmatprep.subr.bf16.mxu0 0
    %1925 = vmatpush1.bf16.msra.mxu0 0
    %1926 = vmatprep.subr.bf16.mxu0 0
    %1927 = vmatpush1.bf16.msra.mxu0 0
    %1928 = vmatprep.subr.bf16.mxu0 0
    %1929 = vmatpush1.bf16.msra.mxu0 0
    %1930 = vmatprep.subr.bf16.mxu0 0
    %1931 = vmatpush1.bf16.msra.mxu0 0
    %1932 = vmatprep.subr.bf16.mxu0 0
    %1933 = vmatpush1.bf16.msra.mxu0 0
    %1934 = vmatprep.subr.bf16.mxu0 0
    %1935 = vmatpush1.bf16.msra.mxu0 0
    %1936 = vmatprep.subr.bf16.mxu0 0
    %1937 = vmatpush1.bf16.msra.mxu0 0
    %1938 = vmatprep.subr.bf16.mxu0 0
    %1939 = vmatpush1.bf16.msra.mxu0 0
    %1940 = vmatprep.subr.bf16.mxu0 0
    %1941 = vmatpush1.bf16.msra.mxu0 0
    %1942 = vmatprep.subr.bf16.mxu0 0
    %1943 = vmatpush1.bf16.msra.mxu0 0
    %1944 = vmatprep.subr.bf16.mxu0 0
    %1945 = vmatpush1.bf16.msra.mxu0 0
    %1946 = vmatprep.subr.bf16.mxu0 0
    %1947 = vmatpush1.bf16.msra.mxu0 0
    %1948 = vmatprep.subr.bf16.mxu0 0
    %1949 = vmatpush1.bf16.msra.mxu0 0
    %1950 = vmatprep.subr.bf16.mxu0 0
    %1951 = vmatpush1.bf16.msra.mxu0 0
    %1952 = vmatprep.mubr.bf16.mxu0 0
    %1953 = vmatmul.mubr.bf16.gmra.mrb[0].mxu0 %v1915
    %v1954 = vpop.f32.mrb[0].mxu0
    %v1955 = vadd.f32 0.0, %v1954
    %v1956 = vpop.f32.mrb[0].mxu0
    %v1957 = vpop.f32.mrb[0].mxu0
    %v1958 = vpop.f32.mrb[0].mxu0
    %1959 = vdwg.mxu0
    %v1961 = vsel %vm1632, %v1726, 0
    %v1964 = vsel %vm1732, %v1208, 0
    %1966 = vmatprep.subr.bf16.mxu0 0
    %1967 = vmatpush1.bf16.msra.mxu0 %v1964
    %1968 = vmatprep.subr.bf16.mxu0 0
    %1969 = vmatpush1.bf16.msra.mxu0 0
    %1970 = vmatprep.subr.bf16.mxu0 0
    %1971 = vmatpush1.bf16.msra.mxu0 0
    %1972 = vmatprep.subr.bf16.mxu0 0
    %1973 = vmatpush1.bf16.msra.mxu0 0
    %1974 = vmatprep.subr.bf16.mxu0 0
    %1975 = vmatpush1.bf16.msra.mxu0 0
    %1976 = vmatprep.subr.bf16.mxu0 0
    %1977 = vmatpush1.bf16.msra.mxu0 0
    %1978 = vmatprep.subr.bf16.mxu0 0
    %1979 = vmatpush1.bf16.msra.mxu0 0
    %1980 = vmatprep.subr.bf16.mxu0 0
    %1981 = vmatpush1.bf16.msra.mxu0 0
    %1982 = vmatprep.subr.bf16.mxu0 0
    %1983 = vmatpush1.bf16.msra.mxu0 0
    %1984 = vmatprep.subr.bf16.mxu0 0
    %1985 = vmatpush1.bf16.msra.mxu0 0
    %1986 = vmatprep.subr.bf16.mxu0 0
    %1987 = vmatpush1.bf16.msra.mxu0 0
    %1988 = vmatprep.subr.bf16.mxu0 0
    %1989 = vmatpush1.bf16.msra.mxu0 0
    %1990 = vmatprep.subr.bf16.mxu0 0
    %1991 = vmatpush1.bf16.msra.mxu0 0
    %1992 = vmatprep.subr.bf16.mxu0 0
    %1993 = vmatpush1.bf16.msra.mxu0 0
    %1994 = vmatprep.subr.bf16.mxu0 0
    %1995 = vmatpush1.bf16.msra.mxu0 0
    %1996 = vmatprep.subr.bf16.mxu0 0
    %1997 = vmatpush1.bf16.msra.mxu0 0
    %1998 = vmatprep.mubr.bf16.mxu0 0
    %1999 = vmatmul.mubr.bf16.gmra.mrb[0].mxu0 %v1961
    %v2000 = vpop.f32.mrb[0].mxu0
    %v2001 = vadd.f32 0.0, %v2000
    %v2002 = vpop.f32.mrb[0].mxu0
    %v2003 = vpop.f32.mrb[0].mxu0
    %v2004 = vpop.f32.mrb[0].mxu0
    %2005 = vdwg.mxu0
    %v2007 = vsel %vm1632, %v1727, 0
    %v2010 = vsel %vm1732, %v1211, 0
    %2012 = vmatprep.subr.bf16.mxu0 0
    %2013 = vmatpush1.bf16.msra.mxu0 %v2010
    %2014 = vmatprep.subr.bf16.mxu0 0
    %2015 = vmatpush1.bf16.msra.mxu0 0
    %2016 = vmatprep.subr.bf16.mxu0 0
    %2017 = vmatpush1.bf16.msra.mxu0 0
    %2018 = vmatprep.subr.bf16.mxu0 0
    %2019 = vmatpush1.bf16.msra.mxu0 0
    %2020 = vmatprep.subr.bf16.mxu0 0
    %2021 = vmatpush1.bf16.msra.mxu0 0
    %2022 = vmatprep.subr.bf16.mxu0 0
    %2023 = vmatpush1.bf16.msra.mxu0 0
    %2024 = vmatprep.subr.bf16.mxu0 0
    %2025 = vmatpush1.bf16.msra.mxu0 0
    %2026 = vmatprep.subr.bf16.mxu0 0
    %2027 = vmatpush1.bf16.msra.mxu0 0
    %2028 = vmatprep.subr.bf16.mxu0 0
    %2029 = vmatpush1.bf16.msra.mxu0 0
    %2030 = vmatprep.subr.bf16.mxu0 0
    %2031 = vmatpush1.bf16.msra.mxu0 0
    %2032 = vmatprep.subr.bf16.mxu0 0
    %2033 = vmatpush1.bf16.msra.mxu0 0
    %2034 = vmatprep.subr.bf16.mxu0 0
    %2035 = vmatpush1.bf16.msra.mxu0 0
    %2036 = vmatprep.subr.bf16.mxu0 0
    %2037 = vmatpush1.bf16.msra.mxu0 0
    %2038 = vmatprep.subr.bf16.mxu0 0
    %2039 = vmatpush1.bf16.msra.mxu0 0
    %2040 = vmatprep.subr.bf16.mxu0 0
    %2041 = vmatpush1.bf16.msra.mxu0 0
    %2042 = vmatprep.subr.bf16.mxu0 0
    %2043 = vmatpush1.bf16.msra.mxu0 0
    %2044 = vmatprep.mubr.bf16.mxu0 0
    %2045 = vmatmul.mubr.bf16.gmra.mrb[0].mxu0 %v2007
    %v2046 = vpop.f32.mrb[0].mxu0
    %v2047 = vadd.f32 0.0, %v2046
    %v2048 = vpop.f32.mrb[0].mxu0
    %v2049 = vpop.f32.mrb[0].mxu0
    %v2050 = vpop.f32.mrb[0].mxu0
    %2051 = vdwg.mxu0
    %v2053 = vsel %vm1632, %v1728, 0
    %v2056 = vsel %vm1732, %v1214, 0
    %2058 = vmatprep.subr.bf16.mxu0 0
    %2059 = vmatpush1.bf16.msra.mxu0 %v2056
    %2060 = vmatprep.subr.bf16.mxu0 0
    %2061 = vmatpush1.bf16.msra.mxu0 0
    %2062 = vmatprep.subr.bf16.mxu0 0
    %2063 = vmatpush1.bf16.msra.mxu0 0
    %2064 = vmatprep.subr.bf16.mxu0 0
    %2065 = vmatpush1.bf16.msra.mxu0 0
    %2066 = vmatprep.subr.bf16.mxu0 0
    %2067 = vmatpush1.bf16.msra.mxu0 0
    %2068 = vmatprep.subr.bf16.mxu0 0
    %2069 = vmatpush1.bf16.msra.mxu0 0
    %2070 = vmatprep.subr.bf16.mxu0 0
    %2071 = vmatpush1.bf16.msra.mxu0 0
    %2072 = vmatprep.subr.bf16.mxu0 0
    %2073 = vmatpush1.bf16.msra.mxu0 0
    %2074 = vmatprep.subr.bf16.mxu0 0
    %2075 = vmatpush1.bf16.msra.mxu0 0
    %2076 = vmatprep.subr.bf16.mxu0 0
    %2077 = vmatpush1.bf16.msra.mxu0 0
    %2078 = vmatprep.subr.bf16.mxu0 0
    %2079 = vmatpush1.bf16.msra.mxu0 0
    %2080 = vmatprep.subr.bf16.mxu0 0
    %2081 = vmatpush1.bf16.msra.mxu0 0
    %2082 = vmatprep.subr.bf16.mxu0 0
    %2083 = vmatpush1.bf16.msra.mxu0 0
    %2084 = vmatprep.subr.bf16.mxu0 0
    %2085 = vmatpush1.bf16.msra.mxu0 0
    %2086 = vmatprep.subr.bf16.mxu0 0
    %2087 = vmatpush1.bf16.msra.mxu0 0
    %2088 = vmatprep.subr.bf16.mxu0 0
    %2089 = vmatpush1.bf16.msra.mxu0 0
    %2090 = vmatprep.mubr.bf16.mxu0 0
    %2091 = vmatmul.mubr.bf16.gmra.mrb[0].mxu0 %v2053
    %v2092 = vpop.f32.mrb[0].mxu0
    %v2093 = vadd.f32 0.0, %v2092
    %v2094 = vpop.f32.mrb[0].mxu0
    %v2095 = vpop.f32.mrb[0].mxu0
    %v2096 = vpop.f32.mrb[0].mxu0
    %2097 = vdwg.mxu0
    %v2098 = vcombine.low %v1771, %v1863
    %v2099 = vcombine.high %v1771, %v1863
    %v2101 = vunpack.c.l.s4 1983009808
    %v2102 = vunpack.c.0.s8 %v2101
    %v2103 = vlaneseq
    %v2104 = vshrl.u32 %v2103, 7
    %v2105 = vsub.s32 %v2102, %v2104
    %v2106 = vrot.slane %v2098, %v2105
    %v2108 = vunpack.c.l.s4 1983009808
    %v2109 = vunpack.c.0.s8 %v2108
    %v2110 = vlaneseq
    %v2111 = vshrl.u32 %v2110, 7
    %v2112 = vsub.s32 %v2109, %v2111
    %v2113 = vrot.slane %v2099, %v2112
    %v2114 = vcombine.low %v1817, %v1909
    %v2115 = vcombine.high %v1817, %v1909
    %v2117 = vunpack.c.l.s4 1983009808
    %v2118 = vunpack.c.0.s8 %v2117
    %v2119 = vlaneseq
    %v2120 = vshrl.u32 %v2119, 7
    %v2121 = vsub.s32 %v2118, %v2120
    %v2122 = vrot.slane %v2114, %v2121
    %v2124 = vunpack.c.l.s4 1983009808
    %v2125 = vunpack.c.0.s8 %v2124
    %v2126 = vlaneseq
    %v2127 = vshrl.u32 %v2126, 7
    %v2128 = vsub.s32 %v2125, %v2127
    %v2129 = vrot.slane %v2115, %v2128
    %v2130 = vcombine.low %v2106, %v2122
    %v2131 = vcombine.high %v2106, %v2122
    %v2133 = vunpack.c.l.s4 1934713408
    %v2134 = vunpack.c.0.s8 %v2133
    %v2135 = vlaneseq
    %v2136 = vshrl.u32 %v2135, 7
    %v2137 = vsub.s32 %v2134, %v2136
    %v2138 = vrot.slane %v2130, %v2137
    %v2140 = vunpack.c.l.s4 1934713408
    %v2141 = vunpack.c.0.s8 %v2140
    %v2142 = vlaneseq
    %v2143 = vshrl.u32 %v2142, 7
    %v2144 = vsub.s32 %v2141, %v2143
    %v2145 = vrot.slane %v2131, %v2144
    %v2146 = vcombine.low %v2113, %v2129
    %v2147 = vcombine.high %v2113, %v2129
    %v2149 = vunpack.c.l.s4 1934713408
    %v2150 = vunpack.c.0.s8 %v2149
    %v2151 = vlaneseq
    %v2152 = vshrl.u32 %v2151, 7
    %v2153 = vsub.s32 %v2150, %v2152
    %v2154 = vrot.slane %v2146, %v2153
    %v2156 = vunpack.c.l.s4 1934713408
    %v2157 = vunpack.c.0.s8 %v2156
    %v2158 = vlaneseq
    %v2159 = vshrl.u32 %v2158, 7
    %v2160 = vsub.s32 %v2157, %v2159
    %v2161 = vrot.slane %v2147, %v2160
    %v2162 = vcombine.high %v2138, 0.0
    %v2163 = vcombine.high %v2145, 0.0
    %v2164 = vcombine.high %v2154, 0.0
    %v2165 = vcombine.high %v2161, 0.0
    %v2166 = vcombine.low %v1955, %v2047
    %v2167 = vcombine.high %v1955, %v2047
    %v2169 = vunpack.c.l.s4 1983009808
    %v2170 = vunpack.c.0.s8 %v2169
    %v2171 = vlaneseq
    %v2172 = vshrl.u32 %v2171, 7
    %v2173 = vsub.s32 %v2170, %v2172
    %v2174 = vrot.slane %v2166, %v2173
    %v2176 = vunpack.c.l.s4 1983009808
    %v2177 = vunpack.c.0.s8 %v2176
    %v2178 = vlaneseq
    %v2179 = vshrl.u32 %v2178, 7
    %v2180 = vsub.s32 %v2177, %v2179
    %v2181 = vrot.slane %v2167, %v2180
    %v2182 = vcombine.low %v2001, %v2093
    %v2183 = vcombine.high %v2001, %v2093
    %v2185 = vunpack.c.l.s4 1983009808
    %v2186 = vunpack.c.0.s8 %v2185
    %v2187 = vlaneseq
    %v2188 = vshrl.u32 %v2187, 7
    %v2189 = vsub.s32 %v2186, %v2188
    %v2190 = vrot.slane %v2182, %v2189
    %v2192 = vunpack.c.l.s4 1983009808
    %v2193 = vunpack.c.0.s8 %v2192
    %v2194 = vlaneseq
    %v2195 = vshrl.u32 %v2194, 7
    %v2196 = vsub.s32 %v2193, %v2195
    %v2197 = vrot.slane %v2183, %v2196
    %v2198 = vcombine.low %v2174, %v2190
    %v2199 = vcombine.high %v2174, %v2190
    %v2201 = vunpack.c.l.s4 1934713408
    %v2202 = vunpack.c.0.s8 %v2201
    %v2203 = vlaneseq
    %v2204 = vshrl.u32 %v2203, 7
    %v2205 = vsub.s32 %v2202, %v2204
    %v2206 = vrot.slane %v2198, %v2205
    %v2208 = vunpack.c.l.s4 1934713408
    %v2209 = vunpack.c.0.s8 %v2208
    %v2210 = vlaneseq
    %v2211 = vshrl.u32 %v2210, 7
    %v2212 = vsub.s32 %v2209, %v2211
    %v2213 = vrot.slane %v2199, %v2212
    %v2214 = vcombine.low %v2181, %v2197
    %v2215 = vcombine.high %v2181, %v2197
    %v2217 = vunpack.c.l.s4 1934713408
    %v2218 = vunpack.c.0.s8 %v2217
    %v2219 = vlaneseq
    %v2220 = vshrl.u32 %v2219, 7
    %v2221 = vsub.s32 %v2218, %v2220
    %v2222 = vrot.slane %v2214, %v2221
    %v2224 = vunpack.c.l.s4 1934713408
    %v2225 = vunpack.c.0.s8 %v2224
    %v2226 = vlaneseq
    %v2227 = vshrl.u32 %v2226, 7
    %v2228 = vsub.s32 %v2225, %v2227
    %v2229 = vrot.slane %v2215, %v2228
    %v2230 = vcombine.high %v2206, 0.0
    %v2231 = vcombine.high %v2213, 0.0
    %v2232 = vcombine.high %v2222, 0.0
    %v2233 = vcombine.high %v2229, 0.0
    %v2234 = vcombine.low %v2138, %v2145
    %v2236 = vunpack.c.l.s4 1983009808
    %v2237 = vunpack.c.0.s8 %v2236
    %v2238 = vlaneseq
    %v2239 = vshrl.u32 %v2238, 7
    %v2240 = vsub.s32 %v2237, %v2239
    %v2241 = vrot.slane %v2234, %v2240
    %v2242 = vcombine.low %v2162, %v2163
    %v2244 = vunpack.c.l.s4 1983009808
    %v2245 = vunpack.c.0.s8 %v2244
    %v2246 = vlaneseq
    %v2247 = vshrl.u32 %v2246, 7
    %v2248 = vsub.s32 %v2245, %v2247
    %v2249 = vrot.slane %v2242, %v2248
    %v2250 = vcombine.low %v2154, %v2161
    %v2252 = vunpack.c.l.s4 1983009808
    %v2253 = vunpack.c.0.s8 %v2252
    %v2254 = vlaneseq
    %v2255 = vshrl.u32 %v2254, 7
    %v2256 = vsub.s32 %v2253, %v2255
    %v2257 = vrot.slane %v2250, %v2256
    %v2258 = vcombine.low %v2164, %v2165
    %v2260 = vunpack.c.l.s4 1983009808
    %v2261 = vunpack.c.0.s8 %v2260
    %v2262 = vlaneseq
    %v2263 = vshrl.u32 %v2262, 7
    %v2264 = vsub.s32 %v2261, %v2263
    %v2265 = vrot.slane %v2258, %v2264
    %v2266 = vcombine.low %v2241, %v2249
    %v2267 = vcombine.high %v2241, %v2249
    %v2269 = vunpack.c.l.s4 1934713408
    %v2270 = vunpack.c.0.s8 %v2269
    %v2271 = vlaneseq
    %v2272 = vshrl.u32 %v2271, 7
    %v2273 = vsub.s32 %v2270, %v2272
    %v2274 = vrot.slane %v2266, %v2273
    %v2276 = vunpack.c.l.s4 1934713408
    %v2277 = vunpack.c.0.s8 %v2276
    %v2278 = vlaneseq
    %v2279 = vshrl.u32 %v2278, 7
    %v2280 = vsub.s32 %v2277, %v2279
    %v2281 = vrot.slane %v2267, %v2280
    %v2282 = vcombine.low %v2257, %v2265
    %v2283 = vcombine.high %v2257, %v2265
    %v2285 = vunpack.c.l.s4 1934713408
    %v2286 = vunpack.c.0.s8 %v2285
    %v2287 = vlaneseq
    %v2288 = vshrl.u32 %v2287, 7
    %v2289 = vsub.s32 %v2286, %v2288
    %v2290 = vrot.slane %v2282, %v2289
    %v2292 = vunpack.c.l.s4 1934713408
    %v2293 = vunpack.c.0.s8 %v2292
    %v2294 = vlaneseq
    %v2295 = vshrl.u32 %v2294, 7
    %v2296 = vsub.s32 %v2293, %v2295
    %v2297 = vrot.slane %v2283, %v2296
    %v2298 = vcombine.low %v2274, %v2290
    %v2299 = vcombine.high %v2274, %v2290
    %v2300 = vcombine.low %v2281, %v2297
    %v2301 = vcombine.high %v2281, %v2297
    %v2302 = vcombine.low %v2206, %v2213
    %v2304 = vunpack.c.l.s4 1983009808
    %v2305 = vunpack.c.0.s8 %v2304
    %v2306 = vlaneseq
    %v2307 = vshrl.u32 %v2306, 7
    %v2308 = vsub.s32 %v2305, %v2307
    %v2309 = vrot.slane %v2302, %v2308
    %v2310 = vcombine.low %v2230, %v2231
    %v2312 = vunpack.c.l.s4 1983009808
    %v2313 = vunpack.c.0.s8 %v2312
    %v2314 = vlaneseq
    %v2315 = vshrl.u32 %v2314, 7
    %v2316 = vsub.s32 %v2313, %v2315
    %v2317 = vrot.slane %v2310, %v2316
    %v2318 = vcombine.low %v2222, %v2229
    %v2320 = vunpack.c.l.s4 1983009808
    %v2321 = vunpack.c.0.s8 %v2320
    %v2322 = vlaneseq
    %v2323 = vshrl.u32 %v2322, 7
    %v2324 = vsub.s32 %v2321, %v2323
    %v2325 = vrot.slane %v2318, %v2324
    %v2326 = vcombine.low %v2232, %v2233
    %v2328 = vunpack.c.l.s4 1983009808
    %v2329 = vunpack.c.0.s8 %v2328
    %v2330 = vlaneseq
    %v2331 = vshrl.u32 %v2330, 7
    %v2332 = vsub.s32 %v2329, %v2331
    %v2333 = vrot.slane %v2326, %v2332
    %v2334 = vcombine.low %v2309, %v2317
    %v2335 = vcombine.high %v2309, %v2317
    %v2337 = vunpack.c.l.s4 1934713408
    %v2338 = vunpack.c.0.s8 %v2337
    %v2339 = vlaneseq
    %v2340 = vshrl.u32 %v2339, 7
    %v2341 = vsub.s32 %v2338, %v2340
    %v2342 = vrot.slane %v2334, %v2341
    %v2344 = vunpack.c.l.s4 1934713408
    %v2345 = vunpack.c.0.s8 %v2344
    %v2346 = vlaneseq
    %v2347 = vshrl.u32 %v2346, 7
    %v2348 = vsub.s32 %v2345, %v2347
    %v2349 = vrot.slane %v2335, %v2348
    %v2350 = vcombine.low %v2325, %v2333
    %v2351 = vcombine.high %v2325, %v2333
    %v2353 = vunpack.c.l.s4 1934713408
    %v2354 = vunpack.c.0.s8 %v2353
    %v2355 = vlaneseq
    %v2356 = vshrl.u32 %v2355, 7
    %v2357 = vsub.s32 %v2354, %v2356
    %v2358 = vrot.slane %v2350, %v2357
    %v2360 = vunpack.c.l.s4 1934713408
    %v2361 = vunpack.c.0.s8 %v2360
    %v2362 = vlaneseq
    %v2363 = vshrl.u32 %v2362, 7
    %v2364 = vsub.s32 %v2361, %v2363
    %v2365 = vrot.slane %v2351, %v2364
    %v2366 = vcombine.low %v2342, %v2358
    %v2367 = vcombine.high %v2342, %v2358
    %v2368 = vcombine.low %v2349, %v2365
    %v2369 = vcombine.high %v2349, %v2365
    %2372 = vrot.lane.b32.xlu0 %v2299, 32
    %v2373 = vpop.permute.xlu0 %2372
    %2374 = vrot.lane.b32.xlu0 %v2367, 32
    %v2375 = vpop.permute.xlu0 %2374
    %2380 = vrot.lane.b32.xlu0 %v2300, 64
    %v2381 = vpop.permute.xlu0 %2380
    %2382 = vrot.lane.b32.xlu0 %v2368, 64
    %v2383 = vpop.permute.xlu0 %2382
    %2388 = vrot.lane.b32.xlu0 %v2301, 96
    %v2389 = vpop.permute.xlu0 %2388
    %2390 = vrot.lane.b32.xlu0 %v2369, 96
    %v2391 = vpop.permute.xlu0 %2390
    %v2394 = vsel %vm1227, %v2298, %v2373
    %v2395 = vsel %vm1227, %v2366, %v2375
    %vm2396 = vcmask 523264
    %v2397 = vsel %vm2396, %v2394, %v2381
    %v2398 = vsel %vm2396, %v2395, %v2383
    %vm2399 = vcmask 785408
    %v2400 = vsel %vm2399, %v2397, %v2389
    %v2401 = vsel %vm2399, %v2398, %v2391
    %v2402 = vadd.f32 %v100, %v2400
    %v2403 = vadd.f32 %v101, %v2401
    %v2404 = vld [vmem:[%s8] sm:$0x1]
    %v2405 = vld [vmem:[%s9] sm:$0x1]
    %2406 = vadd.xlane.f32.xlu0 %v2402
    %v2407 = vpop.xlane.xlu0 %2406
    %2408 = vadd.xlane.f32.xlu0 %v2403
    %v2409 = vpop.xlane.xlu0 %2408
    %v2410 = vrcp.pop 128.0
    %v2411 = vmul.f32 %v2407, %v2410
    %v2412 = vmul.f32 %v2409, %v2410
    %v2413 = vmul.f32 %v2402, %v2402
    %v2414 = vmul.f32 %v2403, %v2403
    %2415 = vadd.xlane.f32.xlu0 %v2413
    %v2416 = vpop.xlane.xlu0 %2415
    %2417 = vadd.xlane.f32.xlu0 %v2414
    %v2418 = vpop.xlane.xlu0 %2417
    %v2419 = vmul.f32 %v2416, %v2410
    %v2420 = vmul.f32 %v2418, %v2410
    %v2421 = vmul.f32 %v2411, %v2411
    %v2422 = vmul.f32 %v2412, %v2412
    %v2423 = vsub.f32 %v2419, %v2421
    %v2424 = vsub.f32 %v2420, %v2422
    %v2425 = vsub.f32 %v2402, %v2411
    %v2426 = vsub.f32 %v2403, %v2412
    %v2427 = vadd.f32 %v2423, 1e-05
    %v2428 = vadd.f32 %v2424, 1e-05
    %v2429 = vrsqrt.pop %v2427
    %v2430 = vrsqrt.pop %v2428
    %v2431 = vmul.f32 %v2425, %v2429
    %v2432 = vmul.f32 %v2426, %v2430
    %v2434 = vlaneseq
    %v2435 = vshrl.u32 %v2434, 7
    %v2436 = vsub.s32 0, %v2435
    %v2437 = vrot.slane %v2404, %v2436
    %v2439 = vmul.f32 %v2431, %v2437
    %v2440 = vmul.f32 %v2432, %v2437
    %v2442 = vlaneseq
    %v2443 = vshrl.u32 %v2442, 7
    %v2444 = vsub.s32 0, %v2443
    %v2445 = vrot.slane %v2405, %v2444
    %v2447 = vadd.f32 %v2439, %v2445
    %v2448 = vadd.f32 %v2440, %v2445
    %v2449 = vpack.c.bf16 %v2448, %v2447
    %v2450 = vld [vmem:[#allocation7] sm:$0xff]
    %v2451 = vld [vmem:[#allocation7 + $0x8] sm:$0xff]
    %v2452 = vld [vmem:[#allocation7 + $0x10] sm:$0xff]
    %v2453 = vld [vmem:[#allocation7 + $0x18] sm:$0xff]
    %v2454 = vld [vmem:[#allocation7 + $0x20] sm:$0xff]
    %v2455 = vld [vmem:[#allocation7 + $0x28] sm:$0xff]
    %v2456 = vld [vmem:[#allocation7 + $0x30] sm:$0xff]
    %v2457 = vld [vmem:[#allocation7 + $0x38] sm:$0xff]
    %v2458 = vld [vmem:[#allocation7 + $0x40] sm:$0xff]
    %v2459 = vld [vmem:[#allocation7 + $0x48] sm:$0xff]
    %v2460 = vld [vmem:[#allocation7 + $0x50] sm:$0xff]
    %v2461 = vld [vmem:[#allocation7 + $0x58] sm:$0xff]
    %v2462 = vld [vmem:[#allocation7 + $0x60] sm:$0xff]
    %v2463 = vld [vmem:[#allocation7 + $0x68] sm:$0xff]
    %v2464 = vld [vmem:[#allocation7 + $0x70] sm:$0xff]
    %v2465 = vld [vmem:[#allocation7 + $0x78] sm:$0xff]
    %v2466 = vld [vmem:[%s5] sm:$0x3]
    %v2468 = vlaneseq
    %v2469 = vshrl.u32 %v2468, 7
    %v2470 = vsub.s32 0, %v2469
    %v2471 = vrot.slane %v2466, %v2470
    %v2472 = vlaneseq
    %v2473 = vshrl.u32 %v2472, 7
    %v2474 = vsub.s32 1, %v2473
    %v2475 = vrot.slane %v2466, %v2474
    %v2494 = vunpack.c.l.b16 %v2450
    %v2495 = vunpack.c.h.b16 %v2450
    %v2496 = vunpack.c.l.b16 %v2451
    %v2497 = vunpack.c.h.b16 %v2451
    %v2498 = vunpack.c.l.b16 %v2452
    %v2499 = vunpack.c.h.b16 %v2452
    %v2500 = vunpack.c.l.b16 %v2453
    %v2501 = vunpack.c.h.b16 %v2453
    %v2502 = vunpack.c.l.b16 %v2454
    %v2503 = vunpack.c.h.b16 %v2454
    %v2504 = vunpack.c.l.b16 %v2455
    %v2505 = vunpack.c.h.b16 %v2455
    %v2506 = vunpack.c.l.b16 %v2456
    %v2507 = vunpack.c.h.b16 %v2456
    %v2508 = vunpack.c.l.b16 %v2457
    %v2509 = vunpack.c.h.b16 %v2457
    %v2510 = vunpack.c.l.b16 %v2458
    %v2511 = vunpack.c.h.b16 %v2458
    %v2512 = vunpack.c.l.b16 %v2459
    %v2513 = vunpack.c.h.b16 %v2459
    %v2514 = vunpack.c.l.b16 %v2460
    %v2515 = vunpack.c.h.b16 %v2460
    %v2516 = vunpack.c.l.b16 %v2461
    %v2517 = vunpack.c.h.b16 %v2461
    %v2518 = vunpack.c.l.b16 %v2462
    %v2519 = vunpack.c.h.b16 %v2462
    %v2520 = vunpack.c.l.b16 %v2463
    %v2521 = vunpack.c.h.b16 %v2463
    %v2522 = vunpack.c.l.b16 %v2464
    %v2523 = vunpack.c.h.b16 %v2464
    %v2524 = vunpack.c.l.b16 %v2465
    %v2525 = vunpack.c.h.b16 %v2465
    %v2526 = vpack.c.b16 %v2496, %v2494
    %v2527 = vpack.c.b16 %v2497, %v2495
    %v2528 = vpack.c.b16 %v2500, %v2498
    %v2529 = vpack.c.b16 %v2501, %v2499
    %v2530 = vpack.c.b16 %v2504, %v2502
    %v2531 = vpack.c.b16 %v2505, %v2503
    %v2532 = vpack.c.b16 %v2508, %v2506
    %v2533 = vpack.c.b16 %v2509, %v2507
    %v2534 = vpack.c.b16 %v2512, %v2510
    %v2535 = vpack.c.b16 %v2513, %v2511
    %v2536 = vpack.c.b16 %v2516, %v2514
    %v2537 = vpack.c.b16 %v2517, %v2515
    %v2538 = vpack.c.b16 %v2520, %v2518
    %v2539 = vpack.c.b16 %v2521, %v2519
    %v2540 = vpack.c.b16 %v2524, %v2522
    %v2541 = vpack.c.b16 %v2525, %v2523
    %2558 = vmatprep.subr.bf16.mxu0 %v2527
    %2559 = vmatpush1.bf16.msra.mxu0 %v2526
    %2560 = vmatprep.subr.bf16.mxu0 %v2529
    %2561 = vmatpush1.bf16.msra.mxu0 %v2528
    %2562 = vmatprep.subr.bf16.mxu0 %v2531
    %2563 = vmatpush1.bf16.msra.mxu0 %v2530
    %2564 = vmatprep.subr.bf16.mxu0 %v2533
    %2565 = vmatpush1.bf16.msra.mxu0 %v2532
    %2566 = vmatprep.subr.bf16.mxu0 %v2535
    %2567 = vmatpush1.bf16.msra.mxu0 %v2534
    %2568 = vmatprep.subr.bf16.mxu0 %v2537
    %2569 = vmatpush1.bf16.msra.mxu0 %v2536
    %2570 = vmatprep.subr.bf16.mxu0 %v2539
    %2571 = vmatpush1.bf16.msra.mxu0 %v2538
    %2572 = vmatprep.subr.bf16.mxu0 %v2541
    %2573 = vmatpush1.bf16.msra.mxu0 %v2540
    %2574 = vmatprep.subr.bf16.mxu0 0
    %2575 = vmatpush1.bf16.msra.mxu0 0
    %2576 = vmatprep.subr.bf16.mxu0 0
    %2577 = vmatpush1.bf16.msra.mxu0 0
    %2578 = vmatprep.subr.bf16.mxu0 0
    %2579 = vmatpush1.bf16.msra.mxu0 0
    %2580 = vmatprep.subr.bf16.mxu0 0
    %2581 = vmatpush1.bf16.msra.mxu0 0
    %2582 = vmatprep.subr.bf16.mxu0 0
    %2583 = vmatpush1.bf16.msra.mxu0 0
    %2584 = vmatprep.subr.bf16.mxu0 0
    %2585 = vmatpush1.bf16.msra.mxu0 0
    %2586 = vmatprep.subr.bf16.mxu0 0
    %2587 = vmatpush1.bf16.msra.mxu0 0
    %2588 = vmatprep.subr.bf16.mxu0 0
    %2589 = vmatpush1.bf16.msra.mxu0 0
    %2590 = vmatprep.mubr.bf16.mxu0 0
    %2591 = vmatmul.mubr.bf16.gmra.mrb[0].mxu0 %v2449
    %v2592 = vpop.f32.mrb[0].mxu0
    %v2593 = vadd.f32 %v2471, %v2592
    %v2594 = vpop.f32.mrb[0].mxu0
    %v2595 = vadd.f32 %v2475, %v2594
    %v2596 = vpop.f32.mrb[0].mxu0
    %v2597 = vadd.f32 %v2471, %v2596
    %v2598 = vpop.f32.mrb[0].mxu0
    %v2599 = vadd.f32 %v2475, %v2598
    %2600 = vdwg.mxu0
    %v2601 = vmax.f32 %v2593, 0.0
    %v2602 = vmax.f32 %v2595, 0.0
    %v2603 = vmax.f32 %v2597, 0.0
    %v2604 = vmax.f32 %v2599, 0.0
    %v2605 = vpack.c.bf16 %v2603, %v2601
    %v2606 = vpack.c.bf16 %v2604, %v2602
    %v2607 = vld [vmem:[#allocation8] sm:$0xf]
    %v2608 = vld [vmem:[#allocation8 + $0x4] sm:$0xf]
    %v2609 = vld [vmem:[#allocation8 + $0x8] sm:$0xf]
    %v2610 = vld [vmem:[#allocation8 + $0xc] sm:$0xf]
    %v2611 = vld [vmem:[#allocation8 + $0x10] sm:$0xf]
    %v2612 = vld [vmem:[#allocation8 + $0x14] sm:$0xf]
    %v2613 = vld [vmem:[#allocation8 + $0x18] sm:$0xf]
    %v2614 = vld [vmem:[#allocation8 + $0x1c] sm:$0xf]
    %v2615 = vld [vmem:[#allocation8 + $0x20] sm:$0xf]
    %v2616 = vld [vmem:[#allocation8 + $0x24] sm:$0xf]
    %v2617 = vld [vmem:[#allocation8 + $0x28] sm:$0xf]
    %v2618 = vld [vmem:[#allocation8 + $0x2c] sm:$0xf]
    %v2619 = vld [vmem:[#allocation8 + $0x30] sm:$0xf]
    %v2620 = vld [vmem:[#allocation8 + $0x34] sm:$0xf]
    %v2621 = vld [vmem:[#allocation8 + $0x38] sm:$0xf]
    %v2622 = vld [vmem:[#allocation8 + $0x3c] sm:$0xf]
    %v2623 = vld [vmem:[#allocation8 + $0x40] sm:$0xf]
    %v2624 = vld [vmem:[#allocation8 + $0x44] sm:$0xf]
    %v2625 = vld [vmem:[#allocation8 + $0x48] sm:$0xf]
    %v2626 = vld [vmem:[#allocation8 + $0x4c] sm:$0xf]
    %v2627 = vld [vmem:[#allocation8 + $0x50] sm:$0xf]
    %v2628 = vld [vmem:[#allocation8 + $0x54] sm:$0xf]
    %v2629 = vld [vmem:[#allocation8 + $0x58] sm:$0xf]
    %v2630 = vld [vmem:[#allocation8 + $0x5c] sm:$0xf]
    %v2631 = vld [vmem:[#allocation8 + $0x60] sm:$0xf]
    %v2632 = vld [vmem:[#allocation8 + $0x64] sm:$0xf]
    %v2633 = vld [vmem:[#allocation8 + $0x68] sm:$0xf]
    %v2634 = vld [vmem:[#allocation8 + $0x6c] sm:$0xf]
    %v2635 = vld [vmem:[#allocation8 + $0x70] sm:$0xf]
    %v2636 = vld [vmem:[#allocation8 + $0x74] sm:$0xf]
    %v2637 = vld [vmem:[#allocation8 + $0x78] sm:$0xf]
    %v2638 = vld [vmem:[#allocation8 + $0x7c] sm:$0xf]
    %v2639 = vld [vmem:[%s7] sm:$0x1]
    %v2641 = vlaneseq
    %v2642 = vshrl.u32 %v2641, 7
    %v2643 = vsub.s32 0, %v2642
    %v2644 = vrot.slane %v2639, %v2643
    %v2678 = vunpack.c.l.b16 %v2607
    %v2679 = vunpack.c.l.b16 %v2608
    %v2680 = vunpack.c.l.b16 %v2609
    %v2681 = vunpack.c.l.b16 %v2610
    %v2682 = vunpack.c.l.b16 %v2611
    %v2683 = vunpack.c.l.b16 %v2612
    %v2684 = vunpack.c.l.b16 %v2613
    %v2685 = vunpack.c.l.b16 %v2614
    %v2686 = vunpack.c.l.b16 %v2615
    %v2687 = vunpack.c.l.b16 %v2616
    %v2688 = vunpack.c.l.b16 %v2617
    %v2689 = vunpack.c.l.b16 %v2618
    %v2690 = vunpack.c.l.b16 %v2619
    %v2691 = vunpack.c.l.b16 %v2620
    %v2692 = vunpack.c.l.b16 %v2621
    %v2693 = vunpack.c.l.b16 %v2622
    %v2694 = vunpack.c.l.b16 %v2623
    %v2695 = vunpack.c.l.b16 %v2624
    %v2696 = vunpack.c.l.b16 %v2625
    %v2697 = vunpack.c.l.b16 %v2626
    %v2698 = vunpack.c.l.b16 %v2627
    %v2699 = vunpack.c.l.b16 %v2628
    %v2700 = vunpack.c.l.b16 %v2629
    %v2701 = vunpack.c.l.b16 %v2630
    %v2702 = vunpack.c.l.b16 %v2631
    %v2703 = vunpack.c.l.b16 %v2632
    %v2704 = vunpack.c.l.b16 %v2633
    %v2705 = vunpack.c.l.b16 %v2634
    %v2706 = vunpack.c.l.b16 %v2635
    %v2707 = vunpack.c.l.b16 %v2636
    %v2708 = vunpack.c.l.b16 %v2637
    %v2709 = vunpack.c.l.b16 %v2638
    %v2710 = vpack.c.b16 %v2679, %v2678
    %v2711 = vpack.c.b16 %v2681, %v2680
    %v2712 = vpack.c.b16 %v2683, %v2682
    %v2713 = vpack.c.b16 %v2685, %v2684
    %v2714 = vpack.c.b16 %v2687, %v2686
    %v2715 = vpack.c.b16 %v2689, %v2688
    %v2716 = vpack.c.b16 %v2691, %v2690
    %v2717 = vpack.c.b16 %v2693, %v2692
    %v2718 = vpack.c.b16 %v2695, %v2694
    %v2719 = vpack.c.b16 %v2697, %v2696
    %v2720 = vpack.c.b16 %v2699, %v2698
    %v2721 = vpack.c.b16 %v2701, %v2700
    %v2722 = vpack.c.b16 %v2703, %v2702
    %v2723 = vpack.c.b16 %v2705, %v2704
    %v2724 = vpack.c.b16 %v2707, %v2706
    %v2725 = vpack.c.b16 %v2709, %v2708
    %2742 = vmatprep.subr.bf16.mxu0 0
    %2743 = vmatpush1.bf16.msra.mxu0 %v2710
    %2744 = vmatprep.subr.bf16.mxu0 0
    %2745 = vmatpush1.bf16.msra.mxu0 %v2711
    %2746 = vmatprep.subr.bf16.mxu0 0
    %2747 = vmatpush1.bf16.msra.mxu0 %v2712
    %2748 = vmatprep.subr.bf16.mxu0 0
    %2749 = vmatpush1.bf16.msra.mxu0 %v2713
    %2750 = vmatprep.subr.bf16.mxu0 0
    %2751 = vmatpush1.bf16.msra.mxu0 %v2714
    %2752 = vmatprep.subr.bf16.mxu0 0
    %2753 = vmatpush1.bf16.msra.mxu0 %v2715
    %2754 = vmatprep.subr.bf16.mxu0 0
    %2755 = vmatpush1.bf16.msra.mxu0 %v2716
    %2756 = vmatprep.subr.bf16.mxu0 0
    %2757 = vmatpush1.bf16.msra.mxu0 %v2717
    %2758 = vmatprep.subr.bf16.mxu0 0
    %2759 = vmatpush1.bf16.msra.mxu0 %v2718
    %2760 = vmatprep.subr.bf16.mxu0 0
    %2761 = vmatpush1.bf16.msra.mxu0 %v2719
    %2762 = vmatprep.subr.bf16.mxu0 0
    %2763 = vmatpush1.bf16.msra.mxu0 %v2720
    %2764 = vmatprep.subr.bf16.mxu0 0
    %2765 = vmatpush1.bf16.msra.mxu0 %v2721
    %2766 = vmatprep.subr.bf16.mxu0 0
    %2767 = vmatpush1.bf16.msra.mxu0 %v2722
    %2768 = vmatprep.subr.bf16.mxu0 0
    %2769 = vmatpush1.bf16.msra.mxu0 %v2723
    %2770 = vmatprep.subr.bf16.mxu0 0
    %2771 = vmatpush1.bf16.msra.mxu0 %v2724
    %2772 = vmatprep.subr.bf16.mxu0 0
    %2773 = vmatpush1.bf16.msra.mxu0 %v2725
    %2774 = vmatprep.mubr.bf16.mxu0 %v2606
    %2775 = vmatmul.mubr.bf16.gmra.mrb[0].mxu0 %v2605
    %v2776 = vpop.f32.mrb[0].mxu0
    %v2777 = vadd.f32 %v2644, %v2776
    %v2778 = vpop.f32.mrb[0].mxu0
    %v2779 = vpop.f32.mrb[0].mxu0
    %v2780 = vadd.f32 %v2644, %v2779
    %v2781 = vpop.f32.mrb[0].mxu0
    %2782 = vdwg.mxu0
    %v2783 = vadd.f32 %v2447, %v2777
    %v2784 = vadd.f32 %v2448, %v2780
    %v2785 = vld [vmem:[%s10] sm:$0x1]
    %v2786 = vld [vmem:[%s11] sm:$0x1]
    %2787 = vadd.xlane.f32.xlu0 %v2783
    %v2788 = vpop.xlane.xlu0 %2787
    %2789 = vadd.xlane.f32.xlu0 %v2784
    %v2790 = vpop.xlane.xlu0 %2789
    %v2791 = vmul.f32 %v2788, %v2410
    %v2792 = vmul.f32 %v2790, %v2410
    %v2793 = vmul.f32 %v2783, %v2783
    %v2794 = vmul.f32 %v2784, %v2784
    %2795 = vadd.xlane.f32.xlu0 %v2793
    %v2796 = vpop.xlane.xlu0 %2795
    %2797 = vadd.xlane.f32.xlu0 %v2794
    %v2798 = vpop.xlane.xlu0 %2797
    %v2799 = vmul.f32 %v2796, %v2410
    %v2800 = vmul.f32 %v2798, %v2410
    %v2801 = vmul.f32 %v2791, %v2791
    %v2802 = vmul.f32 %v2792, %v2792
    %v2803 = vsub.f32 %v2799, %v2801
    %v2804 = vsub.f32 %v2800, %v2802
    %v2805 = vsub.f32 %v2783, %v2791
    %v2806 = vsub.f32 %v2784, %v2792
    %v2807 = vadd.f32 %v2803, 1e-05
    %v2808 = vadd.f32 %v2804, 1e-05
    %v2809 = vrsqrt.pop %v2807
    %v2810 = vrsqrt.pop %v2808
    %v2811 = vmul.f32 %v2805, %v2809
    %v2812 = vmul.f32 %v2806, %v2810
    %v2814 = vlaneseq
    %v2815 = vshrl.u32 %v2814, 7
    %v2816 = vsub.s32 0, %v2815
    %v2817 = vrot.slane %v2785, %v2816
    %v2819 = vmul.f32 %v2811, %v2817
    %v2820 = vmul.f32 %v2812, %v2817
    %v2822 = vlaneseq
    %v2823 = vshrl.u32 %v2822, 7
    %v2824 = vsub.s32 0, %v2823
    %v2825 = vrot.slane %v2786, %v2824
    %v2827 = vadd.f32 %v2819, %v2825
    %v2828 = vadd.f32 %v2820, %v2825
    %v2829 = vpack.c.bf16 %v2827, %v2827
    %v2830 = vpack.c.bf16 %v2828, %v2828
    %2831 = vst [vmem:[#allocation10] sm:$0xf] %v2829
    %2832 = vst [vmem:[#allocation10 + $0x4] sm:$0xf] %v2830
    // Predicated region
    $region66: #{tpu_custom_call.1} parent=1 // pred_check
      _
    $region67: #{tpu_custom_call.1} parent=1 // pred_check_branch
      %2834 = sbr.rel (0) target = $region69
    $region68: #{tpu_custom_call.1} parent=1 // pred_region
      %s2836 = ssub.s32 128, 128
      %2837 = vsyncadd [#allocation4], %s2836
      %s2838 = sshll.u32 [#allocation10], 4
      %s2839 = int_to_ptr.vmem [resolvable:$true] %s2838
      %2844 = dma.vmem_to_hbm [thread:$0]  %s2839, 128, %s12, [#allocation4], 64, 64, 4
    $region69: #{tpu_custom_call.1} parent=1 // pred_fallthru
      _
    // Predicated region
    $region70: #{tpu_custom_call.1} parent=1 // pred_check
      _
    $region71: #{tpu_custom_call.1} parent=1 // pred_check_branch
      %2846 = sbr.rel (0) target = $region73
    $region72: #{tpu_custom_call.1} parent=1 // pred_region
      %2847 = dma.done [#allocation4], 128
    $region73: #{tpu_custom_call.1} parent=1 // pred_fallthru
      _
    %2848 = vsyncpa [#allocation3], 1
    %2849 = vsyncpa [#allocation6], 1
    %2850 = vsyncpa [#allocation9], 1
    %2851 = vsyncpa [#allocation4], 1

</llo_original>
